<compile_context>
chip_gen: v5e
topology: v5e:2x2
jax: 0.10.0
libtpu: 0.0.40
codegen_flags: <defaults>
</compile_context>

<pallas_src>
import functools
import math

import jax
import jax.numpy as jnp
from jax.experimental import pallas as pl
from jax.experimental.pallas import tpu as pltpu

BN_EPS = 1e-5


def _round_up(x, mult):
    return (x + mult - 1) // mult * mult


# ------------------------------ Pallas kernel ------------------------------ #

def _bottleneck_kernel(p1_ref, w1_ref, s1_ref, a1_ref,
                       w2_ref, s2_ref, a2_ref,
                       w3_ref, s3_ref, a3_ref,
                       o_ref, act1_ref, act2_ref, shp_ref, shm_ref,
                       *, ho, wo, b_blk, halo):
    """B_BLK batch samples of Bottleneck_a, fully resident in VMEM.

    Activation layout: row-flattened (flat_row, channel) with a zero halo of
    `halo` rows above / below / between samples:
        [halo zeros][sample 0: ho*wo rows][halo zeros][sample 1] ... [halo zeros]
    `halo` and the per-sample stride are multiples of 8 and of wo, so every
    dh in {-1,0,+1} row shift of a 3x3 tap is an ALIGNED slice; the dw = +-1
    column shift is staged once per conv into shp_ref / shm_ref with the image
    left/right edge mask already applied.
    """
    m = ho * wo                    # valid rows per sample
    ss = m + halo                  # per-sample stride in the flat layout
    span = b_blk * ss - halo       # contiguous compute range (valid + inter-sample halos)
    rows = act1_ref.shape[0]       # = halo + b_blk * ss
    c = o_ref.shape[-1]
    f32 = jnp.float32

    # Flat position p -> image column (p % wo); valid for every sample because
    # halo and the per-sample stride are multiples of wo.  Built once, shared
    # by both stride-1 convs.
    col = jax.lax.broadcasted_iota(jnp.int32, (rows, 1), 0) % wo

    zeros_halo = jnp.zeros((halo, c), act1_ref.dtype)

    def zero_halo_bands(act_ref):
        # Only the halo bands are zeroed; valid rows are written exactly once.
        act_ref[0:halo, :] = zeros_halo
        for b in range(b_blk):
            start = halo + b * ss + m
            act_ref[start:start + halo, :] = zeros_halo

    def store_valid(act_ref, y, src_stride):
        # Copy each sample's valid rows into its haloed slot (aligned stores).
        for b in range(b_blk):
            dst = halo + b * ss
            src = b * src_stride
            act_ref[dst:dst + m, :] = y[src:src + m, :].astype(act_ref.dtype)

    def prelu(z, alpha):
        return jnp.where(z >= 0.0, z, alpha * z)

    def conv3x3(src_ref, w_ref):
        # Stage the +-1 column shifts once (2 off-by-one reads + 2 edge-mask
        # selects per conv instead of 6 of each), then build the (span, 9c)
        # im2col operand from 9 aligned slices and run ONE deep-K MXU matmul.
        lo = halo - wo
        hi = halo + span + wo
        xr = src_ref[lo + 1:hi + 1, :]
        shp_ref[lo:hi, :] = jnp.where(col[lo:hi] < (wo - 1), xr,
                                      jnp.zeros_like(xr))
        xl = src_ref[lo - 1:hi - 1, :]
        shm_ref[lo:hi, :] = jnp.where(col[lo:hi] > 0, xl, jnp.zeros_like(xl))

        taps = []
        for dh in (-1, 0, 1):                      # (kh, kw, cin) weight-row order
            s = halo + dh * wo                     # multiple of 8 -> aligned slices
            taps.append(shm_ref[s:s + span, :])    # dw = -1
            taps.append(src_ref[s:s + span, :])    # dw =  0
            taps.append(shp_ref[s:s + span, :])    # dw = +1
        patch = jnp.concatenate(taps, axis=-1)     # (span, 9c) bf16
        return jnp.dot(patch, w_ref[...], preferred_element_type=f32)

    # --- block1: (possibly strided) conv as one deep-K matmul over pre-built
    #     im2col patches covering the whole batch block.
    z1 = jnp.dot(p1_ref[...], w1_ref[...], preferred_element_type=f32)
    y1 = prelu(z1 + s1_ref[...], a1_ref[...])                # (b_blk*m, c) f32

    zero_halo_bands(act1_ref)
    store_valid(act1_ref, y1, m)        # bf16 copy feeds block2 AND the residual

    # --- block2 (stride 1)
    zero_halo_bands(act2_ref)
    y2 = prelu(conv3x3(act1_ref, w2_ref) + s2_ref[...], a2_ref[...])   # (span, c)
    store_valid(act2_ref, y2, ss)

    # --- block3 (stride 1) + residual (added AFTER block3's PReLU, as in
    #     Bottleneck_a: res = block3(block2(out)) + block1(x)).
    y3 = prelu(conv3x3(act2_ref, w3_ref) + s3_ref[...], a3_ref[...])   # (span, c)
    for b in range(b_blk):
        res = act1_ref[halo + b * ss: halo + b * ss + m, :].astype(f32)
        o_ref[b * m:(b + 1) * m, :] = (y3[b * ss:b * ss + m, :] + res
                                       ).astype(o_ref.dtype)


# ------------------------------- JAX glue ----------------------------------- #

def _im2col(x_nhwc, ksize, stride, pad):
    """(N, H, W, C) -> (N, Ho*Wo, ksize*ksize*C) patches, (kh, kw, c) ordering."""
    n, h, w, c = x_nhwc.shape
    xp = jnp.pad(x_nhwc, ((0, 0), (pad, pad), (pad, pad), (0, 0)))
    ho = (h + 2 * pad - ksize) // stride + 1
    wo = (w + 2 * pad - ksize) // stride + 1
    cols = []
    for kh in range(ksize):
        for kw in range(ksize):
            sl = xp[:, kh:kh + stride * (ho - 1) + 1:stride,
                       kw:kw + stride * (wo - 1) + 1:stride, :]
            cols.append(sl)
    cols = jnp.stack(cols, axis=3)                   # (N, Ho, Wo, 9, C)
    return cols.reshape(n, ho * wo, ksize * ksize * c), (ho, wo)


def fold_block_params(raw):
    """Fold conv bias + eval-mode BN into the matmul weight and one shift."""
    scale = raw["gamma"] / jnp.sqrt(raw["var"] + BN_EPS)
    shift = raw["beta"] - raw["mean"] * scale
    w = raw["w"] * scale[:, None, None, None]        # OIHW, scale per out-channel
    cout, cin = w.shape[0], w.shape[1]
    # im2col / in-kernel tap ordering is (kh, kw, cin) -> rows of the 2-D weight.
    w2d = jnp.transpose(w, (2, 3, 1, 0)).reshape(9 * cin, cout)
    return {
        "w": w2d.astype(jnp.bfloat16),                                   # bf16 MXU operand
        "s": (raw["bias"] * scale + shift).reshape(1, cout).astype(jnp.float32),
        "a": raw["alpha"].reshape(1, cout).astype(jnp.float32),
    }


def bottleneck_a_forward(kparams, x_nchw, stride1):
    """Bottleneck_a forward (deploy=True, eval-mode BN): NCHW in, NCHW out."""
    # bf16 BEFORE im2col: halves the HBM bytes of the duplicated patch tensor.
    # TODO(synk): at production feature-map sizes block1 should move in-kernel
    #             (strided taps) and the spatial dim should be tiled with a
    #             haloed BlockSpec; unnecessary at these shapes.
    x = jnp.transpose(x_nchw, (0, 2, 3, 1)).astype(jnp.bfloat16)   # NHWC, bf16
    p1, (ho, wo) = _im2col(x, 3, stride1, 1)
    n, m, k1 = p1.shape
    p1 = p1.reshape(n * m, k1)                                      # batch stacked into M

    b1, b2, b3 = kparams
    cout = b1["w"].shape[1]

    # Stack samples into the matmul M dimension (target >= 128 rows per step).
    b_blk = max(1, min(n, pl.cdiv(128, m)))
    while n % b_blk:
        b_blk -= 1

    # Zero halo rounded up so every dh*wo tap shift / store is 8-aligned and a
    # multiple of wo (one column mask serves all samples).
    halo = _round_up(wo + 1, 8)
    while halo % wo:
        halo += 8
    rows = halo + b_blk * (m + halo)

    def full(arr):
        # Whole-array block, constant index map -> DMA'd once, resident in VMEM.
        return pl.BlockSpec(arr.shape, lambda i: (0,) * arr.ndim)

    out = pl.pallas_call(
        functools.partial(_bottleneck_kernel, ho=ho, wo=wo, b_blk=b_blk,
                          halo=halo),
        out_shape=jax.ShapeDtypeStruct((n * m, cout), jnp.float32),
        grid=(n // b_blk,),
        in_specs=[
            pl.BlockSpec((b_blk * m, k1), lambda i: (i, 0)),   # batch-block patches
            full(b1["w"]), full(b1["s"]), full(b1["a"]),
            full(b2["w"]), full(b2["s"]), full(b2["a"]),
            full(b3["w"]), full(b3["s"]), full(b3["a"]),
        ],
        out_specs=pl.BlockSpec((b_blk * m, cout), lambda i: (i, 0)),
        scratch_shapes=[
            pltpu.VMEM((rows, cout), jnp.bfloat16),   # block1 act (haloed)
            pltpu.VMEM((rows, cout), jnp.bfloat16),   # block2 act (haloed)
            pltpu.VMEM((rows, cout), jnp.bfloat16),   # +1 column shift (masked)
            pltpu.VMEM((rows, cout), jnp.bfloat16),   # -1 column shift (masked)
        ],
        compiler_params=pltpu.CompilerParams(
            dimension_semantics=("parallel",),         # megacore across batch blocks
            vmem_limit_bytes=32 * 1024 * 1024),
    )(p1, b1["w"], b1["s"], b1["a"],
      b2["w"], b2["s"], b2["a"],
      b3["w"], b3["s"], b3["a"])

    out = out.reshape(n, ho, wo, cout)
    return jnp.transpose(out, (0, 3, 1, 2))                        # back to NCHW


# -------------------------- deterministic params ---------------------------- #

def init_block_raw(key, cin, cout):
    kw, kb, kbeta, kmean, kvar = jax.random.split(key, 5)
    std = math.sqrt(2.0 / (cout * 9))            # kaiming fan_out for a 3x3 conv
    return {
        "w": std * jax.random.normal(kw, (cout, cin, 3, 3), jnp.float32),   # OIHW
        "bias": 0.1 * jax.random.normal(kb, (cout,), jnp.float32),
        "gamma": jnp.ones((cout,), jnp.float32),
        "beta": 0.1 * jax.random.normal(kbeta, (cout,), jnp.float32),
        "mean": 0.1 * jax.random.normal(kmean, (cout,), jnp.float32),
        "var": 1.0 + 0.1 * jax.random.uniform(kvar, (cout,), jnp.float32),
        "alpha": 0.25 * jnp.ones((cout,), jnp.float32),                      # PReLU init
    }


def init_bottleneck_raw(key, inplanes, planes):
    k1, k2, k3 = jax.random.split(key, 3)
    return [init_block_raw(k1, inplanes, planes),
            init_block_raw(k2, planes, planes),
            init_block_raw(k3, planes, planes)]


# ---------------------------- pure-JAX reference ---------------------------- #

def _block_ref(x_nhwc, raw, stride):
    w_hwio = jnp.transpose(raw["w"], (2, 3, 1, 0))
    z = jax.lax.conv_general_dilated(
        x_nhwc, w_hwio, window_strides=(stride, stride),
        padding=((1, 1), (1, 1)),
        dimension_numbers=("NHWC", "HWIO", "NHWC"),
        precision=jax.lax.Precision.HIGHEST)
    z = z + raw["bias"]
    scale = raw["gamma"] / jnp.sqrt(raw["var"] + BN_EPS)
    shift = raw["beta"] - raw["mean"] * scale
    z = z * scale + shift
    return jnp.where(z >= 0.0, z, raw["alpha"] * z)


def bottleneck_a_ref(raw_params, x_nchw, stride1):
    x = jnp.transpose(x_nchw, (0, 2, 3, 1)).astype(jnp.float32)
    y1 = _block_ref(x, raw_params[0], stride1)
    y2 = _block_ref(y1, raw_params[1], 1)
    y3 = _block_ref(y2, raw_params[2], 1)
    return jnp.transpose(y3 + y1, (0, 3, 1, 2))


if __name__ == "__main__":
    key = jax.random.PRNGKey(0)
    kp, kx = jax.random.split(key)

    # Bottleneck_a(inplanes=8, planes=32, kernel_size=3, stride=[2, 1], pad=1,
    #              r=..., deploy=True)
    inplanes, planes, stride1 = 8, 32, 2
    raw = init_bottleneck_raw(kp, inplanes, planes)
    kparams = [fold_block_params(r) for r in raw]

    x = jax.random.normal(kx, (2, inplanes, 16, 16), jnp.float32)   # NCHW input

    fwd = jax.jit(functools.partial(bottleneck_a_forward, kparams, stride1=stride1))
    y = fwd(x)
    jax.block_until_ready(y)

    assert y.shape == (2, planes, 8, 8), y.shape
    assert bool(jnp.all(jnp.isfinite(y)))

    # Cross-check against a pure-JAX reference (bf16 MXU operands -> loose tol).
    y_ref = bottleneck_a_ref(raw, x, stride1)
    err = float(jnp.max(jnp.abs(y - y_ref)) /
                jnp.maximum(1.0, jnp.max(jnp.abs(y_ref))))
    assert err < 8e-2, err

    print("KERNEL_OK")
</pallas_src>

<mosaic_0001>
module attributes {stable_mosaic.version = 11 : i64} {
  func.func @_bottleneck_kernel(%arg0: i32, %arg1: memref<128x72xbf16, #tpu.memory_space<vmem>>, %arg2: memref<72x32xbf16, #tpu.memory_space<vmem>>, %arg3: memref<1x32xf32, #tpu.memory_space<vmem>>, %arg4: memref<1x32xf32, #tpu.memory_space<vmem>>, %arg5: memref<288x32xbf16, #tpu.memory_space<vmem>>, %arg6: memref<1x32xf32, #tpu.memory_space<vmem>>, %arg7: memref<1x32xf32, #tpu.memory_space<vmem>>, %arg8: memref<288x32xbf16, #tpu.memory_space<vmem>>, %arg9: memref<1x32xf32, #tpu.memory_space<vmem>>, %arg10: memref<1x32xf32, #tpu.memory_space<vmem>>, %arg11: memref<128x32xf32, #tpu.memory_space<vmem>>, %arg12: memref<176x32xbf16, #tpu.memory_space<vmem>>, %arg13: memref<176x32xbf16, #tpu.memory_space<vmem>>, %arg14: memref<176x32xbf16, #tpu.memory_space<vmem>>, %arg15: memref<176x32xbf16, #tpu.memory_space<vmem>>) attributes {dimension_semantics = [#tpu.dimension_semantics<parallel>], iteration_bounds = array<i64: 1>, scalar_prefetch = 0 : i64, scratch_operands = 4 : i64, tpu.core_type = #tpu.core_type<tc>, window_params = [{transform_indices = @transform_0, window_bounds = array<i64: 128, 72>}, {pipeline_mode = #tpu.pipeline_mode<synchronous>, transform_indices = @transform_1, window_bounds = array<i64: 72, 32>}, {pipeline_mode = #tpu.pipeline_mode<synchronous>, transform_indices = @transform_2, window_bounds = array<i64: 1, 32>}, {pipeline_mode = #tpu.pipeline_mode<synchronous>, transform_indices = @transform_3, window_bounds = array<i64: 1, 32>}, {pipeline_mode = #tpu.pipeline_mode<synchronous>, transform_indices = @transform_4, window_bounds = array<i64: 288, 32>}, {pipeline_mode = #tpu.pipeline_mode<synchronous>, transform_indices = @transform_5, window_bounds = array<i64: 1, 32>}, {pipeline_mode = #tpu.pipeline_mode<synchronous>, transform_indices = @transform_6, window_bounds = array<i64: 1, 32>}, {pipeline_mode = #tpu.pipeline_mode<synchronous>, transform_indices = @transform_7, window_bounds = array<i64: 288, 32>}, {pipeline_mode = #tpu.pipeline_mode<synchronous>, transform_indices = @transform_8, window_bounds = array<i64: 1, 32>}, {pipeline_mode = #tpu.pipeline_mode<synchronous>, transform_indices = @transform_9, window_bounds = array<i64: 1, 32>}, {transform_indices = @transform_10, window_bounds = array<i64: 128, 32>}]} {
    %0 = tpu.iota {dimensions = array<i32: 0>} : vector<176x1xi32>
    %c8_i32 = arith.constant 8 : i32
    %c0_i32 = arith.constant 0 : i32
    %1 = arith.cmpi eq, %c8_i32, %c0_i32 : i32
    %c1_i32 = arith.constant 1 : i32
    %2 = arith.select %1, %c1_i32, %c8_i32 : i32
    %3 = vector.broadcast %2 : i32 to vector<176x1xi32>
    %4 = arith.remsi %0, %3 : vector<176x1xi32>
    %c0_i32_0 = arith.constant 0 : i32
    %5 = vector.broadcast %c0_i32_0 : i32 to vector<176x1xi32>
    %6 = arith.cmpi ne, %4, %5 : vector<176x1xi32>
    %c0_i32_1 = arith.constant 0 : i32
    %7 = vector.broadcast %c0_i32_1 : i32 to vector<176x1xi32>
    %8 = arith.cmpi slt, %4, %7 : vector<176x1xi32>
    %c0_i32_2 = arith.constant 0 : i32
    %9 = arith.cmpi slt, %2, %c0_i32_2 : i32
    %10 = vector.broadcast %9 : i1 to vector<176x1xi1>
    %11 = vector.broadcast %10 : vector<176x1xi1> to vector<176x1xi1>
    %12 = arith.xori %8, %11 : vector<176x1xi1>
    %13 = arith.andi %12, %6 : vector<176x1xi1>
    %14 = vector.broadcast %2 : i32 to vector<176x1xi32>
    %15 = arith.addi %4, %14 : vector<176x1xi32>
    %16 = arith.select %13, %15, %4 : vector<176x1xi1>, vector<176x1xi32>
    %cst = arith.constant 0.000000e+00 : bf16
    %17 = vector.broadcast %cst : bf16 to vector<16x32xbf16>
    %c0 = arith.constant 0 : index
    %c0_3 = arith.constant 0 : index
    %18 = vector.load %arg1[%c0, %c0_3] : memref<128x72xbf16, #tpu.memory_space<vmem>>, vector<128x72xbf16>
    %c0_4 = arith.constant 0 : index
    %c0_5 = arith.constant 0 : index
    %19 = vector.load %arg2[%c0_4, %c0_5] : memref<72x32xbf16, #tpu.memory_space<vmem>>, vector<72x32xbf16>
    %cst_6 = arith.constant dense<0.000000e+00> : vector<128x32xf32>
    %20 = tpu.matmul %18, %19, %cst_6 {dimension_numbers = #tpu.dot_dimension_numbers<[1], [0], [0], [1], [0, 0, 1, 1], [], []>} : vector<128x72xbf16>, vector<72x32xbf16>, vector<128x32xf32> -> vector<128x32xf32>
    %c0_7 = arith.constant 0 : index
    %c0_8 = arith.constant 0 : index
    %21 = vector.load %arg3[%c0_7, %c0_8] : memref<1x32xf32, #tpu.memory_space<vmem>>, vector<1x32xf32>
    %22 = vector.broadcast %21 : vector<1x32xf32> to vector<128x32xf32>
    %23 = arith.addf %20, %22 : vector<128x32xf32>
    %c0_9 = arith.constant 0 : index
    %c0_10 = arith.constant 0 : index
    %24 = vector.load %arg4[%c0_9, %c0_10] : memref<1x32xf32, #tpu.memory_space<vmem>>, vector<1x32xf32>
    %cst_11 = arith.constant 0.000000e+00 : f32
    %25 = vector.broadcast %cst_11 : f32 to vector<128x32xf32>
    %26 = arith.cmpf oge, %23, %25 : vector<128x32xf32>
    %27 = vector.broadcast %24 : vector<1x32xf32> to vector<128x32xf32>
    %28 = arith.mulf %27, %23 : vector<128x32xf32>
    %29 = arith.select %26, %23, %28 : vector<128x32xi1>, vector<128x32xf32>
    %c0_12 = arith.constant 0 : index
    %c0_13 = arith.constant 0 : index
    %30 = vector.load %arg12[%c0_12, %c0_13] : memref<176x32xbf16, #tpu.memory_space<vmem>>, vector<16x32xbf16>
    tpu.vector_store %arg12[%c0_12, %c0_13], %17 {strides = array<i32>} : memref<176x32xbf16, #tpu.memory_space<vmem>>, vector<16x32xbf16>,
    %c80 = arith.constant 80 : index
    %c0_14 = arith.constant 0 : index
    %31 = vector.load %arg12[%c80, %c0_14] : memref<176x32xbf16, #tpu.memory_space<vmem>>, vector<16x32xbf16>
    tpu.vector_store %arg12[%c80, %c0_14], %17 {strides = array<i32>} : memref<176x32xbf16, #tpu.memory_space<vmem>>, vector<16x32xbf16>,
    %c160 = arith.constant 160 : index
    %c0_15 = arith.constant 0 : index
    %32 = vector.load %arg12[%c160, %c0_15] : memref<176x32xbf16, #tpu.memory_space<vmem>>, vector<16x32xbf16>
    tpu.vector_store %arg12[%c160, %c0_15], %17 {strides = array<i32>} : memref<176x32xbf16, #tpu.memory_space<vmem>>, vector<16x32xbf16>,
    %33 = vector.extract_strided_slice %29 {offsets = [0, 0], sizes = [64, 32], strides = [1, 1]} : vector<128x32xf32> to vector<64x32xf32>
    %34 = arith.truncf %33 : vector<64x32xf32> to vector<64x32xbf16>
    %c16 = arith.constant 16 : index
    %c0_16 = arith.constant 0 : index
    %35 = vector.load %arg12[%c16, %c0_16] : memref<176x32xbf16, #tpu.memory_space<vmem>>, vector<64x32xbf16>
    tpu.vector_store %arg12[%c16, %c0_16], %34 {strides = array<i32>} : memref<176x32xbf16, #tpu.memory_space<vmem>>, vector<64x32xbf16>,
    %36 = vector.extract_strided_slice %29 {offsets = [64, 0], sizes = [64, 32], strides = [1, 1]} : vector<128x32xf32> to vector<64x32xf32>
    %37 = arith.truncf %36 : vector<64x32xf32> to vector<64x32xbf16>
    %c96 = arith.constant 96 : index
    %c0_17 = arith.constant 0 : index
    %38 = vector.load %arg12[%c96, %c0_17] : memref<176x32xbf16, #tpu.memory_space<vmem>>, vector<64x32xbf16>
    tpu.vector_store %arg12[%c96, %c0_17], %37 {strides = array<i32>} : memref<176x32xbf16, #tpu.memory_space<vmem>>, vector<64x32xbf16>,
    %c0_18 = arith.constant 0 : index
    %c0_19 = arith.constant 0 : index
    %39 = vector.load %arg13[%c0_18, %c0_19] : memref<176x32xbf16, #tpu.memory_space<vmem>>, vector<16x32xbf16>
    tpu.vector_store %arg13[%c0_18, %c0_19], %17 {strides = array<i32>} : memref<176x32xbf16, #tpu.memory_space<vmem>>, vector<16x32xbf16>,
    %c80_20 = arith.constant 80 : index
    %c0_21 = arith.constant 0 : index
    %40 = vector.load %arg13[%c80_20, %c0_21] : memref<176x32xbf16, #tpu.memory_space<vmem>>, vector<16x32xbf16>
    tpu.vector_store %arg13[%c80_20, %c0_21], %17 {strides = array<i32>} : memref<176x32xbf16, #tpu.memory_space<vmem>>, vector<16x32xbf16>,
    %c160_22 = arith.constant 160 : index
    %c0_23 = arith.constant 0 : index
    %41 = vector.load %arg13[%c160_22, %c0_23] : memref<176x32xbf16, #tpu.memory_space<vmem>>, vector<16x32xbf16>
    tpu.vector_store %arg13[%c160_22, %c0_23], %17 {strides = array<i32>} : memref<176x32xbf16, #tpu.memory_space<vmem>>, vector<16x32xbf16>,
    %c9 = arith.constant 9 : index
    %c0_24 = arith.constant 0 : index
    %42 = vector.load %arg12[%c9, %c0_24] : memref<176x32xbf16, #tpu.memory_space<vmem>>, vector<160x32xbf16>
    %43 = vector.extract_strided_slice %16 {offsets = [8, 0], sizes = [160, 1], strides = [1, 1]} : vector<176x1xi32> to vector<160x1xi32>
    %c7_i32 = arith.constant 7 : i32
    %44 = vector.broadcast %c7_i32 : i32 to vector<160x1xi32>
    %45 = arith.cmpi slt, %43, %44 : vector<160x1xi32>
    %cst_25 = arith.constant 0.000000e+00 : bf16
    %46 = vector.broadcast %cst_25 : bf16 to vector<160x32xbf16>
    %47 = vector.shape_cast %45 : vector<160x1xi1> to vector<160x1xi1>
    %48 = vector.broadcast %47 : vector<160x1xi1> to vector<160x32xi1>
    %49 = arith.select %48, %42, %46 : vector<160x32xi1>, vector<160x32xbf16>
    %c8 = arith.constant 8 : index
    %c0_26 = arith.constant 0 : index
    %50 = vector.load %arg14[%c8, %c0_26] : memref<176x32xbf16, #tpu.memory_space<vmem>>, vector<160x32xbf16>
    tpu.vector_store %arg14[%c8, %c0_26], %49 {strides = array<i32>} : memref<176x32xbf16, #tpu.memory_space<vmem>>, vector<160x32xbf16>,
    %c7 = arith.constant 7 : index
    %c0_27 = arith.constant 0 : index
    %51 = vector.load %arg12[%c7, %c0_27] : memref<176x32xbf16, #tpu.memory_space<vmem>>, vector<160x32xbf16>
    %52 = vector.extract_strided_slice %16 {offsets = [8, 0], sizes = [160, 1], strides = [1, 1]} : vector<176x1xi32> to vector<160x1xi32>
    %c0_i32_28 = arith.constant 0 : i32
    %53 = vector.broadcast %c0_i32_28 : i32 to vector<160x1xi32>
    %54 = arith.cmpi sgt, %52, %53 : vector<160x1xi32>
    %cst_29 = arith.constant 0.000000e+00 : bf16
    %55 = vector.broadcast %cst_29 : bf16 to vector<160x32xbf16>
    %56 = vector.shape_cast %54 : vector<160x1xi1> to vector<160x1xi1>
    %57 = vector.broadcast %56 : vector<160x1xi1> to vector<160x32xi1>
    %58 = arith.select %57, %51, %55 : vector<160x32xi1>, vector<160x32xbf16>
    %c8_30 = arith.constant 8 : index
    %c0_31 = arith.constant 0 : index
    %59 = vector.load %arg15[%c8_30, %c0_31] : memref<176x32xbf16, #tpu.memory_space<vmem>>, vector<160x32xbf16>
    tpu.vector_store %arg15[%c8_30, %c0_31], %58 {strides = array<i32>} : memref<176x32xbf16, #tpu.memory_space<vmem>>, vector<160x32xbf16>,
    %c8_32 = arith.constant 8 : index
    %c0_33 = arith.constant 0 : index
    %60 = vector.load %arg15[%c8_32, %c0_33] : memref<176x32xbf16, #tpu.memory_space<vmem>>, vector<144x32xbf16>
    %c8_34 = arith.constant 8 : index
    %c0_35 = arith.constant 0 : index
    %61 = vector.load %arg12[%c8_34, %c0_35] : memref<176x32xbf16, #tpu.memory_space<vmem>>, vector<144x32xbf16>
    %c8_36 = arith.constant 8 : index
    %c0_37 = arith.constant 0 : index
    %62 = vector.load %arg14[%c8_36, %c0_37] : memref<176x32xbf16, #tpu.memory_space<vmem>>, vector<144x32xbf16>
    %c16_38 = arith.constant 16 : index
    %c0_39 = arith.constant 0 : index
    %63 = vector.load %arg15[%c16_38, %c0_39] : memref<176x32xbf16, #tpu.memory_space<vmem>>, vector<144x32xbf16>
    %c16_40 = arith.constant 16 : index
    %c0_41 = arith.constant 0 : index
    %64 = vector.load %arg12[%c16_40, %c0_41] : memref<176x32xbf16, #tpu.memory_space<vmem>>, vector<144x32xbf16>
    %c16_42 = arith.constant 16 : index
    %c0_43 = arith.constant 0 : index
    %65 = vector.load %arg14[%c16_42, %c0_43] : memref<176x32xbf16, #tpu.memory_space<vmem>>, vector<144x32xbf16>
    %c24 = arith.constant 24 : index
    %c0_44 = arith.constant 0 : index
    %66 = vector.load %arg15[%c24, %c0_44] : memref<176x32xbf16, #tpu.memory_space<vmem>>, vector<144x32xbf16>
    %c24_45 = arith.constant 24 : index
    %c0_46 = arith.constant 0 : index
    %67 = vector.load %arg12[%c24_45, %c0_46] : memref<176x32xbf16, #tpu.memory_space<vmem>>, vector<144x32xbf16>
    %c24_47 = arith.constant 24 : index
    %c0_48 = arith.constant 0 : index
    %68 = vector.load %arg14[%c24_47, %c0_48] : memref<176x32xbf16, #tpu.memory_space<vmem>>, vector<144x32xbf16>
    %69 = tpu.concatenate %60, %61, %62, %63, %64, %65, %66, %67, %68 in 1 : vector<144x32xbf16>, vector<144x32xbf16>, vector<144x32xbf16>, vector<144x32xbf16>, vector<144x32xbf16>, vector<144x32xbf16>, vector<144x32xbf16>, vector<144x32xbf16>, vector<144x32xbf16> -> vector<144x288xbf16>
    %c0_49 = arith.constant 0 : index
    %c0_50 = arith.constant 0 : index
    %70 = vector.load %arg5[%c0_49, %c0_50] : memref<288x32xbf16, #tpu.memory_space<vmem>>, vector<288x32xbf16>
    %cst_51 = arith.constant dense<0.000000e+00> : vector<144x32xf32>
    %71 = tpu.matmul %69, %70, %cst_51 {dimension_numbers = #tpu.dot_dimension_numbers<[1], [0], [0], [1], [0, 0, 1, 1], [], []>} : vector<144x288xbf16>, vector<288x32xbf16>, vector<144x32xf32> -> vector<144x32xf32>
    %c0_52 = arith.constant 0 : index
    %c0_53 = arith.constant 0 : index
    %72 = vector.load %arg6[%c0_52, %c0_53] : memref<1x32xf32, #tpu.memory_space<vmem>>, vector<1x32xf32>
    %73 = vector.broadcast %72 : vector<1x32xf32> to vector<144x32xf32>
    %74 = arith.addf %71, %73 : vector<144x32xf32>
    %c0_54 = arith.constant 0 : index
    %c0_55 = arith.constant 0 : index
    %75 = vector.load %arg7[%c0_54, %c0_55] : memref<1x32xf32, #tpu.memory_space<vmem>>, vector<1x32xf32>
    %cst_56 = arith.constant 0.000000e+00 : f32
    %76 = vector.broadcast %cst_56 : f32 to vector<144x32xf32>
    %77 = arith.cmpf oge, %74, %76 : vector<144x32xf32>
    %78 = vector.broadcast %75 : vector<1x32xf32> to vector<144x32xf32>
    %79 = arith.mulf %78, %74 : vector<144x32xf32>
    %80 = arith.select %77, %74, %79 : vector<144x32xi1>, vector<144x32xf32>
    %81 = vector.extract_strided_slice %80 {offsets = [0, 0], sizes = [64, 32], strides = [1, 1]} : vector<144x32xf32> to vector<64x32xf32>
    %82 = arith.truncf %81 : vector<64x32xf32> to vector<64x32xbf16>
    %c16_57 = arith.constant 16 : index
    %c0_58 = arith.constant 0 : index
    %83 = vector.load %arg13[%c16_57, %c0_58] : memref<176x32xbf16, #tpu.memory_space<vmem>>, vector<64x32xbf16>
    tpu.vector_store %arg13[%c16_57, %c0_58], %82 {strides = array<i32>} : memref<176x32xbf16, #tpu.memory_space<vmem>>, vector<64x32xbf16>,
    %84 = vector.extract_strided_slice %80 {offsets = [80, 0], sizes = [64, 32], strides = [1, 1]} : vector<144x32xf32> to vector<64x32xf32>
    %85 = arith.truncf %84 : vector<64x32xf32> to vector<64x32xbf16>
    %c96_59 = arith.constant 96 : index
    %c0_60 = arith.constant 0 : index
    %86 = vector.load %arg13[%c96_59, %c0_60] : memref<176x32xbf16, #tpu.memory_space<vmem>>, vector<64x32xbf16>
    tpu.vector_store %arg13[%c96_59, %c0_60], %85 {strides = array<i32>} : memref<176x32xbf16, #tpu.memory_space<vmem>>, vector<64x32xbf16>,
    %c9_61 = arith.constant 9 : index
    %c0_62 = arith.constant 0 : index
    %87 = vector.load %arg13[%c9_61, %c0_62] : memref<176x32xbf16, #tpu.memory_space<vmem>>, vector<160x32xbf16>
    %88 = vector.extract_strided_slice %16 {offsets = [8, 0], sizes = [160, 1], strides = [1, 1]} : vector<176x1xi32> to vector<160x1xi32>
    %c7_i32_63 = arith.constant 7 : i32
    %89 = vector.broadcast %c7_i32_63 : i32 to vector<160x1xi32>
    %90 = arith.cmpi slt, %88, %89 : vector<160x1xi32>
    %cst_64 = arith.constant 0.000000e+00 : bf16
    %91 = vector.broadcast %cst_64 : bf16 to vector<160x32xbf16>
    %92 = vector.shape_cast %90 : vector<160x1xi1> to vector<160x1xi1>
    %93 = vector.broadcast %92 : vector<160x1xi1> to vector<160x32xi1>
    %94 = arith.select %93, %87, %91 : vector<160x32xi1>, vector<160x32xbf16>
    %c8_65 = arith.constant 8 : index
    %c0_66 = arith.constant 0 : index
    %95 = vector.load %arg14[%c8_65, %c0_66] : memref<176x32xbf16, #tpu.memory_space<vmem>>, vector<160x32xbf16>
    tpu.vector_store %arg14[%c8_65, %c0_66], %94 {strides = array<i32>} : memref<176x32xbf16, #tpu.memory_space<vmem>>, vector<160x32xbf16>,
    %c7_67 = arith.constant 7 : index
    %c0_68 = arith.constant 0 : index
    %96 = vector.load %arg13[%c7_67, %c0_68] : memref<176x32xbf16, #tpu.memory_space<vmem>>, vector<160x32xbf16>
    %97 = vector.extract_strided_slice %16 {offsets = [8, 0], sizes = [160, 1], strides = [1, 1]} : vector<176x1xi32> to vector<160x1xi32>
    %c0_i32_69 = arith.constant 0 : i32
    %98 = vector.broadcast %c0_i32_69 : i32 to vector<160x1xi32>
    %99 = arith.cmpi sgt, %97, %98 : vector<160x1xi32>
    %cst_70 = arith.constant 0.000000e+00 : bf16
    %100 = vector.broadcast %cst_70 : bf16 to vector<160x32xbf16>
    %101 = vector.shape_cast %99 : vector<160x1xi1> to vector<160x1xi1>
    %102 = vector.broadcast %101 : vector<160x1xi1> to vector<160x32xi1>
    %103 = arith.select %102, %96, %100 : vector<160x32xi1>, vector<160x32xbf16>
    %c8_71 = arith.constant 8 : index
    %c0_72 = arith.constant 0 : index
    %104 = vector.load %arg15[%c8_71, %c0_72] : memref<176x32xbf16, #tpu.memory_space<vmem>>, vector<160x32xbf16>
    tpu.vector_store %arg15[%c8_71, %c0_72], %103 {strides = array<i32>} : memref<176x32xbf16, #tpu.memory_space<vmem>>, vector<160x32xbf16>,
    %c8_73 = arith.constant 8 : index
    %c0_74 = arith.constant 0 : index
    %105 = vector.load %arg15[%c8_73, %c0_74] : memref<176x32xbf16, #tpu.memory_space<vmem>>, vector<144x32xbf16>
    %c8_75 = arith.constant 8 : index
    %c0_76 = arith.constant 0 : index
    %106 = vector.load %arg13[%c8_75, %c0_76] : memref<176x32xbf16, #tpu.memory_space<vmem>>, vector<144x32xbf16>
    %c8_77 = arith.constant 8 : index
    %c0_78 = arith.constant 0 : index
    %107 = vector.load %arg14[%c8_77, %c0_78] : memref<176x32xbf16, #tpu.memory_space<vmem>>, vector<144x32xbf16>
    %c16_79 = arith.constant 16 : index
    %c0_80 = arith.constant 0 : index
    %108 = vector.load %arg15[%c16_79, %c0_80] : memref<176x32xbf16, #tpu.memory_space<vmem>>, vector<144x32xbf16>
    %c16_81 = arith.constant 16 : index
    %c0_82 = arith.constant 0 : index
    %109 = vector.load %arg13[%c16_81, %c0_82] : memref<176x32xbf16, #tpu.memory_space<vmem>>, vector<144x32xbf16>
    %c16_83 = arith.constant 16 : index
    %c0_84 = arith.constant 0 : index
    %110 = vector.load %arg14[%c16_83, %c0_84] : memref<176x32xbf16, #tpu.memory_space<vmem>>, vector<144x32xbf16>
    %c24_85 = arith.constant 24 : index
    %c0_86 = arith.constant 0 : index
    %111 = vector.load %arg15[%c24_85, %c0_86] : memref<176x32xbf16, #tpu.memory_space<vmem>>, vector<144x32xbf16>
    %c24_87 = arith.constant 24 : index
    %c0_88 = arith.constant 0 : index
    %112 = vector.load %arg13[%c24_87, %c0_88] : memref<176x32xbf16, #tpu.memory_space<vmem>>, vector<144x32xbf16>
    %c24_89 = arith.constant 24 : index
    %c0_90 = arith.constant 0 : index
    %113 = vector.load %arg14[%c24_89, %c0_90] : memref<176x32xbf16, #tpu.memory_space<vmem>>, vector<144x32xbf16>
    %114 = tpu.concatenate %105, %106, %107, %108, %109, %110, %111, %112, %113 in 1 : vector<144x32xbf16>, vector<144x32xbf16>, vector<144x32xbf16>, vector<144x32xbf16>, vector<144x32xbf16>, vector<144x32xbf16>, vector<144x32xbf16>, vector<144x32xbf16>, vector<144x32xbf16> -> vector<144x288xbf16>
    %c0_91 = arith.constant 0 : index
    %c0_92 = arith.constant 0 : index
    %115 = vector.load %arg8[%c0_91, %c0_92] : memref<288x32xbf16, #tpu.memory_space<vmem>>, vector<288x32xbf16>
    %cst_93 = arith.constant dense<0.000000e+00> : vector<144x32xf32>
    %116 = tpu.matmul %114, %115, %cst_93 {dimension_numbers = #tpu.dot_dimension_numbers<[1], [0], [0], [1], [0, 0, 1, 1], [], []>} : vector<144x288xbf16>, vector<288x32xbf16>, vector<144x32xf32> -> vector<144x32xf32>
    %c0_94 = arith.constant 0 : index
    %c0_95 = arith.constant 0 : index
    %117 = vector.load %arg9[%c0_94, %c0_95] : memref<1x32xf32, #tpu.memory_space<vmem>>, vector<1x32xf32>
    %118 = vector.broadcast %117 : vector<1x32xf32> to vector<144x32xf32>
    %119 = arith.addf %116, %118 : vector<144x32xf32>
    %c0_96 = arith.constant 0 : index
    %c0_97 = arith.constant 0 : index
    %120 = vector.load %arg10[%c0_96, %c0_97] : memref<1x32xf32, #tpu.memory_space<vmem>>, vector<1x32xf32>
    %cst_98 = arith.constant 0.000000e+00 : f32
    %121 = vector.broadcast %cst_98 : f32 to vector<144x32xf32>
    %122 = arith.cmpf oge, %119, %121 : vector<144x32xf32>
    %123 = vector.broadcast %120 : vector<1x32xf32> to vector<144x32xf32>
    %124 = arith.mulf %123, %119 : vector<144x32xf32>
    %125 = arith.select %122, %119, %124 : vector<144x32xi1>, vector<144x32xf32>
    %c16_99 = arith.constant 16 : index
    %c0_100 = arith.constant 0 : index
    %126 = vector.load %arg12[%c16_99, %c0_100] : memref<176x32xbf16, #tpu.memory_space<vmem>>, vector<64x32xbf16>
    %127 = arith.extf %126 : vector<64x32xbf16> to vector<64x32xf32>
    %128 = vector.extract_strided_slice %125 {offsets = [0, 0], sizes = [64, 32], strides = [1, 1]} : vector<144x32xf32> to vector<64x32xf32>
    %129 = arith.addf %128, %127 : vector<64x32xf32>
    %c0_101 = arith.constant 0 : index
    %c0_102 = arith.constant 0 : index
    %130 = vector.load %arg11[%c0_101, %c0_102] : memref<128x32xf32, #tpu.memory_space<vmem>>, vector<64x32xf32>
    tpu.vector_store %arg11[%c0_101, %c0_102], %129 {strides = array<i32>} : memref<128x32xf32, #tpu.memory_space<vmem>>, vector<64x32xf32>,
    %c96_103 = arith.constant 96 : index
    %c0_104 = arith.constant 0 : index
    %131 = vector.load %arg12[%c96_103, %c0_104] : memref<176x32xbf16, #tpu.memory_space<vmem>>, vector<64x32xbf16>
    %132 = arith.extf %131 : vector<64x32xbf16> to vector<64x32xf32>
    %133 = vector.extract_strided_slice %125 {offsets = [80, 0], sizes = [64, 32], strides = [1, 1]} : vector<144x32xf32> to vector<64x32xf32>
    %134 = arith.addf %133, %132 : vector<64x32xf32>
    %c64 = arith.constant 64 : index
    %c0_105 = arith.constant 0 : index
    %135 = vector.load %arg11[%c64, %c0_105] : memref<128x32xf32, #tpu.memory_space<vmem>>, vector<64x32xf32>
    tpu.vector_store %arg11[%c64, %c0_105], %134 {strides = array<i32>} : memref<128x32xf32, #tpu.memory_space<vmem>>, vector<64x32xf32>,
    return
  }
  func.func @transform_0(%arg0: i32) -> (i32, i32) {
    %c0_i32 = arith.constant 0 : i32
    %c0_i32_0 = arith.constant 0 : i32
    return %arg0, %c0_i32 : i32, i32
  }
  func.func @transform_1(%arg0: i32) -> (i32, i32) {
    %c0_i32 = arith.constant 0 : i32
    %c0_i32_0 = arith.constant 0 : i32
    %c0_i32_1 = arith.constant 0 : i32
    return %c0_i32, %c0_i32_0 : i32, i32
  }
  func.func @transform_2(%arg0: i32) -> (i32, i32) {
    %c0_i32 = arith.constant 0 : i32
    %c0_i32_0 = arith.constant 0 : i32
    %c0_i32_1 = arith.constant 0 : i32
    return %c0_i32, %c0_i32_0 : i32, i32
  }
  func.func @transform_3(%arg0: i32) -> (i32, i32) {
    %c0_i32 = arith.constant 0 : i32
    %c0_i32_0 = arith.constant 0 : i32
    %c0_i32_1 = arith.constant 0 : i32
    return %c0_i32, %c0_i32_0 : i32, i32
  }
  func.func @transform_4(%arg0: i32) -> (i32, i32) {
    %c0_i32 = arith.constant 0 : i32
    %c0_i32_0 = arith.constant 0 : i32
    %c0_i32_1 = arith.constant 0 : i32
    return %c0_i32, %c0_i32_0 : i32, i32
  }
  func.func @transform_5(%arg0: i32) -> (i32, i32) {
    %c0_i32 = arith.constant 0 : i32
    %c0_i32_0 = arith.constant 0 : i32
    %c0_i32_1 = arith.constant 0 : i32
    return %c0_i32, %c0_i32_0 : i32, i32
  }
  func.func @transform_6(%arg0: i32) -> (i32, i32) {
    %c0_i32 = arith.constant 0 : i32
    %c0_i32_0 = arith.constant 0 : i32
    %c0_i32_1 = arith.constant 0 : i32
    return %c0_i32, %c0_i32_0 : i32, i32
  }
  func.func @transform_7(%arg0: i32) -> (i32, i32) {
    %c0_i32 = arith.constant 0 : i32
    %c0_i32_0 = arith.constant 0 : i32
    %c0_i32_1 = arith.constant 0 : i32
    return %c0_i32, %c0_i32_0 : i32, i32
  }
  func.func @transform_8(%arg0: i32) -> (i32, i32) {
    %c0_i32 = arith.constant 0 : i32
    %c0_i32_0 = arith.constant 0 : i32
    %c0_i32_1 = arith.constant 0 : i32
    return %c0_i32, %c0_i32_0 : i32, i32
  }
  func.func @transform_9(%arg0: i32) -> (i32, i32) {
    %c0_i32 = arith.constant 0 : i32
    %c0_i32_0 = arith.constant 0 : i32
    %c0_i32_1 = arith.constant 0 : i32
    return %c0_i32, %c0_i32_0 : i32, i32
  }
  func.func @transform_10(%arg0: i32) -> (i32, i32) {
    %c0_i32 = arith.constant 0 : i32
    %c0_i32_0 = arith.constant 0 : i32
    return %arg0, %c0_i32 : i32, i32
  }
}

</mosaic_0001>

<llo_original>
// kernel: bottleneck_a_forward.1
$region0: #{bottleneck_a_forward.1}
  #allocation0 [shape = 'u32[]', space=smem, size = 0x4, offset = 0x4, fixed_abs, tag = 'smem constant byte address 0x4 - core index']
  #allocation1 [shape = 'u32[72,128]{1,0:T(1,128)}', space=vmem, size = 0x9000, scoped, tag = 'internal scratch']
  #allocation2 [shape = 'bf16[176,32]{1,0:T(8,128)(2,1)}', space=vmem, size = 0xb000, scoped, tag = 'scratch operand']
  #allocation3 [shape = 'bf16[176,32]{1,0:T(8,128)(2,1)}', space=vmem, size = 0xb000, scoped, tag = 'scratch operand']
  #allocation4 [shape = 'bf16[176,32]{1,0:T(8,128)(2,1)}', space=vmem, size = 0xb000, scoped, tag = 'scratch operand']
  #allocation5 [shape = 'bf16[176,32]{1,0:T(8,128)(2,1)}', space=vmem, size = 0xb000, scoped, tag = 'scratch operand']
  %s0 = inlined_call_operand.vmem [shape: bf16[128,72], index: 0, kind: input, shape index: {}]
  %s1 = inlined_call_operand.vmem [shape: bf16[72,32], index: 1, kind: input, shape index: {}]
  %s2 = inlined_call_operand.vmem [shape: f32[1,32], index: 2, kind: input, shape index: {}]
  %s3 = inlined_call_operand.vmem [shape: f32[1,32], index: 3, kind: input, shape index: {}, may-alias: {3,6,9}]
  %s4 = inlined_call_operand.vmem [shape: bf16[288,32], index: 4, kind: input, shape index: {}]
  %s5 = inlined_call_operand.vmem [shape: f32[1,32], index: 5, kind: input, shape index: {}]
  %s6 = inlined_call_operand.vmem [shape: f32[1,32], index: 6, kind: input, shape index: {}, may-alias: {3,6,9}]
  %s7 = inlined_call_operand.vmem [shape: bf16[288,32], index: 7, kind: input, shape index: {}]
  %s8 = inlined_call_operand.vmem [shape: f32[1,32], index: 8, kind: input, shape index: {}]
  %s9 = inlined_call_operand.vmem [shape: f32[1,32], index: 9, kind: input, shape index: {}, may-alias: {3,6,9}]
  %s10 = inlined_call_operand.hbm [shape: f32[128,32], index: 10, kind: output, shape index: {}]
  %s11 = sld [smem:[#allocation0]]
  $region50: #{bottleneck_a_forward.1} parent=0
    _
  %s13 = ssub.s32 1, %s11
  %s14 = scalar_select 0, %s13, %s11
  $region1: #{bottleneck_a_forward.1} parent=0
    #allocation6 [shape = 'u8[65536]{0}', space=vmem, size = 0x10000, scoped, tag = 'output window, operand 0, single buffered']
    #allocation7 [shape = 's32[1]{0}', space=sflag, size = 0x4, scoped, tag = 'scoped memory for bottleneck_a_forward.1']
    %15 = vsyncpa [#allocation7], 0
    // Predicated region
    $region2: #{bottleneck_a_forward.1} parent=1 // pred_check
      _
    $region3: #{bottleneck_a_forward.1} parent=1 // pred_check_branch
      %17 = sbr.rel (0) target = $region5
    $region4: #{bottleneck_a_forward.1} parent=1 // pred_region
      _
    $region5: #{bottleneck_a_forward.1} parent=1 // pred_fallthru
      _
    // Predicated region
    $region6: #{bottleneck_a_forward.1} parent=1 // pred_check
      _
    $region7: #{bottleneck_a_forward.1} parent=1 // pred_check_branch
      %19 = sbr.rel (0) target = $region9
    $region8: #{bottleneck_a_forward.1} parent=1 // pred_region
      _
    $region9: #{bottleneck_a_forward.1} parent=1 // pred_fallthru
      _
    // Predicated region
    $region10: #{bottleneck_a_forward.1} parent=1 // pred_check
      _
    $region11: #{bottleneck_a_forward.1} parent=1 // pred_check_branch
      %21 = sbr.rel (0) target = $region13
    $region12: #{bottleneck_a_forward.1} parent=1 // pred_region
      _
    $region13: #{bottleneck_a_forward.1} parent=1 // pred_fallthru
      _
    // Predicated region
    $region14: #{bottleneck_a_forward.1} parent=1 // pred_check
      _
    $region15: #{bottleneck_a_forward.1} parent=1 // pred_check_branch
      %23 = sbr.rel (0) target = $region17
    $region16: #{bottleneck_a_forward.1} parent=1 // pred_region
      _
    $region17: #{bottleneck_a_forward.1} parent=1 // pred_fallthru
      _
    // Predicated region
    $region18: #{bottleneck_a_forward.1} parent=1 // pred_check
      _
    $region19: #{bottleneck_a_forward.1} parent=1 // pred_check_branch
      %25 = sbr.rel (0) target = $region21
    $region20: #{bottleneck_a_forward.1} parent=1 // pred_region
      _
    $region21: #{bottleneck_a_forward.1} parent=1 // pred_fallthru
      _
    // Predicated region
    $region22: #{bottleneck_a_forward.1} parent=1 // pred_check
      _
    $region23: #{bottleneck_a_forward.1} parent=1 // pred_check_branch
      %27 = sbr.rel (0) target = $region25
    $region24: #{bottleneck_a_forward.1} parent=1 // pred_region
      _
    $region25: #{bottleneck_a_forward.1} parent=1 // pred_fallthru
      _
    // Predicated region
    $region26: #{bottleneck_a_forward.1} parent=1 // pred_check
      _
    $region27: #{bottleneck_a_forward.1} parent=1 // pred_check_branch
      %29 = sbr.rel (0) target = $region29
    $region28: #{bottleneck_a_forward.1} parent=1 // pred_region
      _
    $region29: #{bottleneck_a_forward.1} parent=1 // pred_fallthru
      _
    // Predicated region
    $region30: #{bottleneck_a_forward.1} parent=1 // pred_check
      _
    $region31: #{bottleneck_a_forward.1} parent=1 // pred_check_branch
      %31 = sbr.rel (0) target = $region33
    $region32: #{bottleneck_a_forward.1} parent=1 // pred_region
      _
    $region33: #{bottleneck_a_forward.1} parent=1 // pred_fallthru
      _
    // Predicated region
    $region34: #{bottleneck_a_forward.1} parent=1 // pred_check
      _
    $region35: #{bottleneck_a_forward.1} parent=1 // pred_check_branch
      %33 = sbr.rel (0) target = $region37
    $region36: #{bottleneck_a_forward.1} parent=1 // pred_region
      _
    $region37: #{bottleneck_a_forward.1} parent=1 // pred_fallthru
      _
    // Predicated region
    $region38: #{bottleneck_a_forward.1} parent=1 // pred_check
      _
    $region39: #{bottleneck_a_forward.1} parent=1 // pred_check_branch
      %35 = sbr.rel (0) target = $region41
    $region40: #{bottleneck_a_forward.1} parent=1 // pred_region
      _
    $region41: #{bottleneck_a_forward.1} parent=1 // pred_fallthru
      _
    %v39 = vlaneseq
    %v40 = vshrl.u32 %v39, 7
    %v41 = vadd.s32 %v40, 8
    %v42 = vadd.s32 %v40, 16
    %v43 = vadd.s32 %v40, 24
    %v44 = vadd.s32 %v40, 32
    %v45 = vadd.s32 %v40, 40
    %v46 = vadd.s32 %v40, 48
    %v47 = vadd.s32 %v40, 56
    %v48 = vadd.s32 %v40, 64
    %v49 = vadd.s32 %v40, 72
    %v50 = vadd.s32 %v40, 80
    %v51 = vadd.s32 %v40, 88
    %v52 = vadd.s32 %v40, 96
    %v53 = vadd.s32 %v40, 104
    %v54 = vadd.s32 %v40, 112
    %v55 = vadd.s32 %v40, 120
    %v56 = vadd.s32 %v40, 128
    %v57 = vadd.s32 %v40, 136
    %v58 = vadd.s32 %v40, 144
    %v59 = vadd.s32 %v40, 152
    %v60 = vadd.s32 %v40, 160
    %vm61 = vcmp.lt.s32.totalorder %v41, 0
    %v62 = vsub.s32 0, %v41
    %v63 = vsel %vm61, %v62, %v41
    %v64 = vshrl.u32 %v63, 3
    %v65 = vand.u32 %v63, 7
    %v66 = vsub.s32 0, %v65
    %v67 = vsel %vm61, %v66, %v65
    %vm68 = vcmp.lt.s32.totalorder %v42, 0
    %v69 = vsub.s32 0, %v42
    %v70 = vsel %vm68, %v69, %v42
    %v71 = vshrl.u32 %v70, 3
    %v72 = vand.u32 %v70, 7
    %v73 = vsub.s32 0, %v72
    %v74 = vsel %vm68, %v73, %v72
    %vm75 = vcmp.lt.s32.totalorder %v43, 0
    %v76 = vsub.s32 0, %v43
    %v77 = vsel %vm75, %v76, %v43
    %v78 = vshrl.u32 %v77, 3
    %v79 = vand.u32 %v77, 7
    %v80 = vsub.s32 0, %v79
    %v81 = vsel %vm75, %v80, %v79
    %vm82 = vcmp.lt.s32.totalorder %v44, 0
    %v83 = vsub.s32 0, %v44
    %v84 = vsel %vm82, %v83, %v44
    %v85 = vshrl.u32 %v84, 3
    %v86 = vand.u32 %v84, 7
    %v87 = vsub.s32 0, %v86
    %v88 = vsel %vm82, %v87, %v86
    %vm89 = vcmp.lt.s32.totalorder %v45, 0
    %v90 = vsub.s32 0, %v45
    %v91 = vsel %vm89, %v90, %v45
    %v92 = vshrl.u32 %v91, 3
    %v93 = vand.u32 %v91, 7
    %v94 = vsub.s32 0, %v93
    %v95 = vsel %vm89, %v94, %v93
    %vm96 = vcmp.lt.s32.totalorder %v46, 0
    %v97 = vsub.s32 0, %v46
    %v98 = vsel %vm96, %v97, %v46
    %v99 = vshrl.u32 %v98, 3
    %v100 = vand.u32 %v98, 7
    %v101 = vsub.s32 0, %v100
    %v102 = vsel %vm96, %v101, %v100
    %vm103 = vcmp.lt.s32.totalorder %v47, 0
    %v104 = vsub.s32 0, %v47
    %v105 = vsel %vm103, %v104, %v47
    %v106 = vshrl.u32 %v105, 3
    %v107 = vand.u32 %v105, 7
    %v108 = vsub.s32 0, %v107
    %v109 = vsel %vm103, %v108, %v107
    %vm110 = vcmp.lt.s32.totalorder %v48, 0
    %v111 = vsub.s32 0, %v48
    %v112 = vsel %vm110, %v111, %v48
    %v113 = vshrl.u32 %v112, 3
    %v114 = vand.u32 %v112, 7
    %v115 = vsub.s32 0, %v114
    %v116 = vsel %vm110, %v115, %v114
    %vm117 = vcmp.lt.s32.totalorder %v49, 0
    %v118 = vsub.s32 0, %v49
    %v119 = vsel %vm117, %v118, %v49
    %v120 = vshrl.u32 %v119, 3
    %v121 = vand.u32 %v119, 7
    %v122 = vsub.s32 0, %v121
    %v123 = vsel %vm117, %v122, %v121
    %vm124 = vcmp.lt.s32.totalorder %v50, 0
    %v125 = vsub.s32 0, %v50
    %v126 = vsel %vm124, %v125, %v50
    %v127 = vshrl.u32 %v126, 3
    %v128 = vand.u32 %v126, 7
    %v129 = vsub.s32 0, %v128
    %v130 = vsel %vm124, %v129, %v128
    %vm131 = vcmp.lt.s32.totalorder %v51, 0
    %v132 = vsub.s32 0, %v51
    %v133 = vsel %vm131, %v132, %v51
    %v134 = vshrl.u32 %v133, 3
    %v135 = vand.u32 %v133, 7
    %v136 = vsub.s32 0, %v135
    %v137 = vsel %vm131, %v136, %v135
    %vm138 = vcmp.lt.s32.totalorder %v52, 0
    %v139 = vsub.s32 0, %v52
    %v140 = vsel %vm138, %v139, %v52
    %v141 = vshrl.u32 %v140, 3
    %v142 = vand.u32 %v140, 7
    %v143 = vsub.s32 0, %v142
    %v144 = vsel %vm138, %v143, %v142
    %vm145 = vcmp.lt.s32.totalorder %v53, 0
    %v146 = vsub.s32 0, %v53
    %v147 = vsel %vm145, %v146, %v53
    %v148 = vshrl.u32 %v147, 3
    %v149 = vand.u32 %v147, 7
    %v150 = vsub.s32 0, %v149
    %v151 = vsel %vm145, %v150, %v149
    %vm152 = vcmp.lt.s32.totalorder %v54, 0
    %v153 = vsub.s32 0, %v54
    %v154 = vsel %vm152, %v153, %v54
    %v155 = vshrl.u32 %v154, 3
    %v156 = vand.u32 %v154, 7
    %v157 = vsub.s32 0, %v156
    %v158 = vsel %vm152, %v157, %v156
    %vm159 = vcmp.lt.s32.totalorder %v55, 0
    %v160 = vsub.s32 0, %v55
    %v161 = vsel %vm159, %v160, %v55
    %v162 = vshrl.u32 %v161, 3
    %v163 = vand.u32 %v161, 7
    %v164 = vsub.s32 0, %v163
    %v165 = vsel %vm159, %v164, %v163
    %vm166 = vcmp.lt.s32.totalorder %v56, 0
    %v167 = vsub.s32 0, %v56
    %v168 = vsel %vm166, %v167, %v56
    %v169 = vshrl.u32 %v168, 3
    %v170 = vand.u32 %v168, 7
    %v171 = vsub.s32 0, %v170
    %v172 = vsel %vm166, %v171, %v170
    %vm173 = vcmp.lt.s32.totalorder %v57, 0
    %v174 = vsub.s32 0, %v57
    %v175 = vsel %vm173, %v174, %v57
    %v176 = vshrl.u32 %v175, 3
    %v177 = vand.u32 %v175, 7
    %v178 = vsub.s32 0, %v177
    %v179 = vsel %vm173, %v178, %v177
    %vm180 = vcmp.lt.s32.totalorder %v58, 0
    %v181 = vsub.s32 0, %v58
    %v182 = vsel %vm180, %v181, %v58
    %v183 = vshrl.u32 %v182, 3
    %v184 = vand.u32 %v182, 7
    %v185 = vsub.s32 0, %v184
    %v186 = vsel %vm180, %v185, %v184
    %vm187 = vcmp.lt.s32.totalorder %v59, 0
    %v188 = vsub.s32 0, %v59
    %v189 = vsel %vm187, %v188, %v59
    %v190 = vshrl.u32 %v189, 3
    %v191 = vand.u32 %v189, 7
    %v192 = vsub.s32 0, %v191
    %v193 = vsel %vm187, %v192, %v191
    %vm194 = vcmp.lt.s32.totalorder %v60, 0
    %v195 = vsub.s32 0, %v60
    %v196 = vsel %vm194, %v195, %v60
    %v197 = vshrl.u32 %v196, 3
    %v198 = vand.u32 %v196, 7
    %v199 = vsub.s32 0, %v198
    %v200 = vsel %vm194, %v199, %v198
    %vm201 = vcmp.ne.s32.totalorder %v67, 0
    %vm202 = vcmp.ne.s32.totalorder %v74, 0
    %vm203 = vcmp.ne.s32.totalorder %v81, 0
    %vm204 = vcmp.ne.s32.totalorder %v88, 0
    %vm205 = vcmp.ne.s32.totalorder %v95, 0
    %vm206 = vcmp.ne.s32.totalorder %v102, 0
    %vm207 = vcmp.ne.s32.totalorder %v109, 0
    %vm208 = vcmp.ne.s32.totalorder %v116, 0
    %vm209 = vcmp.ne.s32.totalorder %v123, 0
    %vm210 = vcmp.ne.s32.totalorder %v130, 0
    %vm211 = vcmp.ne.s32.totalorder %v137, 0
    %vm212 = vcmp.ne.s32.totalorder %v144, 0
    %vm213 = vcmp.ne.s32.totalorder %v151, 0
    %vm214 = vcmp.ne.s32.totalorder %v158, 0
    %vm215 = vcmp.ne.s32.totalorder %v165, 0
    %vm216 = vcmp.ne.s32.totalorder %v172, 0
    %vm217 = vcmp.ne.s32.totalorder %v179, 0
    %vm218 = vcmp.ne.s32.totalorder %v186, 0
    %vm219 = vcmp.ne.s32.totalorder %v193, 0
    %vm220 = vcmp.ne.s32.totalorder %v200, 0
    %vm221 = vcmp.lt.s32.totalorder %v67, 0
    %vm222 = vcmp.lt.s32.totalorder %v74, 0
    %vm223 = vcmp.lt.s32.totalorder %v81, 0
    %vm224 = vcmp.lt.s32.totalorder %v88, 0
    %vm225 = vcmp.lt.s32.totalorder %v95, 0
    %vm226 = vcmp.lt.s32.totalorder %v102, 0
    %vm227 = vcmp.lt.s32.totalorder %v109, 0
    %vm228 = vcmp.lt.s32.totalorder %v116, 0
    %vm229 = vcmp.lt.s32.totalorder %v123, 0
    %vm230 = vcmp.lt.s32.totalorder %v130, 0
    %vm231 = vcmp.lt.s32.totalorder %v137, 0
    %vm232 = vcmp.lt.s32.totalorder %v144, 0
    %vm233 = vcmp.lt.s32.totalorder %v151, 0
    %vm234 = vcmp.lt.s32.totalorder %v158, 0
    %vm235 = vcmp.lt.s32.totalorder %v165, 0
    %vm236 = vcmp.lt.s32.totalorder %v172, 0
    %vm237 = vcmp.lt.s32.totalorder %v179, 0
    %vm238 = vcmp.lt.s32.totalorder %v186, 0
    %vm239 = vcmp.lt.s32.totalorder %v193, 0
    %vm240 = vcmp.lt.s32.totalorder %v200, 0
    %vm241 = vmand %vm221, %vm201
    %vm242 = vmand %vm222, %vm202
    %vm243 = vmand %vm223, %vm203
    %vm244 = vmand %vm224, %vm204
    %vm245 = vmand %vm225, %vm205
    %vm246 = vmand %vm226, %vm206
    %vm247 = vmand %vm227, %vm207
    %vm248 = vmand %vm228, %vm208
    %vm249 = vmand %vm229, %vm209
    %vm250 = vmand %vm230, %vm210
    %vm251 = vmand %vm231, %vm211
    %vm252 = vmand %vm232, %vm212
    %vm253 = vmand %vm233, %vm213
    %vm254 = vmand %vm234, %vm214
    %vm255 = vmand %vm235, %vm215
    %vm256 = vmand %vm236, %vm216
    %vm257 = vmand %vm237, %vm217
    %vm258 = vmand %vm238, %vm218
    %vm259 = vmand %vm239, %vm219
    %vm260 = vmand %vm240, %vm220
    %v261 = vadd.s32 %v67, 8
    %v262 = vadd.s32 %v74, 8
    %v263 = vadd.s32 %v81, 8
    %v264 = vadd.s32 %v88, 8
    %v265 = vadd.s32 %v95, 8
    %v266 = vadd.s32 %v102, 8
    %v267 = vadd.s32 %v109, 8
    %v268 = vadd.s32 %v116, 8
    %v269 = vadd.s32 %v123, 8
    %v270 = vadd.s32 %v130, 8
    %v271 = vadd.s32 %v137, 8
    %v272 = vadd.s32 %v144, 8
    %v273 = vadd.s32 %v151, 8
    %v274 = vadd.s32 %v158, 8
    %v275 = vadd.s32 %v165, 8
    %v276 = vadd.s32 %v172, 8
    %v277 = vadd.s32 %v179, 8
    %v278 = vadd.s32 %v186, 8
    %v279 = vadd.s32 %v193, 8
    %v280 = vadd.s32 %v200, 8
    %v281 = vsel %vm241, %v261, %v67
    %v282 = vsel %vm242, %v262, %v74
    %v283 = vsel %vm243, %v263, %v81
    %v284 = vsel %vm244, %v264, %v88
    %v285 = vsel %vm245, %v265, %v95
    %v286 = vsel %vm246, %v266, %v102
    %v287 = vsel %vm247, %v267, %v109
    %v288 = vsel %vm248, %v268, %v116
    %v289 = vsel %vm249, %v269, %v123
    %v290 = vsel %vm250, %v270, %v130
    %v291 = vsel %vm251, %v271, %v137
    %v292 = vsel %vm252, %v272, %v144
    %v293 = vsel %vm253, %v273, %v151
    %v294 = vsel %vm254, %v274, %v158
    %v295 = vsel %vm255, %v275, %v165
    %v296 = vsel %vm256, %v276, %v172
    %v297 = vsel %vm257, %v277, %v179
    %v298 = vsel %vm258, %v278, %v186
    %v299 = vsel %vm259, %v279, %v193
    %v300 = vsel %vm260, %v280, %v200
    %v301 = vld [vmem:[%s0] sm:$0xf]
    %v302 = vld [vmem:[%s0 + $0x4] sm:$0xf]
    %v303 = vld [vmem:[%s0 + $0x8] sm:$0xf]
    %v304 = vld [vmem:[%s0 + $0xc] sm:$0xf]
    %v305 = vld [vmem:[%s0 + $0x10] sm:$0xf]
    %v306 = vld [vmem:[%s0 + $0x14] sm:$0xf]
    %v307 = vld [vmem:[%s0 + $0x18] sm:$0xf]
    %v308 = vld [vmem:[%s0 + $0x1c] sm:$0xf]
    %v309 = vld [vmem:[%s0 + $0x20] sm:$0xf]
    %v310 = vld [vmem:[%s0 + $0x24] sm:$0xf]
    %v311 = vld [vmem:[%s0 + $0x28] sm:$0xf]
    %v312 = vld [vmem:[%s0 + $0x2c] sm:$0xf]
    %v313 = vld [vmem:[%s0 + $0x30] sm:$0xf]
    %v314 = vld [vmem:[%s0 + $0x34] sm:$0xf]
    %v315 = vld [vmem:[%s0 + $0x38] sm:$0xf]
    %v316 = vld [vmem:[%s0 + $0x3c] sm:$0xf]
    %v317 = vld [vmem:[%s1] sm:$0xf]
    %v318 = vld [vmem:[%s1 + $0x4] sm:$0xf]
    %v319 = vld [vmem:[%s1 + $0x8] sm:$0xf]
    %v320 = vld [vmem:[%s1 + $0xc] sm:$0xf]
    %v321 = vld [vmem:[%s1 + $0x10] sm:$0xf]
    %v322 = vld [vmem:[%s1 + $0x14] sm:$0xf]
    %v323 = vld [vmem:[%s1 + $0x18] sm:$0xf]
    %v324 = vld [vmem:[%s1 + $0x1c] sm:$0xf]
    %v325 = vld [vmem:[%s1 + $0x20] sm:$0xf]
    %v326 = vld [vmem:[%s2] sm:$0x1]
    %v328 = vperm.slane %v326, 0
    %v346 = vunpack.c.l.b16 %v301
    %v347 = vunpack.c.l.b16 %v302
    %v348 = vunpack.c.l.b16 %v303
    %v349 = vunpack.c.l.b16 %v304
    %v350 = vunpack.c.l.b16 %v305
    %v351 = vunpack.c.l.b16 %v306
    %v352 = vunpack.c.l.b16 %v307
    %v353 = vunpack.c.l.b16 %v308
    %v354 = vunpack.c.l.b16 %v309
    %v355 = vunpack.c.l.b16 %v310
    %v356 = vunpack.c.l.b16 %v311
    %v357 = vunpack.c.l.b16 %v312
    %v358 = vunpack.c.l.b16 %v313
    %v359 = vunpack.c.l.b16 %v314
    %v360 = vunpack.c.l.b16 %v315
    %v361 = vunpack.c.l.b16 %v316
    %v362 = vpack.c.b16 %v347, %v346
    %v363 = vpack.c.b16 %v349, %v348
    %v364 = vpack.c.b16 %v351, %v350
    %v365 = vpack.c.b16 %v353, %v352
    %v366 = vpack.c.b16 %v355, %v354
    %v367 = vpack.c.b16 %v357, %v356
    %v368 = vpack.c.b16 %v359, %v358
    %v369 = vpack.c.b16 %v361, %v360
    %v379 = vunpack.c.l.b16 %v317
    %v380 = vunpack.c.l.b16 %v318
    %v381 = vunpack.c.l.b16 %v319
    %v382 = vunpack.c.l.b16 %v320
    %v383 = vunpack.c.l.b16 %v321
    %v384 = vunpack.c.l.b16 %v322
    %v385 = vunpack.c.l.b16 %v323
    %v386 = vunpack.c.l.b16 %v324
    %v387 = vunpack.c.l.b16 %v325
    %v388 = vpack.c.b16 %v380, %v379
    %v389 = vpack.c.b16 %v382, %v381
    %v390 = vpack.c.b16 %v384, %v383
    %v391 = vpack.c.b16 %v386, %v385
    %v392 = vpack.c.b16 %v387, %v387
    %vm397 = vcmask 588800
    %v399 = vsel %vm397, %v362, 0
    %v402 = vsel %vm397, %v363, 0
    %v405 = vsel %vm397, %v364, 0
    %v408 = vsel %vm397, %v365, 0
    %v411 = vsel %vm397, %v366, 0
    %v414 = vsel %vm397, %v367, 0
    %v417 = vsel %vm397, %v368, 0
    %v420 = vsel %vm397, %v369, 0
    %vm422 = vcmask 1043456
    %v424 = vsel %vm422, %v392, 0
    %426 = vmatpush.bf16.msra.mxu0 0
    %427 = vmatpush.bf16.msra.mxu0 0
    %428 = vmatpush.bf16.msra.mxu0 0
    %429 = vmatpush.bf16.msra.mxu0 %v424
    %430 = vmatpush.bf16.msra.mxu0 %v391
    %431 = vmatpush.bf16.msra.mxu0 %v390
    %432 = vmatpush.bf16.msra.mxu0 %v389
    %433 = vmatpush.bf16.msra.mxu0 %v388
    %434 = vmatmul.bf16.gmra.mxu0 %v399
    %v435 = vpop.f32.mrf.mxu0
    %v436 = vadd.f32 %v328, %v435
    %v437 = vpop.f32.mrf.mxu0
    %v438 = vadd.f32 %v328, %v437
    %439 = vmatmul.bf16.gmra.mxu0 %v402
    %v440 = vpop.f32.mrf.mxu0
    %v441 = vadd.f32 %v328, %v440
    %v442 = vpop.f32.mrf.mxu0
    %v443 = vadd.f32 %v328, %v442
    %444 = vmatmul.bf16.gmra.mxu0 %v405
    %v445 = vpop.f32.mrf.mxu0
    %v446 = vadd.f32 %v328, %v445
    %v447 = vpop.f32.mrf.mxu0
    %v448 = vadd.f32 %v328, %v447
    %449 = vmatmul.bf16.gmra.mxu0 %v408
    %v450 = vpop.f32.mrf.mxu0
    %v451 = vadd.f32 %v328, %v450
    %v452 = vpop.f32.mrf.mxu0
    %v453 = vadd.f32 %v328, %v452
    %454 = vmatmul.bf16.gmra.mxu0 %v411
    %v455 = vpop.f32.mrf.mxu0
    %v456 = vadd.f32 %v328, %v455
    %v457 = vpop.f32.mrf.mxu0
    %v458 = vadd.f32 %v328, %v457
    %459 = vmatmul.bf16.gmra.mxu0 %v414
    %v460 = vpop.f32.mrf.mxu0
    %v461 = vadd.f32 %v328, %v460
    %v462 = vpop.f32.mrf.mxu0
    %v463 = vadd.f32 %v328, %v462
    %464 = vmatmul.bf16.gmra.mxu0 %v417
    %v465 = vpop.f32.mrf.mxu0
    %v466 = vadd.f32 %v328, %v465
    %v467 = vpop.f32.mrf.mxu0
    %v468 = vadd.f32 %v328, %v467
    %469 = vmatmul.bf16.gmra.mxu0 %v420
    %v470 = vpop.f32.mrf.mxu0
    %v471 = vadd.f32 %v328, %v470
    %v472 = vpop.f32.mrf.mxu0
    %v473 = vadd.f32 %v328, %v472
    %474 = vdwg.mxu0
    %v475 = vld [vmem:[%s3] sm:$0x1]
    %vm476 = vcmp.ge.f32.partialorder %v436, 0.0
    %vm477 = vcmp.ge.f32.partialorder %v438, 0.0
    %vm478 = vcmp.ge.f32.partialorder %v441, 0.0
    %vm479 = vcmp.ge.f32.partialorder %v443, 0.0
    %vm480 = vcmp.ge.f32.partialorder %v446, 0.0
    %vm481 = vcmp.ge.f32.partialorder %v448, 0.0
    %vm482 = vcmp.ge.f32.partialorder %v451, 0.0
    %vm483 = vcmp.ge.f32.partialorder %v453, 0.0
    %vm484 = vcmp.ge.f32.partialorder %v456, 0.0
    %vm485 = vcmp.ge.f32.partialorder %v458, 0.0
    %vm486 = vcmp.ge.f32.partialorder %v461, 0.0
    %vm487 = vcmp.ge.f32.partialorder %v463, 0.0
    %vm488 = vcmp.ge.f32.partialorder %v466, 0.0
    %vm489 = vcmp.ge.f32.partialorder %v468, 0.0
    %vm490 = vcmp.ge.f32.partialorder %v471, 0.0
    %vm491 = vcmp.ge.f32.partialorder %v473, 0.0
    %v493 = vperm.slane %v475, 0
    %v495 = vmul.f32 %v493, %v436
    %v496 = vmul.f32 %v493, %v438
    %v497 = vmul.f32 %v493, %v441
    %v498 = vmul.f32 %v493, %v443
    %v499 = vmul.f32 %v493, %v446
    %v500 = vmul.f32 %v493, %v448
    %v501 = vmul.f32 %v493, %v451
    %v502 = vmul.f32 %v493, %v453
    %v503 = vmul.f32 %v493, %v456
    %v504 = vmul.f32 %v493, %v458
    %v505 = vmul.f32 %v493, %v461
    %v506 = vmul.f32 %v493, %v463
    %v507 = vmul.f32 %v493, %v466
    %v508 = vmul.f32 %v493, %v468
    %v509 = vmul.f32 %v493, %v471
    %v510 = vmul.f32 %v493, %v473
    %v511 = vsel %vm476, %v436, %v495
    %v512 = vsel %vm477, %v438, %v496
    %v513 = vsel %vm478, %v441, %v497
    %v514 = vsel %vm479, %v443, %v498
    %v515 = vsel %vm480, %v446, %v499
    %v516 = vsel %vm481, %v448, %v500
    %v517 = vsel %vm482, %v451, %v501
    %v518 = vsel %vm483, %v453, %v502
    %v519 = vsel %vm484, %v456, %v503
    %v520 = vsel %vm485, %v458, %v504
    %v521 = vsel %vm486, %v461, %v505
    %v522 = vsel %vm487, %v463, %v506
    %v523 = vsel %vm488, %v466, %v507
    %v524 = vsel %vm489, %v468, %v508
    %v525 = vsel %vm490, %v471, %v509
    %v526 = vsel %vm491, %v473, %v510
    %vm527 = vcmask 257024
    %528 = vst.msk [vmem:[#allocation2] sm:$0xf] %vm527, 0
    %529 = vst.msk [vmem:[#allocation2 + $0x4] sm:$0xf] %vm527, 0
    %530 = vst.msk [vmem:[#allocation2 + $0x28] sm:$0xf] %vm527, 0
    %531 = vst.msk [vmem:[#allocation2 + $0x2c] sm:$0xf] %vm527, 0
    %532 = vst.msk [vmem:[#allocation2 + $0x50] sm:$0xf] %vm527, 0
    %533 = vst.msk [vmem:[#allocation2 + $0x54] sm:$0xf] %vm527, 0
    %v534 = vpack.c.bf16 %v511, %v511
    %v535 = vpack.c.bf16 %v512, %v512
    %v536 = vpack.c.bf16 %v513, %v513
    %v537 = vpack.c.bf16 %v514, %v514
    %v538 = vpack.c.bf16 %v515, %v515
    %v539 = vpack.c.bf16 %v516, %v516
    %v540 = vpack.c.bf16 %v517, %v517
    %v541 = vpack.c.bf16 %v518, %v518
    %542 = vst.msk [vmem:[#allocation2 + $0x8] sm:$0xf] %vm527, %v534
    %543 = vst.msk [vmem:[#allocation2 + $0xc] sm:$0xf] %vm527, %v535
    %544 = vst.msk [vmem:[#allocation2 + $0x10] sm:$0xf] %vm527, %v536
    %545 = vst.msk [vmem:[#allocation2 + $0x14] sm:$0xf] %vm527, %v537
    %546 = vst.msk [vmem:[#allocation2 + $0x18] sm:$0xf] %vm527, %v538
    %547 = vst.msk [vmem:[#allocation2 + $0x1c] sm:$0xf] %vm527, %v539
    %548 = vst.msk [vmem:[#allocation2 + $0x20] sm:$0xf] %vm527, %v540
    %549 = vst.msk [vmem:[#allocation2 + $0x24] sm:$0xf] %vm527, %v541
    %v550 = vpack.c.bf16 %v519, %v519
    %v551 = vpack.c.bf16 %v520, %v520
    %v552 = vpack.c.bf16 %v521, %v521
    %v553 = vpack.c.bf16 %v522, %v522
    %v554 = vpack.c.bf16 %v523, %v523
    %v555 = vpack.c.bf16 %v524, %v524
    %v556 = vpack.c.bf16 %v525, %v525
    %v557 = vpack.c.bf16 %v526, %v526
    %558 = vst.msk [vmem:[#allocation2 + $0x30] sm:$0xf] %vm527, %v550
    %559 = vst.msk [vmem:[#allocation2 + $0x34] sm:$0xf] %vm527, %v551
    %560 = vst.msk [vmem:[#allocation2 + $0x38] sm:$0xf] %vm527, %v552
    %561 = vst.msk [vmem:[#allocation2 + $0x3c] sm:$0xf] %vm527, %v553
    %562 = vst.msk [vmem:[#allocation2 + $0x40] sm:$0xf] %vm527, %v554
    %563 = vst.msk [vmem:[#allocation2 + $0x44] sm:$0xf] %vm527, %v555
    %564 = vst.msk [vmem:[#allocation2 + $0x48] sm:$0xf] %vm527, %v556
    %565 = vst.msk [vmem:[#allocation2 + $0x4c] sm:$0xf] %vm527, %v557
    %566 = vst.msk [vmem:[#allocation3] sm:$0xf] %vm527, 0
    %567 = vst.msk [vmem:[#allocation3 + $0x4] sm:$0xf] %vm527, 0
    %568 = vst.msk [vmem:[#allocation3 + $0x28] sm:$0xf] %vm527, 0
    %569 = vst.msk [vmem:[#allocation3 + $0x2c] sm:$0xf] %vm527, 0
    %570 = vst.msk [vmem:[#allocation3 + $0x50] sm:$0xf] %vm527, 0
    %571 = vst.msk [vmem:[#allocation3 + $0x54] sm:$0xf] %vm527, 0
    %v572 = vld [vmem:[#allocation2 + $0x4] sm:$0xf]
    %v573 = vld [vmem:[#allocation2 + $0x8] sm:$0xf]
    %v574 = vld [vmem:[#allocation2 + $0xc] sm:$0xf]
    %v575 = vld [vmem:[#allocation2 + $0x10] sm:$0xf]
    %v576 = vld [vmem:[#allocation2 + $0x14] sm:$0xf]
    %v577 = vld [vmem:[#allocation2 + $0x18] sm:$0xf]
    %v578 = vld [vmem:[#allocation2 + $0x1c] sm:$0xf]
    %v579 = vld [vmem:[#allocation2 + $0x20] sm:$0xf]
    %v580 = vld [vmem:[#allocation2 + $0x24] sm:$0xf]
    %v581 = vld [vmem:[#allocation2 + $0x28] sm:$0xf]
    %v582 = vld [vmem:[#allocation2 + $0x2c] sm:$0xf]
    %v583 = vld [vmem:[#allocation2 + $0x30] sm:$0xf]
    %v584 = vld [vmem:[#allocation2 + $0x34] sm:$0xf]
    %v585 = vld [vmem:[#allocation2 + $0x38] sm:$0xf]
    %v586 = vld [vmem:[#allocation2 + $0x3c] sm:$0xf]
    %v587 = vld [vmem:[#allocation2 + $0x40] sm:$0xf]
    %v588 = vld [vmem:[#allocation2 + $0x44] sm:$0xf]
    %v589 = vld [vmem:[#allocation2 + $0x48] sm:$0xf]
    %v590 = vld [vmem:[#allocation2 + $0x4c] sm:$0xf]
    %v591 = vld [vmem:[#allocation2 + $0x50] sm:$0xf]
    %v592 = vld [vmem:[#allocation2 + $0x54] sm:$0x1]
    %vm593 = vcmp.lt.s32.totalorder %v281, 7
    %vm594 = vcmp.lt.s32.totalorder %v282, 7
    %vm595 = vcmp.lt.s32.totalorder %v283, 7
    %vm596 = vcmp.lt.s32.totalorder %v284, 7
    %vm597 = vcmp.lt.s32.totalorder %v285, 7
    %vm598 = vcmp.lt.s32.totalorder %v286, 7
    %vm599 = vcmp.lt.s32.totalorder %v287, 7
    %vm600 = vcmp.lt.s32.totalorder %v288, 7
    %vm601 = vcmp.lt.s32.totalorder %v289, 7
    %vm602 = vcmp.lt.s32.totalorder %v290, 7
    %vm603 = vcmp.lt.s32.totalorder %v291, 7
    %vm604 = vcmp.lt.s32.totalorder %v292, 7
    %vm605 = vcmp.lt.s32.totalorder %v293, 7
    %vm606 = vcmp.lt.s32.totalorder %v294, 7
    %vm607 = vcmp.lt.s32.totalorder %v295, 7
    %vm608 = vcmp.lt.s32.totalorder %v296, 7
    %vm609 = vcmp.lt.s32.totalorder %v297, 7
    %vm610 = vcmp.lt.s32.totalorder %v298, 7
    %vm611 = vcmp.lt.s32.totalorder %v299, 7
    %vm612 = vcmp.lt.s32.totalorder %v300, 7
    %v613 = vsel %vm593, 1, 0
    %v614 = vsel %vm594, 1, 0
    %v615 = vsel %vm595, 1, 0
    %v616 = vsel %vm596, 1, 0
    %v617 = vsel %vm597, 1, 0
    %v618 = vsel %vm598, 1, 0
    %v619 = vsel %vm599, 1, 0
    %v620 = vsel %vm600, 1, 0
    %v621 = vsel %vm601, 1, 0
    %v622 = vsel %vm602, 1, 0
    %v623 = vsel %vm603, 1, 0
    %v624 = vsel %vm604, 1, 0
    %v625 = vsel %vm605, 1, 0
    %v626 = vsel %vm606, 1, 0
    %v627 = vsel %vm607, 1, 0
    %v628 = vsel %vm608, 1, 0
    %v629 = vsel %vm609, 1, 0
    %v630 = vsel %vm610, 1, 0
    %v631 = vsel %vm611, 1, 0
    %v632 = vsel %vm612, 1, 0
    %vm633 = vcmp.eq.s32.totalorder %v613, 1
    %vm634 = vcmp.eq.s32.totalorder %v614, 1
    %vm635 = vcmp.eq.s32.totalorder %v615, 1
    %vm636 = vcmp.eq.s32.totalorder %v616, 1
    %vm637 = vcmp.eq.s32.totalorder %v617, 1
    %vm638 = vcmp.eq.s32.totalorder %v618, 1
    %vm639 = vcmp.eq.s32.totalorder %v619, 1
    %vm640 = vcmp.eq.s32.totalorder %v620, 1
    %vm641 = vcmp.eq.s32.totalorder %v621, 1
    %vm642 = vcmp.eq.s32.totalorder %v622, 1
    %vm643 = vcmp.eq.s32.totalorder %v623, 1
    %vm644 = vcmp.eq.s32.totalorder %v624, 1
    %vm645 = vcmp.eq.s32.totalorder %v625, 1
    %vm646 = vcmp.eq.s32.totalorder %v626, 1
    %vm647 = vcmp.eq.s32.totalorder %v627, 1
    %vm648 = vcmp.eq.s32.totalorder %v628, 1
    %vm649 = vcmp.eq.s32.totalorder %v629, 1
    %vm650 = vcmp.eq.s32.totalorder %v630, 1
    %vm651 = vcmp.eq.s32.totalorder %v631, 1
    %vm652 = vcmp.eq.s32.totalorder %v632, 1
    %vm653 = vmpackc.low %vm633, %vm633
    %vm654 = vmpackc.low %vm634, %vm634
    %vm655 = vmpackc.low %vm635, %vm635
    %vm656 = vmpackc.low %vm636, %vm636
    %vm657 = vmpackc.low %vm637, %vm637
    %vm658 = vmpackc.low %vm638, %vm638
    %vm659 = vmpackc.low %vm639, %vm639
    %vm660 = vmpackc.low %vm640, %vm640
    %vm661 = vmpackc.low %vm641, %vm641
    %vm662 = vmpackc.low %vm642, %vm642
    %vm663 = vmpackc.low %vm643, %vm643
    %vm664 = vmpackc.low %vm644, %vm644
    %vm665 = vmpackc.low %vm645, %vm645
    %vm666 = vmpackc.low %vm646, %vm646
    %vm667 = vmpackc.low %vm647, %vm647
    %vm668 = vmpackc.low %vm648, %vm648
    %vm669 = vmpackc.low %vm649, %vm649
    %vm670 = vmpackc.low %vm650, %vm650
    %vm671 = vmpackc.low %vm651, %vm651
    %vm672 = vmpackc.low %vm652, %vm652
    %v673 = vsel %vm653, 65537, 0
    %v674 = vsel %vm654, 65537, 0
    %v675 = vsel %vm655, 65537, 0
    %v676 = vsel %vm656, 65537, 0
    %v677 = vsel %vm657, 65537, 0
    %v678 = vsel %vm658, 65537, 0
    %v679 = vsel %vm659, 65537, 0
    %v680 = vsel %vm660, 65537, 0
    %v681 = vsel %vm661, 65537, 0
    %v682 = vsel %vm662, 65537, 0
    %v683 = vsel %vm663, 65537, 0
    %v684 = vsel %vm664, 65537, 0
    %v685 = vsel %vm665, 65537, 0
    %v686 = vsel %vm666, 65537, 0
    %v687 = vsel %vm667, 65537, 0
    %v688 = vsel %vm668, 65537, 0
    %v689 = vsel %vm669, 65537, 0
    %v690 = vsel %vm670, 65537, 0
    %v691 = vsel %vm671, 65537, 0
    %v692 = vsel %vm672, 65537, 0
    %vm693 = vsmask.f32 256
    %vm694 = vsmask.f32 4368
    %vm695 = vmor %vm693, %vm694
    %v697 = vshrl.u32 %v673, 16
    %v699 = vrot.slane %v697, 7
    %v700 = vshll.u32 %v673, 16
    %v702 = vor.u32 %v699, %v700
    %v703 = vrot.slane %v699, 4
    %v705 = vshrl.u32 %v674, 16
    %v707 = vrot.slane %v705, 7
    %v708 = vshll.u32 %v674, 16
    %v710 = vor.u32 %v707, %v708
    %v711 = vsel %vm695, %v703, %v710
    %v712 = vrot.slane %v707, 4
    %v714 = vshrl.u32 %v675, 16
    %v716 = vrot.slane %v714, 7
    %v717 = vshll.u32 %v675, 16
    %v719 = vor.u32 %v716, %v717
    %v720 = vsel %vm695, %v712, %v719
    %v721 = vrot.slane %v716, 4
    %v723 = vshrl.u32 %v676, 16
    %v725 = vrot.slane %v723, 7
    %v726 = vshll.u32 %v676, 16
    %v728 = vor.u32 %v725, %v726
    %v729 = vsel %vm695, %v721, %v728
    %v730 = vrot.slane %v725, 4
    %v732 = vshrl.u32 %v677, 16
    %v734 = vrot.slane %v732, 7
    %v735 = vshll.u32 %v677, 16
    %v737 = vor.u32 %v734, %v735
    %v738 = vsel %vm695, %v730, %v737
    %v739 = vrot.slane %v734, 4
    %v741 = vshrl.u32 %v678, 16
    %v743 = vrot.slane %v741, 7
    %v744 = vshll.u32 %v678, 16
    %v746 = vor.u32 %v743, %v744
    %v747 = vsel %vm695, %v739, %v746
    %v748 = vrot.slane %v743, 4
    %v750 = vshrl.u32 %v679, 16
    %v752 = vrot.slane %v750, 7
    %v753 = vshll.u32 %v679, 16
    %v755 = vor.u32 %v752, %v753
    %v756 = vsel %vm695, %v748, %v755
    %v757 = vrot.slane %v752, 4
    %v759 = vshrl.u32 %v680, 16
    %v761 = vrot.slane %v759, 7
    %v762 = vshll.u32 %v680, 16
    %v764 = vor.u32 %v761, %v762
    %v765 = vsel %vm695, %v757, %v764
    %v766 = vrot.slane %v761, 4
    %v768 = vshrl.u32 %v681, 16
    %v770 = vrot.slane %v768, 7
    %v771 = vshll.u32 %v681, 16
    %v773 = vor.u32 %v770, %v771
    %v774 = vsel %vm695, %v766, %v773
    %v775 = vrot.slane %v770, 4
    %v777 = vshrl.u32 %v682, 16
    %v779 = vrot.slane %v777, 7
    %v780 = vshll.u32 %v682, 16
    %v782 = vor.u32 %v779, %v780
    %v783 = vsel %vm695, %v775, %v782
    %v784 = vrot.slane %v779, 4
    %v786 = vshrl.u32 %v683, 16
    %v788 = vrot.slane %v786, 7
    %v789 = vshll.u32 %v683, 16
    %v791 = vor.u32 %v788, %v789
    %v792 = vsel %vm695, %v784, %v791
    %v793 = vrot.slane %v788, 4
    %v795 = vshrl.u32 %v684, 16
    %v797 = vrot.slane %v795, 7
    %v798 = vshll.u32 %v684, 16
    %v800 = vor.u32 %v797, %v798
    %v801 = vsel %vm695, %v793, %v800
    %v802 = vrot.slane %v797, 4
    %v804 = vshrl.u32 %v685, 16
    %v806 = vrot.slane %v804, 7
    %v807 = vshll.u32 %v685, 16
    %v809 = vor.u32 %v806, %v807
    %v810 = vsel %vm695, %v802, %v809
    %v811 = vrot.slane %v806, 4
    %v813 = vshrl.u32 %v686, 16
    %v815 = vrot.slane %v813, 7
    %v816 = vshll.u32 %v686, 16
    %v818 = vor.u32 %v815, %v816
    %v819 = vsel %vm695, %v811, %v818
    %v820 = vrot.slane %v815, 4
    %v822 = vshrl.u32 %v687, 16
    %v824 = vrot.slane %v822, 7
    %v825 = vshll.u32 %v687, 16
    %v827 = vor.u32 %v824, %v825
    %v828 = vsel %vm695, %v820, %v827
    %v829 = vrot.slane %v824, 4
    %v831 = vshrl.u32 %v688, 16
    %v833 = vrot.slane %v831, 7
    %v834 = vshll.u32 %v688, 16
    %v836 = vor.u32 %v833, %v834
    %v837 = vsel %vm695, %v829, %v836
    %v838 = vrot.slane %v833, 4
    %v840 = vshrl.u32 %v689, 16
    %v842 = vrot.slane %v840, 7
    %v843 = vshll.u32 %v689, 16
    %v845 = vor.u32 %v842, %v843
    %v846 = vsel %vm695, %v838, %v845
    %v847 = vrot.slane %v842, 4
    %v849 = vshrl.u32 %v690, 16
    %v851 = vrot.slane %v849, 7
    %v852 = vshll.u32 %v690, 16
    %v854 = vor.u32 %v851, %v852
    %v855 = vsel %vm695, %v847, %v854
    %v856 = vrot.slane %v851, 4
    %v858 = vshrl.u32 %v691, 16
    %v860 = vrot.slane %v858, 7
    %v861 = vshll.u32 %v691, 16
    %v863 = vor.u32 %v860, %v861
    %v864 = vsel %vm695, %v856, %v863
    %v865 = vrot.slane %v860, 4
    %v867 = vshrl.u32 %v692, 16
    %v869 = vrot.slane %v867, 7
    %v870 = vshll.u32 %v692, 16
    %v872 = vor.u32 %v869, %v870
    %v873 = vsel %vm695, %v865, %v872
    %v874 = vrot.slane %v869, 4
    %v875 = vunpack.c.l.b16 %v702
    %v876 = vunpack.c.h.b16 %v702
    %v877 = vunpack.c.l.b16 0
    %v878 = vunpack.c.h.b16 0
    %vm879 = vcmp.ne.s32.totalorder %v875, %v877
    %vm880 = vcmp.ne.s32.totalorder %v876, %v878
    %vm881 = vmpackc.low %vm880, %vm879
    %v882 = vunpack.c.l.b16 %v711
    %v883 = vunpack.c.h.b16 %v711
    %v884 = vunpack.c.l.b16 0
    %v885 = vunpack.c.h.b16 0
    %vm886 = vcmp.ne.s32.totalorder %v882, %v884
    %vm887 = vcmp.ne.s32.totalorder %v883, %v885
    %vm888 = vmpackc.low %vm887, %vm886
    %v889 = vunpack.c.l.b16 %v720
    %v890 = vunpack.c.h.b16 %v720
    %v891 = vunpack.c.l.b16 0
    %v892 = vunpack.c.h.b16 0
    %vm893 = vcmp.ne.s32.totalorder %v889, %v891
    %vm894 = vcmp.ne.s32.totalorder %v890, %v892
    %vm895 = vmpackc.low %vm894, %vm893
    %v896 = vunpack.c.l.b16 %v729
    %v897 = vunpack.c.h.b16 %v729
    %v898 = vunpack.c.l.b16 0
    %v899 = vunpack.c.h.b16 0
    %vm900 = vcmp.ne.s32.totalorder %v896, %v898
    %vm901 = vcmp.ne.s32.totalorder %v897, %v899
    %vm902 = vmpackc.low %vm901, %vm900
    %v903 = vunpack.c.l.b16 %v738
    %v904 = vunpack.c.h.b16 %v738
    %v905 = vunpack.c.l.b16 0
    %v906 = vunpack.c.h.b16 0
    %vm907 = vcmp.ne.s32.totalorder %v903, %v905
    %vm908 = vcmp.ne.s32.totalorder %v904, %v906
    %vm909 = vmpackc.low %vm908, %vm907
    %v910 = vunpack.c.l.b16 %v747
    %v911 = vunpack.c.h.b16 %v747
    %v912 = vunpack.c.l.b16 0
    %v913 = vunpack.c.h.b16 0
    %vm914 = vcmp.ne.s32.totalorder %v910, %v912
    %vm915 = vcmp.ne.s32.totalorder %v911, %v913
    %vm916 = vmpackc.low %vm915, %vm914
    %v917 = vunpack.c.l.b16 %v756
    %v918 = vunpack.c.h.b16 %v756
    %v919 = vunpack.c.l.b16 0
    %v920 = vunpack.c.h.b16 0
    %vm921 = vcmp.ne.s32.totalorder %v917, %v919
    %vm922 = vcmp.ne.s32.totalorder %v918, %v920
    %vm923 = vmpackc.low %vm922, %vm921
    %v924 = vunpack.c.l.b16 %v765
    %v925 = vunpack.c.h.b16 %v765
    %v926 = vunpack.c.l.b16 0
    %v927 = vunpack.c.h.b16 0
    %vm928 = vcmp.ne.s32.totalorder %v924, %v926
    %vm929 = vcmp.ne.s32.totalorder %v925, %v927
    %vm930 = vmpackc.low %vm929, %vm928
    %v931 = vunpack.c.l.b16 %v774
    %v932 = vunpack.c.h.b16 %v774
    %v933 = vunpack.c.l.b16 0
    %v934 = vunpack.c.h.b16 0
    %vm935 = vcmp.ne.s32.totalorder %v931, %v933
    %vm936 = vcmp.ne.s32.totalorder %v932, %v934
    %vm937 = vmpackc.low %vm936, %vm935
    %v938 = vunpack.c.l.b16 %v783
    %v939 = vunpack.c.h.b16 %v783
    %v940 = vunpack.c.l.b16 0
    %v941 = vunpack.c.h.b16 0
    %vm942 = vcmp.ne.s32.totalorder %v938, %v940
    %vm943 = vcmp.ne.s32.totalorder %v939, %v941
    %vm944 = vmpackc.low %vm943, %vm942
    %v945 = vunpack.c.l.b16 %v792
    %v946 = vunpack.c.h.b16 %v792
    %v947 = vunpack.c.l.b16 0
    %v948 = vunpack.c.h.b16 0
    %vm949 = vcmp.ne.s32.totalorder %v945, %v947
    %vm950 = vcmp.ne.s32.totalorder %v946, %v948
    %vm951 = vmpackc.low %vm950, %vm949
    %v952 = vunpack.c.l.b16 %v801
    %v953 = vunpack.c.h.b16 %v801
    %v954 = vunpack.c.l.b16 0
    %v955 = vunpack.c.h.b16 0
    %vm956 = vcmp.ne.s32.totalorder %v952, %v954
    %vm957 = vcmp.ne.s32.totalorder %v953, %v955
    %vm958 = vmpackc.low %vm957, %vm956
    %v959 = vunpack.c.l.b16 %v810
    %v960 = vunpack.c.h.b16 %v810
    %v961 = vunpack.c.l.b16 0
    %v962 = vunpack.c.h.b16 0
    %vm963 = vcmp.ne.s32.totalorder %v959, %v961
    %vm964 = vcmp.ne.s32.totalorder %v960, %v962
    %vm965 = vmpackc.low %vm964, %vm963
    %v966 = vunpack.c.l.b16 %v819
    %v967 = vunpack.c.h.b16 %v819
    %v968 = vunpack.c.l.b16 0
    %v969 = vunpack.c.h.b16 0
    %vm970 = vcmp.ne.s32.totalorder %v966, %v968
    %vm971 = vcmp.ne.s32.totalorder %v967, %v969
    %vm972 = vmpackc.low %vm971, %vm970
    %v973 = vunpack.c.l.b16 %v828
    %v974 = vunpack.c.h.b16 %v828
    %v975 = vunpack.c.l.b16 0
    %v976 = vunpack.c.h.b16 0
    %vm977 = vcmp.ne.s32.totalorder %v973, %v975
    %vm978 = vcmp.ne.s32.totalorder %v974, %v976
    %vm979 = vmpackc.low %vm978, %vm977
    %v980 = vunpack.c.l.b16 %v837
    %v981 = vunpack.c.h.b16 %v837
    %v982 = vunpack.c.l.b16 0
    %v983 = vunpack.c.h.b16 0
    %vm984 = vcmp.ne.s32.totalorder %v980, %v982
    %vm985 = vcmp.ne.s32.totalorder %v981, %v983
    %vm986 = vmpackc.low %vm985, %vm984
    %v987 = vunpack.c.l.b16 %v846
    %v988 = vunpack.c.h.b16 %v846
    %v989 = vunpack.c.l.b16 0
    %v990 = vunpack.c.h.b16 0
    %vm991 = vcmp.ne.s32.totalorder %v987, %v989
    %vm992 = vcmp.ne.s32.totalorder %v988, %v990
    %vm993 = vmpackc.low %vm992, %vm991
    %v994 = vunpack.c.l.b16 %v855
    %v995 = vunpack.c.h.b16 %v855
    %v996 = vunpack.c.l.b16 0
    %v997 = vunpack.c.h.b16 0
    %vm998 = vcmp.ne.s32.totalorder %v994, %v996
    %vm999 = vcmp.ne.s32.totalorder %v995, %v997
    %vm1000 = vmpackc.low %vm999, %vm998
    %v1001 = vunpack.c.l.b16 %v864
    %v1002 = vunpack.c.h.b16 %v864
    %v1003 = vunpack.c.l.b16 0
    %v1004 = vunpack.c.h.b16 0
    %vm1005 = vcmp.ne.s32.totalorder %v1001, %v1003
    %vm1006 = vcmp.ne.s32.totalorder %v1002, %v1004
    %vm1007 = vmpackc.low %vm1006, %vm1005
    %v1008 = vunpack.c.l.b16 %v873
    %v1009 = vunpack.c.h.b16 %v873
    %v1010 = vunpack.c.l.b16 0
    %v1011 = vunpack.c.h.b16 0
    %vm1012 = vcmp.ne.s32.totalorder %v1008, %v1010
    %vm1013 = vcmp.ne.s32.totalorder %v1009, %v1011
    %vm1014 = vmpackc.low %vm1013, %vm1012
    %v1015 = vunpack.c.l.b16 %v874
    %v1016 = vunpack.c.h.b16 %v874
    %v1017 = vunpack.c.l.b16 0
    %v1018 = vunpack.c.h.b16 0
    %vm1019 = vcmp.ne.s32.totalorder %v1015, %v1017
    %vm1020 = vcmp.ne.s32.totalorder %v1016, %v1018
    %vm1021 = vmpackc.low %vm1020, %vm1019
    %v1022 = vsel %vm881, %v572, 0
    %v1023 = vsel %vm888, %v573, 0
    %v1024 = vsel %vm895, %v574, 0
    %v1025 = vsel %vm902, %v575, 0
    %v1026 = vsel %vm909, %v576, 0
    %v1027 = vsel %vm916, %v577, 0
    %v1028 = vsel %vm923, %v578, 0
    %v1029 = vsel %vm930, %v579, 0
    %v1030 = vsel %vm937, %v580, 0
    %v1031 = vsel %vm944, %v581, 0
    %v1032 = vsel %vm951, %v582, 0
    %v1033 = vsel %vm958, %v583, 0
    %v1034 = vsel %vm965, %v584, 0
    %v1035 = vsel %vm972, %v585, 0
    %v1036 = vsel %vm979, %v586, 0
    %v1037 = vsel %vm986, %v587, 0
    %v1038 = vsel %vm993, %v588, 0
    %v1039 = vsel %vm1000, %v589, 0
    %v1040 = vsel %vm1007, %v590, 0
    %v1041 = vsel %vm1014, %v591, 0
    %v1042 = vsel %vm1021, %v592, 0
    %vm1043 = vsmask.f32 3328
    %vm1044 = vsmask.f32 7440
    %vm1045 = vmor %vm1043, %vm1044
    %v1047 = vshrl.u32 %v1022, 16
    %v1049 = vrot.slane %v1047, 4
    %v1050 = vshll.u32 %v1022, 16
    %v1052 = vrot.slane %v1050, 5
    %v1053 = vor.u32 %v1049, %v1052
    %v1054 = vrot.slane %v1053, 4
    %v1056 = vshll.u32 %v1023, 16
    %v1058 = vrot.slane %v1056, 5
    %v1059 = vsel %vm1045, %v1054, %v1058
    %v1060 = vshrl.u32 %v1023, 16
    %v1062 = vrot.slane %v1060, 4
    %v1063 = vor.u32 %v1062, %v1058
    %v1064 = vrot.slane %v1063, 4
    %v1066 = vshll.u32 %v1024, 16
    %v1068 = vrot.slane %v1066, 5
    %v1069 = vsel %vm1045, %v1064, %v1068
    %v1070 = vshrl.u32 %v1024, 16
    %v1072 = vrot.slane %v1070, 4
    %v1073 = vor.u32 %v1072, %v1068
    %v1074 = vrot.slane %v1073, 4
    %v1076 = vshll.u32 %v1025, 16
    %v1078 = vrot.slane %v1076, 5
    %v1079 = vsel %vm1045, %v1074, %v1078
    %v1080 = vshrl.u32 %v1025, 16
    %v1082 = vrot.slane %v1080, 4
    %v1083 = vor.u32 %v1082, %v1078
    %v1084 = vrot.slane %v1083, 4
    %v1086 = vshll.u32 %v1026, 16
    %v1088 = vrot.slane %v1086, 5
    %v1089 = vsel %vm1045, %v1084, %v1088
    %v1090 = vshrl.u32 %v1026, 16
    %v1092 = vrot.slane %v1090, 4
    %v1093 = vor.u32 %v1092, %v1088
    %v1094 = vrot.slane %v1093, 4
    %v1096 = vshll.u32 %v1027, 16
    %v1098 = vrot.slane %v1096, 5
    %v1099 = vsel %vm1045, %v1094, %v1098
    %v1100 = vshrl.u32 %v1027, 16
    %v1102 = vrot.slane %v1100, 4
    %v1103 = vor.u32 %v1102, %v1098
    %v1104 = vrot.slane %v1103, 4
    %v1106 = vshll.u32 %v1028, 16
    %v1108 = vrot.slane %v1106, 5
    %v1109 = vsel %vm1045, %v1104, %v1108
    %v1110 = vshrl.u32 %v1028, 16
    %v1112 = vrot.slane %v1110, 4
    %v1113 = vor.u32 %v1112, %v1108
    %v1114 = vrot.slane %v1113, 4
    %v1116 = vshll.u32 %v1029, 16
    %v1118 = vrot.slane %v1116, 5
    %v1119 = vsel %vm1045, %v1114, %v1118
    %v1120 = vshrl.u32 %v1029, 16
    %v1122 = vrot.slane %v1120, 4
    %v1123 = vor.u32 %v1122, %v1118
    %v1124 = vrot.slane %v1123, 4
    %v1126 = vshll.u32 %v1030, 16
    %v1128 = vrot.slane %v1126, 5
    %v1129 = vsel %vm1045, %v1124, %v1128
    %v1130 = vshrl.u32 %v1030, 16
    %v1132 = vrot.slane %v1130, 4
    %v1133 = vor.u32 %v1132, %v1128
    %v1134 = vrot.slane %v1133, 4
    %v1136 = vshll.u32 %v1031, 16
    %v1138 = vrot.slane %v1136, 5
    %v1139 = vsel %vm1045, %v1134, %v1138
    %v1140 = vshrl.u32 %v1031, 16
    %v1142 = vrot.slane %v1140, 4
    %v1143 = vor.u32 %v1142, %v1138
    %v1144 = vrot.slane %v1143, 4
    %v1146 = vshll.u32 %v1032, 16
    %v1148 = vrot.slane %v1146, 5
    %v1149 = vsel %vm1045, %v1144, %v1148
    %v1150 = vshrl.u32 %v1032, 16
    %v1152 = vrot.slane %v1150, 4
    %v1153 = vor.u32 %v1152, %v1148
    %v1154 = vrot.slane %v1153, 4
    %v1156 = vshll.u32 %v1033, 16
    %v1158 = vrot.slane %v1156, 5
    %v1159 = vsel %vm1045, %v1154, %v1158
    %v1160 = vshrl.u32 %v1033, 16
    %v1162 = vrot.slane %v1160, 4
    %v1163 = vor.u32 %v1162, %v1158
    %v1164 = vrot.slane %v1163, 4
    %v1166 = vshll.u32 %v1034, 16
    %v1168 = vrot.slane %v1166, 5
    %v1169 = vsel %vm1045, %v1164, %v1168
    %v1170 = vshrl.u32 %v1034, 16
    %v1172 = vrot.slane %v1170, 4
    %v1173 = vor.u32 %v1172, %v1168
    %v1174 = vrot.slane %v1173, 4
    %v1176 = vshll.u32 %v1035, 16
    %v1178 = vrot.slane %v1176, 5
    %v1179 = vsel %vm1045, %v1174, %v1178
    %v1180 = vshrl.u32 %v1035, 16
    %v1182 = vrot.slane %v1180, 4
    %v1183 = vor.u32 %v1182, %v1178
    %v1184 = vrot.slane %v1183, 4
    %v1186 = vshll.u32 %v1036, 16
    %v1188 = vrot.slane %v1186, 5
    %v1189 = vsel %vm1045, %v1184, %v1188
    %v1190 = vshrl.u32 %v1036, 16
    %v1192 = vrot.slane %v1190, 4
    %v1193 = vor.u32 %v1192, %v1188
    %v1194 = vrot.slane %v1193, 4
    %v1196 = vshll.u32 %v1037, 16
    %v1198 = vrot.slane %v1196, 5
    %v1199 = vsel %vm1045, %v1194, %v1198
    %v1200 = vshrl.u32 %v1037, 16
    %v1202 = vrot.slane %v1200, 4
    %v1203 = vor.u32 %v1202, %v1198
    %v1204 = vrot.slane %v1203, 4
    %v1206 = vshll.u32 %v1038, 16
    %v1208 = vrot.slane %v1206, 5
    %v1209 = vsel %vm1045, %v1204, %v1208
    %v1210 = vshrl.u32 %v1038, 16
    %v1212 = vrot.slane %v1210, 4
    %v1213 = vor.u32 %v1212, %v1208
    %v1214 = vrot.slane %v1213, 4
    %v1216 = vshll.u32 %v1039, 16
    %v1218 = vrot.slane %v1216, 5
    %v1219 = vsel %vm1045, %v1214, %v1218
    %v1220 = vshrl.u32 %v1039, 16
    %v1222 = vrot.slane %v1220, 4
    %v1223 = vor.u32 %v1222, %v1218
    %v1224 = vrot.slane %v1223, 4
    %v1226 = vshll.u32 %v1040, 16
    %v1228 = vrot.slane %v1226, 5
    %v1229 = vsel %vm1045, %v1224, %v1228
    %v1230 = vshrl.u32 %v1040, 16
    %v1232 = vrot.slane %v1230, 4
    %v1233 = vor.u32 %v1232, %v1228
    %v1234 = vrot.slane %v1233, 4
    %v1236 = vshll.u32 %v1041, 16
    %v1238 = vrot.slane %v1236, 5
    %v1239 = vsel %vm1045, %v1234, %v1238
    %v1240 = vshrl.u32 %v1041, 16
    %v1242 = vrot.slane %v1240, 4
    %v1243 = vor.u32 %v1242, %v1238
    %v1244 = vrot.slane %v1243, 4
    %v1246 = vshll.u32 %v1042, 16
    %v1248 = vrot.slane %v1246, 5
    %v1249 = vsel %vm1045, %v1244, %v1248
    %1270 = vst.msk [vmem:[#allocation4 + $0x4] sm:$0xf] %vm527, %v1059
    %1271 = vst.msk [vmem:[#allocation4 + $0x8] sm:$0xf] %vm527, %v1069
    %1272 = vst.msk [vmem:[#allocation4 + $0xc] sm:$0xf] %vm527, %v1079
    %1273 = vst.msk [vmem:[#allocation4 + $0x10] sm:$0xf] %vm527, %v1089
    %1274 = vst.msk [vmem:[#allocation4 + $0x14] sm:$0xf] %vm527, %v1099
    %1275 = vst.msk [vmem:[#allocation4 + $0x18] sm:$0xf] %vm527, %v1109
    %1276 = vst.msk [vmem:[#allocation4 + $0x1c] sm:$0xf] %vm527, %v1119
    %1277 = vst.msk [vmem:[#allocation4 + $0x20] sm:$0xf] %vm527, %v1129
    %1278 = vst.msk [vmem:[#allocation4 + $0x24] sm:$0xf] %vm527, %v1139
    %1279 = vst.msk [vmem:[#allocation4 + $0x28] sm:$0xf] %vm527, %v1149
    %1280 = vst.msk [vmem:[#allocation4 + $0x2c] sm:$0xf] %vm527, %v1159
    %1281 = vst.msk [vmem:[#allocation4 + $0x30] sm:$0xf] %vm527, %v1169
    %1282 = vst.msk [vmem:[#allocation4 + $0x34] sm:$0xf] %vm527, %v1179
    %1283 = vst.msk [vmem:[#allocation4 + $0x38] sm:$0xf] %vm527, %v1189
    %1284 = vst.msk [vmem:[#allocation4 + $0x3c] sm:$0xf] %vm527, %v1199
    %1285 = vst.msk [vmem:[#allocation4 + $0x40] sm:$0xf] %vm527, %v1209
    %1286 = vst.msk [vmem:[#allocation4 + $0x44] sm:$0xf] %vm527, %v1219
    %1287 = vst.msk [vmem:[#allocation4 + $0x48] sm:$0xf] %vm527, %v1229
    %1288 = vst.msk [vmem:[#allocation4 + $0x4c] sm:$0xf] %vm527, %v1239
    %1289 = vst.msk [vmem:[#allocation4 + $0x50] sm:$0xf] %vm527, %v1249
    %v1290 = vld [vmem:[#allocation2] sm:$0x8]
    %v1291 = vld [vmem:[#allocation2 + $0x4] sm:$0xf]
    %v1292 = vld [vmem:[#allocation2 + $0x8] sm:$0xf]
    %v1293 = vld [vmem:[#allocation2 + $0xc] sm:$0xf]
    %v1294 = vld [vmem:[#allocation2 + $0x10] sm:$0xf]
    %v1295 = vld [vmem:[#allocation2 + $0x14] sm:$0xf]
    %v1296 = vld [vmem:[#allocation2 + $0x18] sm:$0xf]
    %v1297 = vld [vmem:[#allocation2 + $0x1c] sm:$0xf]
    %v1298 = vld [vmem:[#allocation2 + $0x20] sm:$0xf]
    %v1299 = vld [vmem:[#allocation2 + $0x24] sm:$0xf]
    %v1300 = vld [vmem:[#allocation2 + $0x28] sm:$0xf]
    %v1301 = vld [vmem:[#allocation2 + $0x2c] sm:$0xf]
    %v1302 = vld [vmem:[#allocation2 + $0x30] sm:$0xf]
    %v1303 = vld [vmem:[#allocation2 + $0x34] sm:$0xf]
    %v1304 = vld [vmem:[#allocation2 + $0x38] sm:$0xf]
    %v1305 = vld [vmem:[#allocation2 + $0x3c] sm:$0xf]
    %v1306 = vld [vmem:[#allocation2 + $0x40] sm:$0xf]
    %v1307 = vld [vmem:[#allocation2 + $0x44] sm:$0xf]
    %v1308 = vld [vmem:[#allocation2 + $0x48] sm:$0xf]
    %v1309 = vld [vmem:[#allocation2 + $0x4c] sm:$0xf]
    %v1310 = vld [vmem:[#allocation2 + $0x50] sm:$0xf]
    %vm1311 = vcmp.gt.s32.totalorder %v281, 0
    %vm1312 = vcmp.gt.s32.totalorder %v282, 0
    %vm1313 = vcmp.gt.s32.totalorder %v283, 0
    %vm1314 = vcmp.gt.s32.totalorder %v284, 0
    %vm1315 = vcmp.gt.s32.totalorder %v285, 0
    %vm1316 = vcmp.gt.s32.totalorder %v286, 0
    %vm1317 = vcmp.gt.s32.totalorder %v287, 0
    %vm1318 = vcmp.gt.s32.totalorder %v288, 0
    %vm1319 = vcmp.gt.s32.totalorder %v289, 0
    %vm1320 = vcmp.gt.s32.totalorder %v290, 0
    %vm1321 = vcmp.gt.s32.totalorder %v291, 0
    %vm1322 = vcmp.gt.s32.totalorder %v292, 0
    %vm1323 = vcmp.gt.s32.totalorder %v293, 0
    %vm1324 = vcmp.gt.s32.totalorder %v294, 0
    %vm1325 = vcmp.gt.s32.totalorder %v295, 0
    %vm1326 = vcmp.gt.s32.totalorder %v296, 0
    %vm1327 = vcmp.gt.s32.totalorder %v297, 0
    %vm1328 = vcmp.gt.s32.totalorder %v298, 0
    %vm1329 = vcmp.gt.s32.totalorder %v299, 0
    %vm1330 = vcmp.gt.s32.totalorder %v300, 0
    %v1331 = vsel %vm1311, 1, 0
    %v1332 = vsel %vm1312, 1, 0
    %v1333 = vsel %vm1313, 1, 0
    %v1334 = vsel %vm1314, 1, 0
    %v1335 = vsel %vm1315, 1, 0
    %v1336 = vsel %vm1316, 1, 0
    %v1337 = vsel %vm1317, 1, 0
    %v1338 = vsel %vm1318, 1, 0
    %v1339 = vsel %vm1319, 1, 0
    %v1340 = vsel %vm1320, 1, 0
    %v1341 = vsel %vm1321, 1, 0
    %v1342 = vsel %vm1322, 1, 0
    %v1343 = vsel %vm1323, 1, 0
    %v1344 = vsel %vm1324, 1, 0
    %v1345 = vsel %vm1325, 1, 0
    %v1346 = vsel %vm1326, 1, 0
    %v1347 = vsel %vm1327, 1, 0
    %v1348 = vsel %vm1328, 1, 0
    %v1349 = vsel %vm1329, 1, 0
    %v1350 = vsel %vm1330, 1, 0
    %vm1351 = vcmp.eq.s32.totalorder %v1331, 1
    %vm1352 = vcmp.eq.s32.totalorder %v1332, 1
    %vm1353 = vcmp.eq.s32.totalorder %v1333, 1
    %vm1354 = vcmp.eq.s32.totalorder %v1334, 1
    %vm1355 = vcmp.eq.s32.totalorder %v1335, 1
    %vm1356 = vcmp.eq.s32.totalorder %v1336, 1
    %vm1357 = vcmp.eq.s32.totalorder %v1337, 1
    %vm1358 = vcmp.eq.s32.totalorder %v1338, 1
    %vm1359 = vcmp.eq.s32.totalorder %v1339, 1
    %vm1360 = vcmp.eq.s32.totalorder %v1340, 1
    %vm1361 = vcmp.eq.s32.totalorder %v1341, 1
    %vm1362 = vcmp.eq.s32.totalorder %v1342, 1
    %vm1363 = vcmp.eq.s32.totalorder %v1343, 1
    %vm1364 = vcmp.eq.s32.totalorder %v1344, 1
    %vm1365 = vcmp.eq.s32.totalorder %v1345, 1
    %vm1366 = vcmp.eq.s32.totalorder %v1346, 1
    %vm1367 = vcmp.eq.s32.totalorder %v1347, 1
    %vm1368 = vcmp.eq.s32.totalorder %v1348, 1
    %vm1369 = vcmp.eq.s32.totalorder %v1349, 1
    %vm1370 = vcmp.eq.s32.totalorder %v1350, 1
    %vm1371 = vmpackc.low %vm1351, %vm1351
    %vm1372 = vmpackc.low %vm1352, %vm1352
    %vm1373 = vmpackc.low %vm1353, %vm1353
    %vm1374 = vmpackc.low %vm1354, %vm1354
    %vm1375 = vmpackc.low %vm1355, %vm1355
    %vm1376 = vmpackc.low %vm1356, %vm1356
    %vm1377 = vmpackc.low %vm1357, %vm1357
    %vm1378 = vmpackc.low %vm1358, %vm1358
    %vm1379 = vmpackc.low %vm1359, %vm1359
    %vm1380 = vmpackc.low %vm1360, %vm1360
    %vm1381 = vmpackc.low %vm1361, %vm1361
    %vm1382 = vmpackc.low %vm1362, %vm1362
    %vm1383 = vmpackc.low %vm1363, %vm1363
    %vm1384 = vmpackc.low %vm1364, %vm1364
    %vm1385 = vmpackc.low %vm1365, %vm1365
    %vm1386 = vmpackc.low %vm1366, %vm1366
    %vm1387 = vmpackc.low %vm1367, %vm1367
    %vm1388 = vmpackc.low %vm1368, %vm1368
    %vm1389 = vmpackc.low %vm1369, %vm1369
    %vm1390 = vmpackc.low %vm1370, %vm1370
    %v1391 = vsel %vm1371, 65537, 0
    %v1392 = vsel %vm1372, 65537, 0
    %v1393 = vsel %vm1373, 65537, 0
    %v1394 = vsel %vm1374, 65537, 0
    %v1395 = vsel %vm1375, 65537, 0
    %v1396 = vsel %vm1376, 65537, 0
    %v1397 = vsel %vm1377, 65537, 0
    %v1398 = vsel %vm1378, 65537, 0
    %v1399 = vsel %vm1379, 65537, 0
    %v1400 = vsel %vm1380, 65537, 0
    %v1401 = vsel %vm1381, 65537, 0
    %v1402 = vsel %vm1382, 65537, 0
    %v1403 = vsel %vm1383, 65537, 0
    %v1404 = vsel %vm1384, 65537, 0
    %v1405 = vsel %vm1385, 65537, 0
    %v1406 = vsel %vm1386, 65537, 0
    %v1407 = vsel %vm1387, 65537, 0
    %v1408 = vsel %vm1388, 65537, 0
    %v1409 = vsel %vm1389, 65537, 0
    %v1410 = vsel %vm1390, 65537, 0
    %v1412 = vshll.u32 %v1391, 16
    %v1414 = vrot.slane %v1412, 5
    %v1415 = vshrl.u32 %v1391, 16
    %v1417 = vrot.slane %v1415, 4
    %v1418 = vor.u32 %v1417, %v1414
    %v1419 = vrot.slane %v1418, 4
    %v1421 = vshll.u32 %v1392, 16
    %v1423 = vrot.slane %v1421, 5
    %v1424 = vsel %vm1045, %v1419, %v1423
    %v1425 = vshrl.u32 %v1392, 16
    %v1427 = vrot.slane %v1425, 4
    %v1428 = vor.u32 %v1427, %v1423
    %v1429 = vrot.slane %v1428, 4
    %v1431 = vshll.u32 %v1393, 16
    %v1433 = vrot.slane %v1431, 5
    %v1434 = vsel %vm1045, %v1429, %v1433
    %v1435 = vshrl.u32 %v1393, 16
    %v1437 = vrot.slane %v1435, 4
    %v1438 = vor.u32 %v1437, %v1433
    %v1439 = vrot.slane %v1438, 4
    %v1441 = vshll.u32 %v1394, 16
    %v1443 = vrot.slane %v1441, 5
    %v1444 = vsel %vm1045, %v1439, %v1443
    %v1445 = vshrl.u32 %v1394, 16
    %v1447 = vrot.slane %v1445, 4
    %v1448 = vor.u32 %v1447, %v1443
    %v1449 = vrot.slane %v1448, 4
    %v1451 = vshll.u32 %v1395, 16
    %v1453 = vrot.slane %v1451, 5
    %v1454 = vsel %vm1045, %v1449, %v1453
    %v1455 = vshrl.u32 %v1395, 16
    %v1457 = vrot.slane %v1455, 4
    %v1458 = vor.u32 %v1457, %v1453
    %v1459 = vrot.slane %v1458, 4
    %v1461 = vshll.u32 %v1396, 16
    %v1463 = vrot.slane %v1461, 5
    %v1464 = vsel %vm1045, %v1459, %v1463
    %v1465 = vshrl.u32 %v1396, 16
    %v1467 = vrot.slane %v1465, 4
    %v1468 = vor.u32 %v1467, %v1463
    %v1469 = vrot.slane %v1468, 4
    %v1471 = vshll.u32 %v1397, 16
    %v1473 = vrot.slane %v1471, 5
    %v1474 = vsel %vm1045, %v1469, %v1473
    %v1475 = vshrl.u32 %v1397, 16
    %v1477 = vrot.slane %v1475, 4
    %v1478 = vor.u32 %v1477, %v1473
    %v1479 = vrot.slane %v1478, 4
    %v1481 = vshll.u32 %v1398, 16
    %v1483 = vrot.slane %v1481, 5
    %v1484 = vsel %vm1045, %v1479, %v1483
    %v1485 = vshrl.u32 %v1398, 16
    %v1487 = vrot.slane %v1485, 4
    %v1488 = vor.u32 %v1487, %v1483
    %v1489 = vrot.slane %v1488, 4
    %v1491 = vshll.u32 %v1399, 16
    %v1493 = vrot.slane %v1491, 5
    %v1494 = vsel %vm1045, %v1489, %v1493
    %v1495 = vshrl.u32 %v1399, 16
    %v1497 = vrot.slane %v1495, 4
    %v1498 = vor.u32 %v1497, %v1493
    %v1499 = vrot.slane %v1498, 4
    %v1501 = vshll.u32 %v1400, 16
    %v1503 = vrot.slane %v1501, 5
    %v1504 = vsel %vm1045, %v1499, %v1503
    %v1505 = vshrl.u32 %v1400, 16
    %v1507 = vrot.slane %v1505, 4
    %v1508 = vor.u32 %v1507, %v1503
    %v1509 = vrot.slane %v1508, 4
    %v1511 = vshll.u32 %v1401, 16
    %v1513 = vrot.slane %v1511, 5
    %v1514 = vsel %vm1045, %v1509, %v1513
    %v1515 = vshrl.u32 %v1401, 16
    %v1517 = vrot.slane %v1515, 4
    %v1518 = vor.u32 %v1517, %v1513
    %v1519 = vrot.slane %v1518, 4
    %v1521 = vshll.u32 %v1402, 16
    %v1523 = vrot.slane %v1521, 5
    %v1524 = vsel %vm1045, %v1519, %v1523
    %v1525 = vshrl.u32 %v1402, 16
    %v1527 = vrot.slane %v1525, 4
    %v1528 = vor.u32 %v1527, %v1523
    %v1529 = vrot.slane %v1528, 4
    %v1531 = vshll.u32 %v1403, 16
    %v1533 = vrot.slane %v1531, 5
    %v1534 = vsel %vm1045, %v1529, %v1533
    %v1535 = vshrl.u32 %v1403, 16
    %v1537 = vrot.slane %v1535, 4
    %v1538 = vor.u32 %v1537, %v1533
    %v1539 = vrot.slane %v1538, 4
    %v1541 = vshll.u32 %v1404, 16
    %v1543 = vrot.slane %v1541, 5
    %v1544 = vsel %vm1045, %v1539, %v1543
    %v1545 = vshrl.u32 %v1404, 16
    %v1547 = vrot.slane %v1545, 4
    %v1548 = vor.u32 %v1547, %v1543
    %v1549 = vrot.slane %v1548, 4
    %v1551 = vshll.u32 %v1405, 16
    %v1553 = vrot.slane %v1551, 5
    %v1554 = vsel %vm1045, %v1549, %v1553
    %v1555 = vshrl.u32 %v1405, 16
    %v1557 = vrot.slane %v1555, 4
    %v1558 = vor.u32 %v1557, %v1553
    %v1559 = vrot.slane %v1558, 4
    %v1561 = vshll.u32 %v1406, 16
    %v1563 = vrot.slane %v1561, 5
    %v1564 = vsel %vm1045, %v1559, %v1563
    %v1565 = vshrl.u32 %v1406, 16
    %v1567 = vrot.slane %v1565, 4
    %v1568 = vor.u32 %v1567, %v1563
    %v1569 = vrot.slane %v1568, 4
    %v1571 = vshll.u32 %v1407, 16
    %v1573 = vrot.slane %v1571, 5
    %v1574 = vsel %vm1045, %v1569, %v1573
    %v1575 = vshrl.u32 %v1407, 16
    %v1577 = vrot.slane %v1575, 4
    %v1578 = vor.u32 %v1577, %v1573
    %v1579 = vrot.slane %v1578, 4
    %v1581 = vshll.u32 %v1408, 16
    %v1583 = vrot.slane %v1581, 5
    %v1584 = vsel %vm1045, %v1579, %v1583
    %v1585 = vshrl.u32 %v1408, 16
    %v1587 = vrot.slane %v1585, 4
    %v1588 = vor.u32 %v1587, %v1583
    %v1589 = vrot.slane %v1588, 4
    %v1591 = vshll.u32 %v1409, 16
    %v1593 = vrot.slane %v1591, 5
    %v1594 = vsel %vm1045, %v1589, %v1593
    %v1595 = vshrl.u32 %v1409, 16
    %v1597 = vrot.slane %v1595, 4
    %v1598 = vor.u32 %v1597, %v1593
    %v1599 = vrot.slane %v1598, 4
    %v1601 = vshll.u32 %v1410, 16
    %v1603 = vrot.slane %v1601, 5
    %v1604 = vsel %vm1045, %v1599, %v1603
    %v1605 = vshrl.u32 %v1410, 16
    %v1607 = vrot.slane %v1605, 4
    %v1608 = vor.u32 %v1607, %v1603
    %v1609 = vrot.slane %v1608, 4
    %v1610 = vunpack.c.l.b16 %v1414
    %v1611 = vunpack.c.h.b16 %v1414
    %v1612 = vunpack.c.l.b16 0
    %v1613 = vunpack.c.h.b16 0
    %vm1614 = vcmp.ne.s32.totalorder %v1610, %v1612
    %vm1615 = vcmp.ne.s32.totalorder %v1611, %v1613
    %vm1616 = vmpackc.low %vm1615, %vm1614
    %v1617 = vunpack.c.l.b16 %v1424
    %v1618 = vunpack.c.h.b16 %v1424
    %v1619 = vunpack.c.l.b16 0
    %v1620 = vunpack.c.h.b16 0
    %vm1621 = vcmp.ne.s32.totalorder %v1617, %v1619
    %vm1622 = vcmp.ne.s32.totalorder %v1618, %v1620
    %vm1623 = vmpackc.low %vm1622, %vm1621
    %v1624 = vunpack.c.l.b16 %v1434
    %v1625 = vunpack.c.h.b16 %v1434
    %v1626 = vunpack.c.l.b16 0
    %v1627 = vunpack.c.h.b16 0
    %vm1628 = vcmp.ne.s32.totalorder %v1624, %v1626
    %vm1629 = vcmp.ne.s32.totalorder %v1625, %v1627
    %vm1630 = vmpackc.low %vm1629, %vm1628
    %v1631 = vunpack.c.l.b16 %v1444
    %v1632 = vunpack.c.h.b16 %v1444
    %v1633 = vunpack.c.l.b16 0
    %v1634 = vunpack.c.h.b16 0
    %vm1635 = vcmp.ne.s32.totalorder %v1631, %v1633
    %vm1636 = vcmp.ne.s32.totalorder %v1632, %v1634
    %vm1637 = vmpackc.low %vm1636, %vm1635
    %v1638 = vunpack.c.l.b16 %v1454
    %v1639 = vunpack.c.h.b16 %v1454
    %v1640 = vunpack.c.l.b16 0
    %v1641 = vunpack.c.h.b16 0
    %vm1642 = vcmp.ne.s32.totalorder %v1638, %v1640
    %vm1643 = vcmp.ne.s32.totalorder %v1639, %v1641
    %vm1644 = vmpackc.low %vm1643, %vm1642
    %v1645 = vunpack.c.l.b16 %v1464
    %v1646 = vunpack.c.h.b16 %v1464
    %v1647 = vunpack.c.l.b16 0
    %v1648 = vunpack.c.h.b16 0
    %vm1649 = vcmp.ne.s32.totalorder %v1645, %v1647
    %vm1650 = vcmp.ne.s32.totalorder %v1646, %v1648
    %vm1651 = vmpackc.low %vm1650, %vm1649
    %v1652 = vunpack.c.l.b16 %v1474
    %v1653 = vunpack.c.h.b16 %v1474
    %v1654 = vunpack.c.l.b16 0
    %v1655 = vunpack.c.h.b16 0
    %vm1656 = vcmp.ne.s32.totalorder %v1652, %v1654
    %vm1657 = vcmp.ne.s32.totalorder %v1653, %v1655
    %vm1658 = vmpackc.low %vm1657, %vm1656
    %v1659 = vunpack.c.l.b16 %v1484
    %v1660 = vunpack.c.h.b16 %v1484
    %v1661 = vunpack.c.l.b16 0
    %v1662 = vunpack.c.h.b16 0
    %vm1663 = vcmp.ne.s32.totalorder %v1659, %v1661
    %vm1664 = vcmp.ne.s32.totalorder %v1660, %v1662
    %vm1665 = vmpackc.low %vm1664, %vm1663
    %v1666 = vunpack.c.l.b16 %v1494
    %v1667 = vunpack.c.h.b16 %v1494
    %v1668 = vunpack.c.l.b16 0
    %v1669 = vunpack.c.h.b16 0
    %vm1670 = vcmp.ne.s32.totalorder %v1666, %v1668
    %vm1671 = vcmp.ne.s32.totalorder %v1667, %v1669
    %vm1672 = vmpackc.low %vm1671, %vm1670
    %v1673 = vunpack.c.l.b16 %v1504
    %v1674 = vunpack.c.h.b16 %v1504
    %v1675 = vunpack.c.l.b16 0
    %v1676 = vunpack.c.h.b16 0
    %vm1677 = vcmp.ne.s32.totalorder %v1673, %v1675
    %vm1678 = vcmp.ne.s32.totalorder %v1674, %v1676
    %vm1679 = vmpackc.low %vm1678, %vm1677
    %v1680 = vunpack.c.l.b16 %v1514
    %v1681 = vunpack.c.h.b16 %v1514
    %v1682 = vunpack.c.l.b16 0
    %v1683 = vunpack.c.h.b16 0
    %vm1684 = vcmp.ne.s32.totalorder %v1680, %v1682
    %vm1685 = vcmp.ne.s32.totalorder %v1681, %v1683
    %vm1686 = vmpackc.low %vm1685, %vm1684
    %v1687 = vunpack.c.l.b16 %v1524
    %v1688 = vunpack.c.h.b16 %v1524
    %v1689 = vunpack.c.l.b16 0
    %v1690 = vunpack.c.h.b16 0
    %vm1691 = vcmp.ne.s32.totalorder %v1687, %v1689
    %vm1692 = vcmp.ne.s32.totalorder %v1688, %v1690
    %vm1693 = vmpackc.low %vm1692, %vm1691
    %v1694 = vunpack.c.l.b16 %v1534
    %v1695 = vunpack.c.h.b16 %v1534
    %v1696 = vunpack.c.l.b16 0
    %v1697 = vunpack.c.h.b16 0
    %vm1698 = vcmp.ne.s32.totalorder %v1694, %v1696
    %vm1699 = vcmp.ne.s32.totalorder %v1695, %v1697
    %vm1700 = vmpackc.low %vm1699, %vm1698
    %v1701 = vunpack.c.l.b16 %v1544
    %v1702 = vunpack.c.h.b16 %v1544
    %v1703 = vunpack.c.l.b16 0
    %v1704 = vunpack.c.h.b16 0
    %vm1705 = vcmp.ne.s32.totalorder %v1701, %v1703
    %vm1706 = vcmp.ne.s32.totalorder %v1702, %v1704
    %vm1707 = vmpackc.low %vm1706, %vm1705
    %v1708 = vunpack.c.l.b16 %v1554
    %v1709 = vunpack.c.h.b16 %v1554
    %v1710 = vunpack.c.l.b16 0
    %v1711 = vunpack.c.h.b16 0
    %vm1712 = vcmp.ne.s32.totalorder %v1708, %v1710
    %vm1713 = vcmp.ne.s32.totalorder %v1709, %v1711
    %vm1714 = vmpackc.low %vm1713, %vm1712
    %v1715 = vunpack.c.l.b16 %v1564
    %v1716 = vunpack.c.h.b16 %v1564
    %v1717 = vunpack.c.l.b16 0
    %v1718 = vunpack.c.h.b16 0
    %vm1719 = vcmp.ne.s32.totalorder %v1715, %v1717
    %vm1720 = vcmp.ne.s32.totalorder %v1716, %v1718
    %vm1721 = vmpackc.low %vm1720, %vm1719
    %v1722 = vunpack.c.l.b16 %v1574
    %v1723 = vunpack.c.h.b16 %v1574
    %v1724 = vunpack.c.l.b16 0
    %v1725 = vunpack.c.h.b16 0
    %vm1726 = vcmp.ne.s32.totalorder %v1722, %v1724
    %vm1727 = vcmp.ne.s32.totalorder %v1723, %v1725
    %vm1728 = vmpackc.low %vm1727, %vm1726
    %v1729 = vunpack.c.l.b16 %v1584
    %v1730 = vunpack.c.h.b16 %v1584
    %v1731 = vunpack.c.l.b16 0
    %v1732 = vunpack.c.h.b16 0
    %vm1733 = vcmp.ne.s32.totalorder %v1729, %v1731
    %vm1734 = vcmp.ne.s32.totalorder %v1730, %v1732
    %vm1735 = vmpackc.low %vm1734, %vm1733
    %v1736 = vunpack.c.l.b16 %v1594
    %v1737 = vunpack.c.h.b16 %v1594
    %v1738 = vunpack.c.l.b16 0
    %v1739 = vunpack.c.h.b16 0
    %vm1740 = vcmp.ne.s32.totalorder %v1736, %v1738
    %vm1741 = vcmp.ne.s32.totalorder %v1737, %v1739
    %vm1742 = vmpackc.low %vm1741, %vm1740
    %v1743 = vunpack.c.l.b16 %v1604
    %v1744 = vunpack.c.h.b16 %v1604
    %v1745 = vunpack.c.l.b16 0
    %v1746 = vunpack.c.h.b16 0
    %vm1747 = vcmp.ne.s32.totalorder %v1743, %v1745
    %vm1748 = vcmp.ne.s32.totalorder %v1744, %v1746
    %vm1749 = vmpackc.low %vm1748, %vm1747
    %v1750 = vunpack.c.l.b16 %v1609
    %v1751 = vunpack.c.h.b16 %v1609
    %v1752 = vunpack.c.l.b16 0
    %v1753 = vunpack.c.h.b16 0
    %vm1754 = vcmp.ne.s32.totalorder %v1750, %v1752
    %vm1755 = vcmp.ne.s32.totalorder %v1751, %v1753
    %vm1756 = vmpackc.low %vm1755, %vm1754
    %v1757 = vsel %vm1616, %v1290, 0
    %v1758 = vsel %vm1623, %v1291, 0
    %v1759 = vsel %vm1630, %v1292, 0
    %v1760 = vsel %vm1637, %v1293, 0
    %v1761 = vsel %vm1644, %v1294, 0
    %v1762 = vsel %vm1651, %v1295, 0
    %v1763 = vsel %vm1658, %v1296, 0
    %v1764 = vsel %vm1665, %v1297, 0
    %v1765 = vsel %vm1672, %v1298, 0
    %v1766 = vsel %vm1679, %v1299, 0
    %v1767 = vsel %vm1686, %v1300, 0
    %v1768 = vsel %vm1693, %v1301, 0
    %v1769 = vsel %vm1700, %v1302, 0
    %v1770 = vsel %vm1707, %v1303, 0
    %v1771 = vsel %vm1714, %v1304, 0
    %v1772 = vsel %vm1721, %v1305, 0
    %v1773 = vsel %vm1728, %v1306, 0
    %v1774 = vsel %vm1735, %v1307, 0
    %v1775 = vsel %vm1742, %v1308, 0
    %v1776 = vsel %vm1749, %v1309, 0
    %v1777 = vsel %vm1756, %v1310, 0
    %v1779 = vshrl.u32 %v1757, 16
    %v1781 = vrot.slane %v1779, 7
    %v1782 = vrot.slane %v1781, 4
    %v1784 = vshrl.u32 %v1758, 16
    %v1786 = vrot.slane %v1784, 7
    %v1787 = vshll.u32 %v1758, 16
    %v1789 = vor.u32 %v1786, %v1787
    %v1790 = vsel %vm695, %v1782, %v1789
    %v1791 = vrot.slane %v1786, 4
    %v1793 = vshrl.u32 %v1759, 16
    %v1795 = vrot.slane %v1793, 7
    %v1796 = vshll.u32 %v1759, 16
    %v1798 = vor.u32 %v1795, %v1796
    %v1799 = vsel %vm695, %v1791, %v1798
    %v1800 = vrot.slane %v1795, 4
    %v1802 = vshrl.u32 %v1760, 16
    %v1804 = vrot.slane %v1802, 7
    %v1805 = vshll.u32 %v1760, 16
    %v1807 = vor.u32 %v1804, %v1805
    %v1808 = vsel %vm695, %v1800, %v1807
    %v1809 = vrot.slane %v1804, 4
    %v1811 = vshrl.u32 %v1761, 16
    %v1813 = vrot.slane %v1811, 7
    %v1814 = vshll.u32 %v1761, 16
    %v1816 = vor.u32 %v1813, %v1814
    %v1817 = vsel %vm695, %v1809, %v1816
    %v1818 = vrot.slane %v1813, 4
    %v1820 = vshrl.u32 %v1762, 16
    %v1822 = vrot.slane %v1820, 7
    %v1823 = vshll.u32 %v1762, 16
    %v1825 = vor.u32 %v1822, %v1823
    %v1826 = vsel %vm695, %v1818, %v1825
    %v1827 = vrot.slane %v1822, 4
    %v1829 = vshrl.u32 %v1763, 16
    %v1831 = vrot.slane %v1829, 7
    %v1832 = vshll.u32 %v1763, 16
    %v1834 = vor.u32 %v1831, %v1832
    %v1835 = vsel %vm695, %v1827, %v1834
    %v1836 = vrot.slane %v1831, 4
    %v1838 = vshrl.u32 %v1764, 16
    %v1840 = vrot.slane %v1838, 7
    %v1841 = vshll.u32 %v1764, 16
    %v1843 = vor.u32 %v1840, %v1841
    %v1844 = vsel %vm695, %v1836, %v1843
    %v1845 = vrot.slane %v1840, 4
    %v1847 = vshrl.u32 %v1765, 16
    %v1849 = vrot.slane %v1847, 7
    %v1850 = vshll.u32 %v1765, 16
    %v1852 = vor.u32 %v1849, %v1850
    %v1853 = vsel %vm695, %v1845, %v1852
    %v1854 = vrot.slane %v1849, 4
    %v1856 = vshrl.u32 %v1766, 16
    %v1858 = vrot.slane %v1856, 7
    %v1859 = vshll.u32 %v1766, 16
    %v1861 = vor.u32 %v1858, %v1859
    %v1862 = vsel %vm695, %v1854, %v1861
    %v1863 = vrot.slane %v1858, 4
    %v1865 = vshrl.u32 %v1767, 16
    %v1867 = vrot.slane %v1865, 7
    %v1868 = vshll.u32 %v1767, 16
    %v1870 = vor.u32 %v1867, %v1868
    %v1871 = vsel %vm695, %v1863, %v1870
    %v1872 = vrot.slane %v1867, 4
    %v1874 = vshrl.u32 %v1768, 16
    %v1876 = vrot.slane %v1874, 7
    %v1877 = vshll.u32 %v1768, 16
    %v1879 = vor.u32 %v1876, %v1877
    %v1880 = vsel %vm695, %v1872, %v1879
    %v1881 = vrot.slane %v1876, 4
    %v1883 = vshrl.u32 %v1769, 16
    %v1885 = vrot.slane %v1883, 7
    %v1886 = vshll.u32 %v1769, 16
    %v1888 = vor.u32 %v1885, %v1886
    %v1889 = vsel %vm695, %v1881, %v1888
    %v1890 = vrot.slane %v1885, 4
    %v1892 = vshrl.u32 %v1770, 16
    %v1894 = vrot.slane %v1892, 7
    %v1895 = vshll.u32 %v1770, 16
    %v1897 = vor.u32 %v1894, %v1895
    %v1898 = vsel %vm695, %v1890, %v1897
    %v1899 = vrot.slane %v1894, 4
    %v1901 = vshrl.u32 %v1771, 16
    %v1903 = vrot.slane %v1901, 7
    %v1904 = vshll.u32 %v1771, 16
    %v1906 = vor.u32 %v1903, %v1904
    %v1907 = vsel %vm695, %v1899, %v1906
    %v1908 = vrot.slane %v1903, 4
    %v1910 = vshrl.u32 %v1772, 16
    %v1912 = vrot.slane %v1910, 7
    %v1913 = vshll.u32 %v1772, 16
    %v1915 = vor.u32 %v1912, %v1913
    %v1916 = vsel %vm695, %v1908, %v1915
    %v1917 = vrot.slane %v1912, 4
    %v1919 = vshrl.u32 %v1773, 16
    %v1921 = vrot.slane %v1919, 7
    %v1922 = vshll.u32 %v1773, 16
    %v1924 = vor.u32 %v1921, %v1922
    %v1925 = vsel %vm695, %v1917, %v1924
    %v1926 = vrot.slane %v1921, 4
    %v1928 = vshrl.u32 %v1774, 16
    %v1930 = vrot.slane %v1928, 7
    %v1931 = vshll.u32 %v1774, 16
    %v1933 = vor.u32 %v1930, %v1931
    %v1934 = vsel %vm695, %v1926, %v1933
    %v1935 = vrot.slane %v1930, 4
    %v1937 = vshrl.u32 %v1775, 16
    %v1939 = vrot.slane %v1937, 7
    %v1940 = vshll.u32 %v1775, 16
    %v1942 = vor.u32 %v1939, %v1940
    %v1943 = vsel %vm695, %v1935, %v1942
    %v1944 = vrot.slane %v1939, 4
    %v1946 = vshrl.u32 %v1776, 16
    %v1948 = vrot.slane %v1946, 7
    %v1949 = vshll.u32 %v1776, 16
    %v1951 = vor.u32 %v1948, %v1949
    %v1952 = vsel %vm695, %v1944, %v1951
    %v1953 = vrot.slane %v1948, 4
    %v1955 = vshrl.u32 %v1777, 16
    %v1957 = vrot.slane %v1955, 7
    %v1958 = vshll.u32 %v1777, 16
    %v1960 = vor.u32 %v1957, %v1958
    %v1961 = vsel %vm695, %v1953, %v1960
    %1982 = vst.msk [vmem:[#allocation5 + $0x4] sm:$0xf] %vm527, %v1790
    %1983 = vst.msk [vmem:[#allocation5 + $0x8] sm:$0xf] %vm527, %v1799
    %1984 = vst.msk [vmem:[#allocation5 + $0xc] sm:$0xf] %vm527, %v1808
    %1985 = vst.msk [vmem:[#allocation5 + $0x10] sm:$0xf] %vm527, %v1817
    %1986 = vst.msk [vmem:[#allocation5 + $0x14] sm:$0xf] %vm527, %v1826
    %1987 = vst.msk [vmem:[#allocation5 + $0x18] sm:$0xf] %vm527, %v1835
    %1988 = vst.msk [vmem:[#allocation5 + $0x1c] sm:$0xf] %vm527, %v1844
    %1989 = vst.msk [vmem:[#allocation5 + $0x20] sm:$0xf] %vm527, %v1853
    %1990 = vst.msk [vmem:[#allocation5 + $0x24] sm:$0xf] %vm527, %v1862
    %1991 = vst.msk [vmem:[#allocation5 + $0x28] sm:$0xf] %vm527, %v1871
    %1992 = vst.msk [vmem:[#allocation5 + $0x2c] sm:$0xf] %vm527, %v1880
    %1993 = vst.msk [vmem:[#allocation5 + $0x30] sm:$0xf] %vm527, %v1889
    %1994 = vst.msk [vmem:[#allocation5 + $0x34] sm:$0xf] %vm527, %v1898
    %1995 = vst.msk [vmem:[#allocation5 + $0x38] sm:$0xf] %vm527, %v1907
    %1996 = vst.msk [vmem:[#allocation5 + $0x3c] sm:$0xf] %vm527, %v1916
    %1997 = vst.msk [vmem:[#allocation5 + $0x40] sm:$0xf] %vm527, %v1925
    %1998 = vst.msk [vmem:[#allocation5 + $0x44] sm:$0xf] %vm527, %v1934
    %1999 = vst.msk [vmem:[#allocation5 + $0x48] sm:$0xf] %vm527, %v1943
    %2000 = vst.msk [vmem:[#allocation5 + $0x4c] sm:$0xf] %vm527, %v1952
    %2001 = vst.msk [vmem:[#allocation5 + $0x50] sm:$0xf] %vm527, %v1961
    %v2002 = vld [vmem:[#allocation5 + $0x4] sm:$0xf]
    %v2003 = vld [vmem:[#allocation5 + $0x8] sm:$0xf]
    %v2004 = vld [vmem:[#allocation5 + $0xc] sm:$0xf]
    %v2005 = vld [vmem:[#allocation5 + $0x10] sm:$0xf]
    %v2006 = vld [vmem:[#allocation5 + $0x14] sm:$0xf]
    %v2007 = vld [vmem:[#allocation5 + $0x18] sm:$0xf]
    %v2008 = vld [vmem:[#allocation5 + $0x1c] sm:$0xf]
    %v2009 = vld [vmem:[#allocation5 + $0x20] sm:$0xf]
    %v2010 = vld [vmem:[#allocation5 + $0x24] sm:$0xf]
    %v2011 = vld [vmem:[#allocation5 + $0x28] sm:$0xf]
    %v2012 = vld [vmem:[#allocation5 + $0x2c] sm:$0xf]
    %v2013 = vld [vmem:[#allocation5 + $0x30] sm:$0xf]
    %v2014 = vld [vmem:[#allocation5 + $0x34] sm:$0xf]
    %v2015 = vld [vmem:[#allocation5 + $0x38] sm:$0xf]
    %v2016 = vld [vmem:[#allocation5 + $0x3c] sm:$0xf]
    %v2017 = vld [vmem:[#allocation5 + $0x40] sm:$0xf]
    %v2018 = vld [vmem:[#allocation5 + $0x44] sm:$0xf]
    %v2019 = vld [vmem:[#allocation5 + $0x48] sm:$0xf]
    %v2020 = vld [vmem:[#allocation2 + $0x4] sm:$0xf]
    %v2021 = vld [vmem:[#allocation2 + $0x8] sm:$0xf]
    %v2022 = vld [vmem:[#allocation2 + $0xc] sm:$0xf]
    %v2023 = vld [vmem:[#allocation2 + $0x10] sm:$0xf]
    %v2024 = vld [vmem:[#allocation2 + $0x14] sm:$0xf]
    %v2025 = vld [vmem:[#allocation2 + $0x18] sm:$0xf]
    %v2026 = vld [vmem:[#allocation2 + $0x1c] sm:$0xf]
    %v2027 = vld [vmem:[#allocation2 + $0x20] sm:$0xf]
    %v2028 = vld [vmem:[#allocation2 + $0x24] sm:$0xf]
    %v2029 = vld [vmem:[#allocation2 + $0x28] sm:$0xf]
    %v2030 = vld [vmem:[#allocation2 + $0x2c] sm:$0xf]
    %v2031 = vld [vmem:[#allocation2 + $0x30] sm:$0xf]
    %v2032 = vld [vmem:[#allocation2 + $0x34] sm:$0xf]
    %v2033 = vld [vmem:[#allocation2 + $0x38] sm:$0xf]
    %v2034 = vld [vmem:[#allocation2 + $0x3c] sm:$0xf]
    %v2035 = vld [vmem:[#allocation2 + $0x40] sm:$0xf]
    %v2036 = vld [vmem:[#allocation2 + $0x44] sm:$0xf]
    %v2037 = vld [vmem:[#allocation2 + $0x48] sm:$0xf]
    %v2038 = vld [vmem:[#allocation4 + $0x4] sm:$0xf]
    %v2039 = vld [vmem:[#allocation4 + $0x8] sm:$0xf]
    %v2040 = vld [vmem:[#allocation4 + $0xc] sm:$0xf]
    %v2041 = vld [vmem:[#allocation4 + $0x10] sm:$0xf]
    %v2042 = vld [vmem:[#allocation4 + $0x14] sm:$0xf]
    %v2043 = vld [vmem:[#allocation4 + $0x18] sm:$0xf]
    %v2044 = vld [vmem:[#allocation4 + $0x1c] sm:$0xf]
    %v2045 = vld [vmem:[#allocation4 + $0x20] sm:$0xf]
    %v2046 = vld [vmem:[#allocation4 + $0x24] sm:$0xf]
    %v2047 = vld [vmem:[#allocation4 + $0x28] sm:$0xf]
    %v2048 = vld [vmem:[#allocation4 + $0x2c] sm:$0xf]
    %v2049 = vld [vmem:[#allocation4 + $0x30] sm:$0xf]
    %v2050 = vld [vmem:[#allocation4 + $0x34] sm:$0xf]
    %v2051 = vld [vmem:[#allocation4 + $0x38] sm:$0xf]
    %v2052 = vld [vmem:[#allocation4 + $0x3c] sm:$0xf]
    %v2053 = vld [vmem:[#allocation4 + $0x40] sm:$0xf]
    %v2054 = vld [vmem:[#allocation4 + $0x44] sm:$0xf]
    %v2055 = vld [vmem:[#allocation4 + $0x48] sm:$0xf]
    %v2056 = vld [vmem:[#allocation5 + $0x4c] sm:$0xf]
    %v2057 = vld [vmem:[#allocation2 + $0x4c] sm:$0xf]
    %v2058 = vld [vmem:[#allocation4 + $0x4c] sm:$0xf]
    %v2059 = vld [vmem:[#allocation5 + $0x50] sm:$0xf]
    %v2060 = vld [vmem:[#allocation2 + $0x50] sm:$0xf]
    %v2061 = vld [vmem:[#allocation4 + $0x50] sm:$0xf]
    %v2080 = vunpack.c.l.b16 %v2002
    %v2081 = vunpack.c.l.b16 %v2003
    %v2082 = vunpack.c.l.b16 %v2004
    %v2083 = vunpack.c.l.b16 %v2005
    %v2084 = vunpack.c.l.b16 %v2006
    %v2085 = vunpack.c.l.b16 %v2007
    %v2086 = vunpack.c.l.b16 %v2008
    %v2087 = vunpack.c.l.b16 %v2009
    %v2088 = vunpack.c.l.b16 %v2010
    %v2089 = vunpack.c.l.b16 %v2011
    %v2090 = vunpack.c.l.b16 %v2012
    %v2091 = vunpack.c.l.b16 %v2013
    %v2092 = vunpack.c.l.b16 %v2014
    %v2093 = vunpack.c.l.b16 %v2015
    %v2094 = vunpack.c.l.b16 %v2016
    %v2095 = vunpack.c.l.b16 %v2017
    %v2096 = vunpack.c.l.b16 %v2018
    %v2097 = vunpack.c.l.b16 %v2019
    %v2098 = vpack.c.b16 %v2081, %v2080
    %v2099 = vpack.c.b16 %v2083, %v2082
    %v2100 = vpack.c.b16 %v2085, %v2084
    %v2101 = vpack.c.b16 %v2087, %v2086
    %v2102 = vpack.c.b16 %v2089, %v2088
    %v2103 = vpack.c.b16 %v2091, %v2090
    %v2104 = vpack.c.b16 %v2093, %v2092
    %v2105 = vpack.c.b16 %v2095, %v2094
    %v2106 = vpack.c.b16 %v2097, %v2096
    %v2125 = vunpack.c.l.b16 %v2020
    %v2126 = vunpack.c.l.b16 %v2021
    %v2127 = vunpack.c.l.b16 %v2022
    %v2128 = vunpack.c.l.b16 %v2023
    %v2129 = vunpack.c.l.b16 %v2024
    %v2130 = vunpack.c.l.b16 %v2025
    %v2131 = vunpack.c.l.b16 %v2026
    %v2132 = vunpack.c.l.b16 %v2027
    %v2133 = vunpack.c.l.b16 %v2028
    %v2134 = vunpack.c.l.b16 %v2029
    %v2135 = vunpack.c.l.b16 %v2030
    %v2136 = vunpack.c.l.b16 %v2031
    %v2137 = vunpack.c.l.b16 %v2032
    %v2138 = vunpack.c.l.b16 %v2033
    %v2139 = vunpack.c.l.b16 %v2034
    %v2140 = vunpack.c.l.b16 %v2035
    %v2141 = vunpack.c.l.b16 %v2036
    %v2142 = vunpack.c.l.b16 %v2037
    %v2143 = vpack.c.b16 %v2126, %v2125
    %v2144 = vpack.c.b16 %v2128, %v2127
    %v2145 = vpack.c.b16 %v2130, %v2129
    %v2146 = vpack.c.b16 %v2132, %v2131
    %v2147 = vpack.c.b16 %v2134, %v2133
    %v2148 = vpack.c.b16 %v2136, %v2135
    %v2149 = vpack.c.b16 %v2138, %v2137
    %v2150 = vpack.c.b16 %v2140, %v2139
    %v2151 = vpack.c.b16 %v2142, %v2141
    %2152 = vrot.lane.b32.xlu0 %v2143, 32
    %v2153 = vpop.permute.xlu0 %2152
    %2154 = vrot.lane.b32.xlu0 %v2144, 32
    %v2155 = vpop.permute.xlu0 %2154
    %2156 = vrot.lane.b32.xlu0 %v2145, 32
    %v2157 = vpop.permute.xlu0 %2156
    %2158 = vrot.lane.b32.xlu0 %v2146, 32
    %v2159 = vpop.permute.xlu0 %2158
    %2160 = vrot.lane.b32.xlu0 %v2147, 32
    %v2161 = vpop.permute.xlu0 %2160
    %2162 = vrot.lane.b32.xlu0 %v2148, 32
    %v2163 = vpop.permute.xlu0 %2162
    %2164 = vrot.lane.b32.xlu0 %v2149, 32
    %v2165 = vpop.permute.xlu0 %2164
    %2166 = vrot.lane.b32.xlu0 %v2150, 32
    %v2167 = vpop.permute.xlu0 %2166
    %2168 = vrot.lane.b32.xlu0 %v2151, 32
    %v2169 = vpop.permute.xlu0 %2168
    %v2188 = vunpack.c.l.b16 %v2038
    %v2189 = vunpack.c.l.b16 %v2039
    %v2190 = vunpack.c.l.b16 %v2040
    %v2191 = vunpack.c.l.b16 %v2041
    %v2192 = vunpack.c.l.b16 %v2042
    %v2193 = vunpack.c.l.b16 %v2043
    %v2194 = vunpack.c.l.b16 %v2044
    %v2195 = vunpack.c.l.b16 %v2045
    %v2196 = vunpack.c.l.b16 %v2046
    %v2197 = vunpack.c.l.b16 %v2047
    %v2198 = vunpack.c.l.b16 %v2048
    %v2199 = vunpack.c.l.b16 %v2049
    %v2200 = vunpack.c.l.b16 %v2050
    %v2201 = vunpack.c.l.b16 %v2051
    %v2202 = vunpack.c.l.b16 %v2052
    %v2203 = vunpack.c.l.b16 %v2053
    %v2204 = vunpack.c.l.b16 %v2054
    %v2205 = vunpack.c.l.b16 %v2055
    %v2206 = vpack.c.b16 %v2189, %v2188
    %v2207 = vpack.c.b16 %v2191, %v2190
    %v2208 = vpack.c.b16 %v2193, %v2192
    %v2209 = vpack.c.b16 %v2195, %v2194
    %v2210 = vpack.c.b16 %v2197, %v2196
    %v2211 = vpack.c.b16 %v2199, %v2198
    %v2212 = vpack.c.b16 %v2201, %v2200
    %v2213 = vpack.c.b16 %v2203, %v2202
    %v2214 = vpack.c.b16 %v2205, %v2204
    %2215 = vrot.lane.b32.xlu0 %v2206, 64
    %v2216 = vpop.permute.xlu0 %2215
    %2217 = vrot.lane.b32.xlu0 %v2207, 64
    %v2218 = vpop.permute.xlu0 %2217
    %2219 = vrot.lane.b32.xlu0 %v2208, 64
    %v2220 = vpop.permute.xlu0 %2219
    %2221 = vrot.lane.b32.xlu0 %v2209, 64
    %v2222 = vpop.permute.xlu0 %2221
    %2223 = vrot.lane.b32.xlu0 %v2210, 64
    %v2224 = vpop.permute.xlu0 %2223
    %2225 = vrot.lane.b32.xlu0 %v2211, 64
    %v2226 = vpop.permute.xlu0 %2225
    %2227 = vrot.lane.b32.xlu0 %v2212, 64
    %v2228 = vpop.permute.xlu0 %2227
    %2229 = vrot.lane.b32.xlu0 %v2213, 64
    %v2230 = vpop.permute.xlu0 %2229
    %2231 = vrot.lane.b32.xlu0 %v2214, 64
    %v2232 = vpop.permute.xlu0 %2231
    %v2234 = vunpack.c.l.b16 %v2056
    %v2235 = vpack.c.b16 %v2082, %v2081
    %v2236 = vpack.c.b16 %v2084, %v2083
    %v2237 = vpack.c.b16 %v2086, %v2085
    %v2238 = vpack.c.b16 %v2088, %v2087
    %v2239 = vpack.c.b16 %v2090, %v2089
    %v2240 = vpack.c.b16 %v2092, %v2091
    %v2241 = vpack.c.b16 %v2094, %v2093
    %v2242 = vpack.c.b16 %v2096, %v2095
    %v2243 = vpack.c.b16 %v2234, %v2097
    %2244 = vrot.lane.b32.xlu0 %v2235, 96
    %v2245 = vpop.permute.xlu0 %2244
    %2246 = vrot.lane.b32.xlu0 %v2236, 96
    %v2247 = vpop.permute.xlu0 %2246
    %2248 = vrot.lane.b32.xlu0 %v2237, 96
    %v2249 = vpop.permute.xlu0 %2248
    %2250 = vrot.lane.b32.xlu0 %v2238, 96
    %v2251 = vpop.permute.xlu0 %2250
    %2252 = vrot.lane.b32.xlu0 %v2239, 96
    %v2253 = vpop.permute.xlu0 %2252
    %2254 = vrot.lane.b32.xlu0 %v2240, 96
    %v2255 = vpop.permute.xlu0 %2254
    %2256 = vrot.lane.b32.xlu0 %v2241, 96
    %v2257 = vpop.permute.xlu0 %2256
    %2258 = vrot.lane.b32.xlu0 %v2242, 96
    %v2259 = vpop.permute.xlu0 %2258
    %2260 = vrot.lane.b32.xlu0 %v2243, 96
    %v2261 = vpop.permute.xlu0 %2260
    %v2263 = vunpack.c.l.b16 %v2057
    %v2264 = vpack.c.b16 %v2127, %v2126
    %v2265 = vpack.c.b16 %v2129, %v2128
    %v2266 = vpack.c.b16 %v2131, %v2130
    %v2267 = vpack.c.b16 %v2133, %v2132
    %v2268 = vpack.c.b16 %v2135, %v2134
    %v2269 = vpack.c.b16 %v2137, %v2136
    %v2270 = vpack.c.b16 %v2139, %v2138
    %v2271 = vpack.c.b16 %v2141, %v2140
    %v2272 = vpack.c.b16 %v2263, %v2142
    %v2274 = vunpack.c.l.b16 %v2058
    %v2275 = vpack.c.b16 %v2190, %v2189
    %v2276 = vpack.c.b16 %v2192, %v2191
    %v2277 = vpack.c.b16 %v2194, %v2193
    %v2278 = vpack.c.b16 %v2196, %v2195
    %v2279 = vpack.c.b16 %v2198, %v2197
    %v2280 = vpack.c.b16 %v2200, %v2199
    %v2281 = vpack.c.b16 %v2202, %v2201
    %v2282 = vpack.c.b16 %v2204, %v2203
    %v2283 = vpack.c.b16 %v2274, %v2205
    %2284 = vrot.lane.b32.xlu0 %v2275, 32
    %v2285 = vpop.permute.xlu0 %2284
    %2286 = vrot.lane.b32.xlu0 %v2276, 32
    %v2287 = vpop.permute.xlu0 %2286
    %2288 = vrot.lane.b32.xlu0 %v2277, 32
    %v2289 = vpop.permute.xlu0 %2288
    %2290 = vrot.lane.b32.xlu0 %v2278, 32
    %v2291 = vpop.permute.xlu0 %2290
    %2292 = vrot.lane.b32.xlu0 %v2279, 32
    %v2293 = vpop.permute.xlu0 %2292
    %2294 = vrot.lane.b32.xlu0 %v2280, 32
    %v2295 = vpop.permute.xlu0 %2294
    %2296 = vrot.lane.b32.xlu0 %v2281, 32
    %v2297 = vpop.permute.xlu0 %2296
    %2298 = vrot.lane.b32.xlu0 %v2282, 32
    %v2299 = vpop.permute.xlu0 %2298
    %2300 = vrot.lane.b32.xlu0 %v2283, 32
    %v2301 = vpop.permute.xlu0 %2300
    %v2303 = vunpack.c.l.b16 %v2059
    %v2304 = vpack.c.b16 %v2303, %v2234
    %2305 = vrot.lane.b32.xlu0 %v2099, 64
    %v2306 = vpop.permute.xlu0 %2305
    %2307 = vrot.lane.b32.xlu0 %v2100, 64
    %v2308 = vpop.permute.xlu0 %2307
    %2309 = vrot.lane.b32.xlu0 %v2101, 64
    %v2310 = vpop.permute.xlu0 %2309
    %2311 = vrot.lane.b32.xlu0 %v2102, 64
    %v2312 = vpop.permute.xlu0 %2311
    %2313 = vrot.lane.b32.xlu0 %v2103, 64
    %v2314 = vpop.permute.xlu0 %2313
    %2315 = vrot.lane.b32.xlu0 %v2104, 64
    %v2316 = vpop.permute.xlu0 %2315
    %2317 = vrot.lane.b32.xlu0 %v2105, 64
    %v2318 = vpop.permute.xlu0 %2317
    %2319 = vrot.lane.b32.xlu0 %v2106, 64
    %v2320 = vpop.permute.xlu0 %2319
    %2321 = vrot.lane.b32.xlu0 %v2304, 64
    %v2322 = vpop.permute.xlu0 %2321
    %v2324 = vunpack.c.l.b16 %v2060
    %v2325 = vpack.c.b16 %v2324, %v2263
    %2326 = vrot.lane.b32.xlu0 %v2144, 96
    %v2327 = vpop.permute.xlu0 %2326
    %2328 = vrot.lane.b32.xlu0 %v2145, 96
    %v2329 = vpop.permute.xlu0 %2328
    %2330 = vrot.lane.b32.xlu0 %v2146, 96
    %v2331 = vpop.permute.xlu0 %2330
    %2332 = vrot.lane.b32.xlu0 %v2147, 96
    %v2333 = vpop.permute.xlu0 %2332
    %2334 = vrot.lane.b32.xlu0 %v2148, 96
    %v2335 = vpop.permute.xlu0 %2334
    %2336 = vrot.lane.b32.xlu0 %v2149, 96
    %v2337 = vpop.permute.xlu0 %2336
    %2338 = vrot.lane.b32.xlu0 %v2150, 96
    %v2339 = vpop.permute.xlu0 %2338
    %2340 = vrot.lane.b32.xlu0 %v2151, 96
    %v2341 = vpop.permute.xlu0 %2340
    %2342 = vrot.lane.b32.xlu0 %v2325, 96
    %v2343 = vpop.permute.xlu0 %2342
    %v2345 = vunpack.c.l.b16 %v2061
    %v2346 = vpack.c.b16 %v2345, %v2274
    %vm2347 = vcmask 261120
    %v2350 = vsel %vm2347, %v2098, %v2153
    %v2353 = vsel %vm2347, %v2099, %v2155
    %v2356 = vsel %vm2347, %v2100, %v2157
    %v2359 = vsel %vm2347, %v2101, %v2159
    %v2362 = vsel %vm2347, %v2102, %v2161
    %v2365 = vsel %vm2347, %v2103, %v2163
    %v2368 = vsel %vm2347, %v2104, %v2165
    %v2371 = vsel %vm2347, %v2105, %v2167
    %v2374 = vsel %vm2347, %v2106, %v2169
    %vm2375 = vcmask 523264
    %v2377 = vsel %vm2375, %v2350, %v2216
    %v2379 = vsel %vm2375, %v2353, %v2218
    %v2381 = vsel %vm2375, %v2356, %v2220
    %v2383 = vsel %vm2375, %v2359, %v2222
    %v2385 = vsel %vm2375, %v2362, %v2224
    %v2387 = vsel %vm2375, %v2365, %v2226
    %v2389 = vsel %vm2375, %v2368, %v2228
    %v2391 = vsel %vm2375, %v2371, %v2230
    %v2393 = vsel %vm2375, %v2374, %v2232
    %vm2394 = vcmask 785408
    %v2396 = vsel %vm2394, %v2377, %v2245
    %v2399 = vsel %vm2394, %v2379, %v2247
    %v2402 = vsel %vm2394, %v2381, %v2249
    %v2405 = vsel %vm2394, %v2383, %v2251
    %v2408 = vsel %vm2394, %v2385, %v2253
    %v2411 = vsel %vm2394, %v2387, %v2255
    %v2414 = vsel %vm2394, %v2389, %v2257
    %v2417 = vsel %vm2394, %v2391, %v2259
    %v2420 = vsel %vm2394, %v2393, %v2261
    %v2424 = vsel %vm2347, %v2264, %v2285
    %v2427 = vsel %vm2347, %v2265, %v2287
    %v2430 = vsel %vm2347, %v2266, %v2289
    %v2433 = vsel %vm2347, %v2267, %v2291
    %v2436 = vsel %vm2347, %v2268, %v2293
    %v2439 = vsel %vm2347, %v2269, %v2295
    %v2442 = vsel %vm2347, %v2270, %v2297
    %v2445 = vsel %vm2347, %v2271, %v2299
    %v2448 = vsel %vm2347, %v2272, %v2301
    %v2450 = vsel %vm2375, %v2424, %v2306
    %v2452 = vsel %vm2375, %v2427, %v2308
    %v2454 = vsel %vm2375, %v2430, %v2310
    %v2456 = vsel %vm2375, %v2433, %v2312
    %v2458 = vsel %vm2375, %v2436, %v2314
    %v2460 = vsel %vm2375, %v2439, %v2316
    %v2462 = vsel %vm2375, %v2442, %v2318
    %v2464 = vsel %vm2375, %v2445, %v2320
    %v2466 = vsel %vm2375, %v2448, %v2322
    %v2468 = vsel %vm2394, %v2450, %v2327
    %v2471 = vsel %vm2394, %v2452, %v2329
    %v2474 = vsel %vm2394, %v2454, %v2331
    %v2477 = vsel %vm2394, %v2456, %v2333
    %v2480 = vsel %vm2394, %v2458, %v2335
    %v2483 = vsel %vm2394, %v2460, %v2337
    %v2486 = vsel %vm2394, %v2462, %v2339
    %v2489 = vsel %vm2394, %v2464, %v2341
    %v2492 = vsel %vm2394, %v2466, %v2343
    %v2494 = vld [vmem:[%s4] sm:$0xf]
    %v2495 = vld [vmem:[%s4 + $0x4] sm:$0xf]
    %v2496 = vld [vmem:[%s4 + $0x8] sm:$0xf]
    %v2497 = vld [vmem:[%s4 + $0xc] sm:$0xf]
    %v2498 = vld [vmem:[%s4 + $0x10] sm:$0xf]
    %v2499 = vld [vmem:[%s4 + $0x14] sm:$0xf]
    %v2500 = vld [vmem:[%s4 + $0x18] sm:$0xf]
    %v2501 = vld [vmem:[%s4 + $0x1c] sm:$0xf]
    %v2502 = vld [vmem:[%s4 + $0x20] sm:$0xf]
    %v2503 = vld [vmem:[%s4 + $0x24] sm:$0xf]
    %v2504 = vld [vmem:[%s4 + $0x28] sm:$0xf]
    %v2505 = vld [vmem:[%s4 + $0x2c] sm:$0xf]
    %v2506 = vld [vmem:[%s4 + $0x30] sm:$0xf]
    %v2507 = vld [vmem:[%s4 + $0x34] sm:$0xf]
    %v2508 = vld [vmem:[%s4 + $0x38] sm:$0xf]
    %v2509 = vld [vmem:[%s4 + $0x3c] sm:$0xf]
    %v2510 = vld [vmem:[%s4 + $0x40] sm:$0xf]
    %v2511 = vld [vmem:[%s4 + $0x44] sm:$0xf]
    %v2512 = vld [vmem:[%s4 + $0x48] sm:$0xf]
    %v2513 = vld [vmem:[%s4 + $0x4c] sm:$0xf]
    %v2514 = vld [vmem:[%s4 + $0x50] sm:$0xf]
    %v2515 = vld [vmem:[%s4 + $0x54] sm:$0xf]
    %v2516 = vld [vmem:[%s4 + $0x58] sm:$0xf]
    %v2517 = vld [vmem:[%s4 + $0x5c] sm:$0xf]
    %v2518 = vld [vmem:[%s4 + $0x60] sm:$0xf]
    %v2519 = vld [vmem:[%s4 + $0x64] sm:$0xf]
    %v2520 = vld [vmem:[%s4 + $0x68] sm:$0xf]
    %v2521 = vld [vmem:[%s4 + $0x6c] sm:$0xf]
    %v2522 = vld [vmem:[%s4 + $0x70] sm:$0xf]
    %v2523 = vld [vmem:[%s4 + $0x74] sm:$0xf]
    %v2524 = vld [vmem:[%s4 + $0x78] sm:$0xf]
    %v2525 = vld [vmem:[%s4 + $0x7c] sm:$0xf]
    %v2526 = vld [vmem:[%s4 + $0x80] sm:$0xf]
    %v2527 = vld [vmem:[%s4 + $0x84] sm:$0xf]
    %v2528 = vld [vmem:[%s4 + $0x88] sm:$0xf]
    %v2529 = vld [vmem:[%s4 + $0x8c] sm:$0xf]
    %v2530 = vld [vmem:[%s5] sm:$0x1]
    %v2532 = vperm.slane %v2530, 0
    %v2570 = vunpack.c.l.b16 %v2494
    %v2571 = vunpack.c.l.b16 %v2495
    %v2572 = vunpack.c.l.b16 %v2496
    %v2573 = vunpack.c.l.b16 %v2497
    %v2574 = vunpack.c.l.b16 %v2498
    %v2575 = vunpack.c.l.b16 %v2499
    %v2576 = vunpack.c.l.b16 %v2500
    %v2577 = vunpack.c.l.b16 %v2501
    %v2578 = vunpack.c.l.b16 %v2502
    %v2579 = vunpack.c.l.b16 %v2503
    %v2580 = vunpack.c.l.b16 %v2504
    %v2581 = vunpack.c.l.b16 %v2505
    %v2582 = vunpack.c.l.b16 %v2506
    %v2583 = vunpack.c.l.b16 %v2507
    %v2584 = vunpack.c.l.b16 %v2508
    %v2585 = vunpack.c.l.b16 %v2509
    %v2586 = vunpack.c.l.b16 %v2510
    %v2587 = vunpack.c.l.b16 %v2511
    %v2588 = vunpack.c.l.b16 %v2512
    %v2589 = vunpack.c.l.b16 %v2513
    %v2590 = vunpack.c.l.b16 %v2514
    %v2591 = vunpack.c.l.b16 %v2515
    %v2592 = vunpack.c.l.b16 %v2516
    %v2593 = vunpack.c.l.b16 %v2517
    %v2594 = vunpack.c.l.b16 %v2518
    %v2595 = vunpack.c.l.b16 %v2519
    %v2596 = vunpack.c.l.b16 %v2520
    %v2597 = vunpack.c.l.b16 %v2521
    %v2598 = vunpack.c.l.b16 %v2522
    %v2599 = vunpack.c.l.b16 %v2523
    %v2600 = vunpack.c.l.b16 %v2524
    %v2601 = vunpack.c.l.b16 %v2525
    %v2602 = vunpack.c.l.b16 %v2526
    %v2603 = vunpack.c.l.b16 %v2527
    %v2604 = vunpack.c.l.b16 %v2528
    %v2605 = vunpack.c.l.b16 %v2529
    %v2606 = vpack.c.b16 %v2571, %v2570
    %v2607 = vpack.c.b16 %v2573, %v2572
    %v2608 = vpack.c.b16 %v2575, %v2574
    %v2609 = vpack.c.b16 %v2577, %v2576
    %v2610 = vpack.c.b16 %v2579, %v2578
    %v2611 = vpack.c.b16 %v2581, %v2580
    %v2612 = vpack.c.b16 %v2583, %v2582
    %v2613 = vpack.c.b16 %v2585, %v2584
    %v2614 = vpack.c.b16 %v2587, %v2586
    %v2615 = vpack.c.b16 %v2589, %v2588
    %v2616 = vpack.c.b16 %v2591, %v2590
    %v2617 = vpack.c.b16 %v2593, %v2592
    %v2618 = vpack.c.b16 %v2595, %v2594
    %v2619 = vpack.c.b16 %v2597, %v2596
    %v2620 = vpack.c.b16 %v2599, %v2598
    %v2621 = vpack.c.b16 %v2601, %v2600
    %v2622 = vpack.c.b16 %v2603, %v2602
    %v2623 = vpack.c.b16 %v2605, %v2604
    %v2643 = vsel %vm2347, %v2207, 0
    %v2646 = vsel %vm2347, %v2208, 0
    %v2649 = vsel %vm2347, %v2209, 0
    %v2652 = vsel %vm2347, %v2210, 0
    %v2655 = vsel %vm2347, %v2211, 0
    %v2658 = vsel %vm2347, %v2212, 0
    %v2661 = vsel %vm2347, %v2213, 0
    %v2664 = vsel %vm2347, %v2214, 0
    %v2667 = vsel %vm2347, %v2346, 0
    %2669 = vmatpush.bf16.msra.mxu0 %v2613
    %2670 = vmatpush.bf16.msra.mxu0 %v2612
    %2671 = vmatpush.bf16.msra.mxu0 %v2611
    %2672 = vmatpush.bf16.msra.mxu0 %v2610
    %2673 = vmatpush.bf16.msra.mxu0 %v2609
    %2674 = vmatpush.bf16.msra.mxu0 %v2608
    %2675 = vmatpush.bf16.msra.mxu0 %v2607
    %2676 = vmatpush.bf16.msra.mxu0 %v2606
    %2677 = vmatmul.bf16.gmra.mxu0 %v2396
    %v2678 = vpop.f32.mrf.mxu0
    %v2679 = vadd.f32 %v2532, %v2678
    %v2680 = vpop.f32.mrf.mxu0
    %v2681 = vadd.f32 %v2532, %v2680
    %2682 = vmatmul.bf16.gmra.mxu0 %v2399
    %v2683 = vpop.f32.mrf.mxu0
    %v2684 = vadd.f32 %v2532, %v2683
    %v2685 = vpop.f32.mrf.mxu0
    %v2686 = vadd.f32 %v2532, %v2685
    %2687 = vmatmul.bf16.gmra.mxu0 %v2402
    %v2688 = vpop.f32.mrf.mxu0
    %v2689 = vadd.f32 %v2532, %v2688
    %v2690 = vpop.f32.mrf.mxu0
    %v2691 = vadd.f32 %v2532, %v2690
    %2692 = vmatmul.bf16.gmra.mxu0 %v2405
    %v2693 = vpop.f32.mrf.mxu0
    %v2694 = vadd.f32 %v2532, %v2693
    %v2695 = vpop.f32.mrf.mxu0
    %v2696 = vadd.f32 %v2532, %v2695
    %2697 = vmatmul.bf16.gmra.mxu0 %v2408
    %v2698 = vpop.f32.mrf.mxu0
    %v2699 = vpop.f32.mrf.mxu0
    %2700 = vmatmul.bf16.gmra.mxu0 %v2411
    %v2701 = vpop.f32.mrf.mxu0
    %v2702 = vadd.f32 %v2532, %v2701
    %v2703 = vpop.f32.mrf.mxu0
    %v2704 = vadd.f32 %v2532, %v2703
    %2705 = vmatmul.bf16.gmra.mxu0 %v2414
    %v2706 = vpop.f32.mrf.mxu0
    %v2707 = vadd.f32 %v2532, %v2706
    %v2708 = vpop.f32.mrf.mxu0
    %v2709 = vadd.f32 %v2532, %v2708
    %2710 = vmatmul.bf16.gmra.mxu0 %v2417
    %v2711 = vpop.f32.mrf.mxu0
    %v2712 = vadd.f32 %v2532, %v2711
    %v2713 = vpop.f32.mrf.mxu0
    %v2714 = vadd.f32 %v2532, %v2713
    %2715 = vmatmul.bf16.gmra.mxu0 %v2420
    %v2716 = vpop.f32.mrf.mxu0
    %v2717 = vadd.f32 %v2532, %v2716
    %v2718 = vpop.f32.mrf.mxu0
    %v2719 = vadd.f32 %v2532, %v2718
    %2720 = vdwg.mxu0
    %2721 = vmatpush.bf16.msra.mxu0 %v2621
    %2722 = vmatpush.bf16.msra.mxu0 %v2620
    %2723 = vmatpush.bf16.msra.mxu0 %v2619
    %2724 = vmatpush.bf16.msra.mxu0 %v2618
    %2725 = vmatpush.bf16.msra.mxu0 %v2617
    %2726 = vmatpush.bf16.msra.mxu0 %v2616
    %2727 = vmatpush.bf16.msra.mxu0 %v2615
    %2728 = vmatpush.bf16.msra.mxu0 %v2614
    %2729 = vmatmul.bf16.gmra.mxu0 %v2468
    %v2730 = vpop.f32.mrf.mxu0
    %v2731 = vadd.f32 %v2679, %v2730
    %v2732 = vpop.f32.mrf.mxu0
    %v2733 = vadd.f32 %v2681, %v2732
    %2734 = vmatmul.bf16.gmra.mxu0 %v2471
    %v2735 = vpop.f32.mrf.mxu0
    %v2736 = vadd.f32 %v2684, %v2735
    %v2737 = vpop.f32.mrf.mxu0
    %v2738 = vadd.f32 %v2686, %v2737
    %2739 = vmatmul.bf16.gmra.mxu0 %v2474
    %v2740 = vpop.f32.mrf.mxu0
    %v2741 = vadd.f32 %v2689, %v2740
    %v2742 = vpop.f32.mrf.mxu0
    %v2743 = vadd.f32 %v2691, %v2742
    %2744 = vmatmul.bf16.gmra.mxu0 %v2477
    %v2745 = vpop.f32.mrf.mxu0
    %v2746 = vadd.f32 %v2694, %v2745
    %v2747 = vpop.f32.mrf.mxu0
    %v2748 = vadd.f32 %v2696, %v2747
    %2749 = vmatmul.bf16.gmra.mxu0 %v2480
    %v2750 = vpop.f32.mrf.mxu0
    %v2751 = vpop.f32.mrf.mxu0
    %2752 = vmatmul.bf16.gmra.mxu0 %v2483
    %v2753 = vpop.f32.mrf.mxu0
    %v2754 = vadd.f32 %v2702, %v2753
    %v2755 = vpop.f32.mrf.mxu0
    %v2756 = vadd.f32 %v2704, %v2755
    %2757 = vmatmul.bf16.gmra.mxu0 %v2486
    %v2758 = vpop.f32.mrf.mxu0
    %v2759 = vadd.f32 %v2707, %v2758
    %v2760 = vpop.f32.mrf.mxu0
    %v2761 = vadd.f32 %v2709, %v2760
    %2762 = vmatmul.bf16.gmra.mxu0 %v2489
    %v2763 = vpop.f32.mrf.mxu0
    %v2764 = vadd.f32 %v2712, %v2763
    %v2765 = vpop.f32.mrf.mxu0
    %v2766 = vadd.f32 %v2714, %v2765
    %2767 = vmatmul.bf16.gmra.mxu0 %v2492
    %v2768 = vpop.f32.mrf.mxu0
    %v2769 = vadd.f32 %v2717, %v2768
    %v2770 = vpop.f32.mrf.mxu0
    %v2771 = vadd.f32 %v2719, %v2770
    %2772 = vdwg.mxu0
    %2773 = vmatpush.bf16.msra.mxu0 0
    %2774 = vmatpush.bf16.msra.mxu0 0
    %2775 = vmatpush.bf16.msra.mxu0 0
    %2776 = vmatpush.bf16.msra.mxu0 0
    %2777 = vmatpush.bf16.msra.mxu0 0
    %2778 = vmatpush.bf16.msra.mxu0 0
    %2779 = vmatpush.bf16.msra.mxu0 %v2623
    %2780 = vmatpush.bf16.msra.mxu0 %v2622
    %2781 = vmatmul.bf16.gmra.mxu0 %v2643
    %v2782 = vpop.f32.mrf.mxu0
    %v2783 = vadd.f32 %v2731, %v2782
    %v2784 = vpop.f32.mrf.mxu0
    %v2785 = vadd.f32 %v2733, %v2784
    %2786 = vmatmul.bf16.gmra.mxu0 %v2646
    %v2787 = vpop.f32.mrf.mxu0
    %v2788 = vadd.f32 %v2736, %v2787
    %v2789 = vpop.f32.mrf.mxu0
    %v2790 = vadd.f32 %v2738, %v2789
    %2791 = vmatmul.bf16.gmra.mxu0 %v2649
    %v2792 = vpop.f32.mrf.mxu0
    %v2793 = vadd.f32 %v2741, %v2792
    %v2794 = vpop.f32.mrf.mxu0
    %v2795 = vadd.f32 %v2743, %v2794
    %2796 = vmatmul.bf16.gmra.mxu0 %v2652
    %v2797 = vpop.f32.mrf.mxu0
    %v2798 = vadd.f32 %v2746, %v2797
    %v2799 = vpop.f32.mrf.mxu0
    %v2800 = vadd.f32 %v2748, %v2799
    %2801 = vmatmul.bf16.gmra.mxu0 %v2655
    %v2802 = vpop.f32.mrf.mxu0
    %v2803 = vpop.f32.mrf.mxu0
    %2804 = vmatmul.bf16.gmra.mxu0 %v2658
    %v2805 = vpop.f32.mrf.mxu0
    %v2806 = vadd.f32 %v2754, %v2805
    %v2807 = vpop.f32.mrf.mxu0
    %v2808 = vadd.f32 %v2756, %v2807
    %2809 = vmatmul.bf16.gmra.mxu0 %v2661
    %v2810 = vpop.f32.mrf.mxu0
    %v2811 = vadd.f32 %v2759, %v2810
    %v2812 = vpop.f32.mrf.mxu0
    %v2813 = vadd.f32 %v2761, %v2812
    %2814 = vmatmul.bf16.gmra.mxu0 %v2664
    %v2815 = vpop.f32.mrf.mxu0
    %v2816 = vadd.f32 %v2764, %v2815
    %v2817 = vpop.f32.mrf.mxu0
    %v2818 = vadd.f32 %v2766, %v2817
    %2819 = vmatmul.bf16.gmra.mxu0 %v2667
    %v2820 = vpop.f32.mrf.mxu0
    %v2821 = vadd.f32 %v2769, %v2820
    %v2822 = vpop.f32.mrf.mxu0
    %v2823 = vadd.f32 %v2771, %v2822
    %2824 = vdwg.mxu0
    %v2825 = vld [vmem:[%s6] sm:$0x1]
    %vm2826 = vcmp.ge.f32.partialorder %v2783, 0.0
    %vm2827 = vcmp.ge.f32.partialorder %v2785, 0.0
    %vm2828 = vcmp.ge.f32.partialorder %v2788, 0.0
    %vm2829 = vcmp.ge.f32.partialorder %v2790, 0.0
    %vm2830 = vcmp.ge.f32.partialorder %v2793, 0.0
    %vm2831 = vcmp.ge.f32.partialorder %v2795, 0.0
    %vm2832 = vcmp.ge.f32.partialorder %v2798, 0.0
    %vm2833 = vcmp.ge.f32.partialorder %v2800, 0.0
    %vm2834 = vcmp.ge.f32.partialorder %v2806, 0.0
    %vm2835 = vcmp.ge.f32.partialorder %v2808, 0.0
    %vm2836 = vcmp.ge.f32.partialorder %v2811, 0.0
    %vm2837 = vcmp.ge.f32.partialorder %v2813, 0.0
    %vm2838 = vcmp.ge.f32.partialorder %v2816, 0.0
    %vm2839 = vcmp.ge.f32.partialorder %v2818, 0.0
    %vm2840 = vcmp.ge.f32.partialorder %v2821, 0.0
    %vm2841 = vcmp.ge.f32.partialorder %v2823, 0.0
    %v2843 = vperm.slane %v2825, 0
    %v2845 = vmul.f32 %v2843, %v2783
    %v2846 = vmul.f32 %v2843, %v2785
    %v2847 = vmul.f32 %v2843, %v2788
    %v2848 = vmul.f32 %v2843, %v2790
    %v2849 = vmul.f32 %v2843, %v2793
    %v2850 = vmul.f32 %v2843, %v2795
    %v2851 = vmul.f32 %v2843, %v2798
    %v2852 = vmul.f32 %v2843, %v2800
    %v2853 = vmul.f32 %v2843, %v2806
    %v2854 = vmul.f32 %v2843, %v2808
    %v2855 = vmul.f32 %v2843, %v2811
    %v2856 = vmul.f32 %v2843, %v2813
    %v2857 = vmul.f32 %v2843, %v2816
    %v2858 = vmul.f32 %v2843, %v2818
    %v2859 = vmul.f32 %v2843, %v2821
    %v2860 = vmul.f32 %v2843, %v2823
    %v2861 = vsel %vm2826, %v2783, %v2845
    %v2862 = vsel %vm2827, %v2785, %v2846
    %v2863 = vsel %vm2828, %v2788, %v2847
    %v2864 = vsel %vm2829, %v2790, %v2848
    %v2865 = vsel %vm2830, %v2793, %v2849
    %v2866 = vsel %vm2831, %v2795, %v2850
    %v2867 = vsel %vm2832, %v2798, %v2851
    %v2868 = vsel %vm2833, %v2800, %v2852
    %v2869 = vsel %vm2834, %v2806, %v2853
    %v2870 = vsel %vm2835, %v2808, %v2854
    %v2871 = vsel %vm2836, %v2811, %v2855
    %v2872 = vsel %vm2837, %v2813, %v2856
    %v2873 = vsel %vm2838, %v2816, %v2857
    %v2874 = vsel %vm2839, %v2818, %v2858
    %v2875 = vsel %vm2840, %v2821, %v2859
    %v2876 = vsel %vm2841, %v2823, %v2860
    %v2877 = vpack.c.bf16 %v2861, %v2861
    %v2878 = vpack.c.bf16 %v2862, %v2862
    %v2879 = vpack.c.bf16 %v2863, %v2863
    %v2880 = vpack.c.bf16 %v2864, %v2864
    %v2881 = vpack.c.bf16 %v2865, %v2865
    %v2882 = vpack.c.bf16 %v2866, %v2866
    %v2883 = vpack.c.bf16 %v2867, %v2867
    %v2884 = vpack.c.bf16 %v2868, %v2868
    %2885 = vst.msk [vmem:[#allocation3 + $0x8] sm:$0xf] %vm527, %v2877
    %2886 = vst.msk [vmem:[#allocation3 + $0xc] sm:$0xf] %vm527, %v2878
    %2887 = vst.msk [vmem:[#allocation3 + $0x10] sm:$0xf] %vm527, %v2879
    %2888 = vst.msk [vmem:[#allocation3 + $0x14] sm:$0xf] %vm527, %v2880
    %2889 = vst.msk [vmem:[#allocation3 + $0x18] sm:$0xf] %vm527, %v2881
    %2890 = vst.msk [vmem:[#allocation3 + $0x1c] sm:$0xf] %vm527, %v2882
    %2891 = vst.msk [vmem:[#allocation3 + $0x20] sm:$0xf] %vm527, %v2883
    %2892 = vst.msk [vmem:[#allocation3 + $0x24] sm:$0xf] %vm527, %v2884
    %v2893 = vpack.c.bf16 %v2869, %v2869
    %v2894 = vpack.c.bf16 %v2870, %v2870
    %v2895 = vpack.c.bf16 %v2871, %v2871
    %v2896 = vpack.c.bf16 %v2872, %v2872
    %v2897 = vpack.c.bf16 %v2873, %v2873
    %v2898 = vpack.c.bf16 %v2874, %v2874
    %v2899 = vpack.c.bf16 %v2875, %v2875
    %v2900 = vpack.c.bf16 %v2876, %v2876
    %2901 = vst.msk [vmem:[#allocation3 + $0x30] sm:$0xf] %vm527, %v2893
    %2902 = vst.msk [vmem:[#allocation3 + $0x34] sm:$0xf] %vm527, %v2894
    %2903 = vst.msk [vmem:[#allocation3 + $0x38] sm:$0xf] %vm527, %v2895
    %2904 = vst.msk [vmem:[#allocation3 + $0x3c] sm:$0xf] %vm527, %v2896
    %2905 = vst.msk [vmem:[#allocation3 + $0x40] sm:$0xf] %vm527, %v2897
    %2906 = vst.msk [vmem:[#allocation3 + $0x44] sm:$0xf] %vm527, %v2898
    %2907 = vst.msk [vmem:[#allocation3 + $0x48] sm:$0xf] %vm527, %v2899
    %2908 = vst.msk [vmem:[#allocation3 + $0x4c] sm:$0xf] %vm527, %v2900
    %v2909 = vld [vmem:[#allocation3 + $0x4] sm:$0xf]
    %v2910 = vld [vmem:[#allocation3 + $0x8] sm:$0xf]
    %v2911 = vld [vmem:[#allocation3 + $0xc] sm:$0xf]
    %v2912 = vld [vmem:[#allocation3 + $0x10] sm:$0xf]
    %v2913 = vld [vmem:[#allocation3 + $0x14] sm:$0xf]
    %v2914 = vld [vmem:[#allocation3 + $0x18] sm:$0xf]
    %v2915 = vld [vmem:[#allocation3 + $0x1c] sm:$0xf]
    %v2916 = vld [vmem:[#allocation3 + $0x20] sm:$0xf]
    %v2917 = vld [vmem:[#allocation3 + $0x24] sm:$0xf]
    %v2918 = vld [vmem:[#allocation3 + $0x28] sm:$0xf]
    %v2919 = vld [vmem:[#allocation3 + $0x2c] sm:$0xf]
    %v2920 = vld [vmem:[#allocation3 + $0x30] sm:$0xf]
    %v2921 = vld [vmem:[#allocation3 + $0x34] sm:$0xf]
    %v2922 = vld [vmem:[#allocation3 + $0x38] sm:$0xf]
    %v2923 = vld [vmem:[#allocation3 + $0x3c] sm:$0xf]
    %v2924 = vld [vmem:[#allocation3 + $0x40] sm:$0xf]
    %v2925 = vld [vmem:[#allocation3 + $0x44] sm:$0xf]
    %v2926 = vld [vmem:[#allocation3 + $0x48] sm:$0xf]
    %v2927 = vld [vmem:[#allocation3 + $0x4c] sm:$0xf]
    %v2928 = vld [vmem:[#allocation3 + $0x50] sm:$0xf]
    %v2929 = vld [vmem:[#allocation3 + $0x54] sm:$0x1]
    %v2930 = vsel %vm881, %v2909, 0
    %v2931 = vsel %vm888, %v2910, 0
    %v2932 = vsel %vm895, %v2911, 0
    %v2933 = vsel %vm902, %v2912, 0
    %v2934 = vsel %vm909, %v2913, 0
    %v2935 = vsel %vm916, %v2914, 0
    %v2936 = vsel %vm923, %v2915, 0
    %v2937 = vsel %vm930, %v2916, 0
    %v2938 = vsel %vm937, %v2917, 0
    %v2939 = vsel %vm944, %v2918, 0
    %v2940 = vsel %vm951, %v2919, 0
    %v2941 = vsel %vm958, %v2920, 0
    %v2942 = vsel %vm965, %v2921, 0
    %v2943 = vsel %vm972, %v2922, 0
    %v2944 = vsel %vm979, %v2923, 0
    %v2945 = vsel %vm986, %v2924, 0
    %v2946 = vsel %vm993, %v2925, 0
    %v2947 = vsel %vm1000, %v2926, 0
    %v2948 = vsel %vm1007, %v2927, 0
    %v2949 = vsel %vm1014, %v2928, 0
    %v2950 = vsel %vm1021, %v2929, 0
    %v2952 = vshrl.u32 %v2930, 16
    %v2954 = vrot.slane %v2952, 4
    %v2955 = vshll.u32 %v2930, 16
    %v2957 = vrot.slane %v2955, 5
    %v2958 = vor.u32 %v2954, %v2957
    %v2959 = vrot.slane %v2958, 4
    %v2961 = vshll.u32 %v2931, 16
    %v2963 = vrot.slane %v2961, 5
    %v2964 = vsel %vm1045, %v2959, %v2963
    %v2965 = vshrl.u32 %v2931, 16
    %v2967 = vrot.slane %v2965, 4
    %v2968 = vor.u32 %v2967, %v2963
    %v2969 = vrot.slane %v2968, 4
    %v2971 = vshll.u32 %v2932, 16
    %v2973 = vrot.slane %v2971, 5
    %v2974 = vsel %vm1045, %v2969, %v2973
    %v2975 = vshrl.u32 %v2932, 16
    %v2977 = vrot.slane %v2975, 4
    %v2978 = vor.u32 %v2977, %v2973
    %v2979 = vrot.slane %v2978, 4
    %v2981 = vshll.u32 %v2933, 16
    %v2983 = vrot.slane %v2981, 5
    %v2984 = vsel %vm1045, %v2979, %v2983
    %v2985 = vshrl.u32 %v2933, 16
    %v2987 = vrot.slane %v2985, 4
    %v2988 = vor.u32 %v2987, %v2983
    %v2989 = vrot.slane %v2988, 4
    %v2991 = vshll.u32 %v2934, 16
    %v2993 = vrot.slane %v2991, 5
    %v2994 = vsel %vm1045, %v2989, %v2993
    %v2995 = vshrl.u32 %v2934, 16
    %v2997 = vrot.slane %v2995, 4
    %v2998 = vor.u32 %v2997, %v2993
    %v2999 = vrot.slane %v2998, 4
    %v3001 = vshll.u32 %v2935, 16
    %v3003 = vrot.slane %v3001, 5
    %v3004 = vsel %vm1045, %v2999, %v3003
    %v3005 = vshrl.u32 %v2935, 16
    %v3007 = vrot.slane %v3005, 4
    %v3008 = vor.u32 %v3007, %v3003
    %v3009 = vrot.slane %v3008, 4
    %v3011 = vshll.u32 %v2936, 16
    %v3013 = vrot.slane %v3011, 5
    %v3014 = vsel %vm1045, %v3009, %v3013
    %v3015 = vshrl.u32 %v2936, 16
    %v3017 = vrot.slane %v3015, 4
    %v3018 = vor.u32 %v3017, %v3013
    %v3019 = vrot.slane %v3018, 4
    %v3021 = vshll.u32 %v2937, 16
    %v3023 = vrot.slane %v3021, 5
    %v3024 = vsel %vm1045, %v3019, %v3023
    %v3025 = vshrl.u32 %v2937, 16
    %v3027 = vrot.slane %v3025, 4
    %v3028 = vor.u32 %v3027, %v3023
    %v3029 = vrot.slane %v3028, 4
    %v3031 = vshll.u32 %v2938, 16
    %v3033 = vrot.slane %v3031, 5
    %v3034 = vsel %vm1045, %v3029, %v3033
    %v3035 = vshrl.u32 %v2938, 16
    %v3037 = vrot.slane %v3035, 4
    %v3038 = vor.u32 %v3037, %v3033
    %v3039 = vrot.slane %v3038, 4
    %v3041 = vshll.u32 %v2939, 16
    %v3043 = vrot.slane %v3041, 5
    %v3044 = vsel %vm1045, %v3039, %v3043
    %v3045 = vshrl.u32 %v2939, 16
    %v3047 = vrot.slane %v3045, 4
    %v3048 = vor.u32 %v3047, %v3043
    %v3049 = vrot.slane %v3048, 4
    %v3051 = vshll.u32 %v2940, 16
    %v3053 = vrot.slane %v3051, 5
    %v3054 = vsel %vm1045, %v3049, %v3053
    %v3055 = vshrl.u32 %v2940, 16
    %v3057 = vrot.slane %v3055, 4
    %v3058 = vor.u32 %v3057, %v3053
    %v3059 = vrot.slane %v3058, 4
    %v3061 = vshll.u32 %v2941, 16
    %v3063 = vrot.slane %v3061, 5
    %v3064 = vsel %vm1045, %v3059, %v3063
    %v3065 = vshrl.u32 %v2941, 16
    %v3067 = vrot.slane %v3065, 4
    %v3068 = vor.u32 %v3067, %v3063
    %v3069 = vrot.slane %v3068, 4
    %v3071 = vshll.u32 %v2942, 16
    %v3073 = vrot.slane %v3071, 5
    %v3074 = vsel %vm1045, %v3069, %v3073
    %v3075 = vshrl.u32 %v2942, 16
    %v3077 = vrot.slane %v3075, 4
    %v3078 = vor.u32 %v3077, %v3073
    %v3079 = vrot.slane %v3078, 4
    %v3081 = vshll.u32 %v2943, 16
    %v3083 = vrot.slane %v3081, 5
    %v3084 = vsel %vm1045, %v3079, %v3083
    %v3085 = vshrl.u32 %v2943, 16
    %v3087 = vrot.slane %v3085, 4
    %v3088 = vor.u32 %v3087, %v3083
    %v3089 = vrot.slane %v3088, 4
    %v3091 = vshll.u32 %v2944, 16
    %v3093 = vrot.slane %v3091, 5
    %v3094 = vsel %vm1045, %v3089, %v3093
    %v3095 = vshrl.u32 %v2944, 16
    %v3097 = vrot.slane %v3095, 4
    %v3098 = vor.u32 %v3097, %v3093
    %v3099 = vrot.slane %v3098, 4
    %v3101 = vshll.u32 %v2945, 16
    %v3103 = vrot.slane %v3101, 5
    %v3104 = vsel %vm1045, %v3099, %v3103
    %v3105 = vshrl.u32 %v2945, 16
    %v3107 = vrot.slane %v3105, 4
    %v3108 = vor.u32 %v3107, %v3103
    %v3109 = vrot.slane %v3108, 4
    %v3111 = vshll.u32 %v2946, 16
    %v3113 = vrot.slane %v3111, 5
    %v3114 = vsel %vm1045, %v3109, %v3113
    %v3115 = vshrl.u32 %v2946, 16
    %v3117 = vrot.slane %v3115, 4
    %v3118 = vor.u32 %v3117, %v3113
    %v3119 = vrot.slane %v3118, 4
    %v3121 = vshll.u32 %v2947, 16
    %v3123 = vrot.slane %v3121, 5
    %v3124 = vsel %vm1045, %v3119, %v3123
    %v3125 = vshrl.u32 %v2947, 16
    %v3127 = vrot.slane %v3125, 4
    %v3128 = vor.u32 %v3127, %v3123
    %v3129 = vrot.slane %v3128, 4
    %v3131 = vshll.u32 %v2948, 16
    %v3133 = vrot.slane %v3131, 5
    %v3134 = vsel %vm1045, %v3129, %v3133
    %v3135 = vshrl.u32 %v2948, 16
    %v3137 = vrot.slane %v3135, 4
    %v3138 = vor.u32 %v3137, %v3133
    %v3139 = vrot.slane %v3138, 4
    %v3141 = vshll.u32 %v2949, 16
    %v3143 = vrot.slane %v3141, 5
    %v3144 = vsel %vm1045, %v3139, %v3143
    %v3145 = vshrl.u32 %v2949, 16
    %v3147 = vrot.slane %v3145, 4
    %v3148 = vor.u32 %v3147, %v3143
    %v3149 = vrot.slane %v3148, 4
    %v3151 = vshll.u32 %v2950, 16
    %v3153 = vrot.slane %v3151, 5
    %v3154 = vsel %vm1045, %v3149, %v3153
    %3175 = vst.msk [vmem:[#allocation4 + $0x4] sm:$0xf] %vm527, %v2964
    %3176 = vst.msk [vmem:[#allocation4 + $0x8] sm:$0xf] %vm527, %v2974
    %3177 = vst.msk [vmem:[#allocation4 + $0xc] sm:$0xf] %vm527, %v2984
    %3178 = vst.msk [vmem:[#allocation4 + $0x10] sm:$0xf] %vm527, %v2994
    %3179 = vst.msk [vmem:[#allocation4 + $0x14] sm:$0xf] %vm527, %v3004
    %3180 = vst.msk [vmem:[#allocation4 + $0x18] sm:$0xf] %vm527, %v3014
    %3181 = vst.msk [vmem:[#allocation4 + $0x1c] sm:$0xf] %vm527, %v3024
    %3182 = vst.msk [vmem:[#allocation4 + $0x20] sm:$0xf] %vm527, %v3034
    %3183 = vst.msk [vmem:[#allocation4 + $0x24] sm:$0xf] %vm527, %v3044
    %3184 = vst.msk [vmem:[#allocation4 + $0x28] sm:$0xf] %vm527, %v3054
    %3185 = vst.msk [vmem:[#allocation4 + $0x2c] sm:$0xf] %vm527, %v3064
    %3186 = vst.msk [vmem:[#allocation4 + $0x30] sm:$0xf] %vm527, %v3074
    %3187 = vst.msk [vmem:[#allocation4 + $0x34] sm:$0xf] %vm527, %v3084
    %3188 = vst.msk [vmem:[#allocation4 + $0x38] sm:$0xf] %vm527, %v3094
    %3189 = vst.msk [vmem:[#allocation4 + $0x3c] sm:$0xf] %vm527, %v3104
    %3190 = vst.msk [vmem:[#allocation4 + $0x40] sm:$0xf] %vm527, %v3114
    %3191 = vst.msk [vmem:[#allocation4 + $0x44] sm:$0xf] %vm527, %v3124
    %3192 = vst.msk [vmem:[#allocation4 + $0x48] sm:$0xf] %vm527, %v3134
    %3193 = vst.msk [vmem:[#allocation4 + $0x4c] sm:$0xf] %vm527, %v3144
    %3194 = vst.msk [vmem:[#allocation4 + $0x50] sm:$0xf] %vm527, %v3154
    %v3195 = vld [vmem:[#allocation3] sm:$0x8]
    %v3196 = vld [vmem:[#allocation3 + $0x4] sm:$0xf]
    %v3197 = vld [vmem:[#allocation3 + $0x8] sm:$0xf]
    %v3198 = vld [vmem:[#allocation3 + $0xc] sm:$0xf]
    %v3199 = vld [vmem:[#allocation3 + $0x10] sm:$0xf]
    %v3200 = vld [vmem:[#allocation3 + $0x14] sm:$0xf]
    %v3201 = vld [vmem:[#allocation3 + $0x18] sm:$0xf]
    %v3202 = vld [vmem:[#allocation3 + $0x1c] sm:$0xf]
    %v3203 = vld [vmem:[#allocation3 + $0x20] sm:$0xf]
    %v3204 = vld [vmem:[#allocation3 + $0x24] sm:$0xf]
    %v3205 = vld [vmem:[#allocation3 + $0x28] sm:$0xf]
    %v3206 = vld [vmem:[#allocation3 + $0x2c] sm:$0xf]
    %v3207 = vld [vmem:[#allocation3 + $0x30] sm:$0xf]
    %v3208 = vld [vmem:[#allocation3 + $0x34] sm:$0xf]
    %v3209 = vld [vmem:[#allocation3 + $0x38] sm:$0xf]
    %v3210 = vld [vmem:[#allocation3 + $0x3c] sm:$0xf]
    %v3211 = vld [vmem:[#allocation3 + $0x40] sm:$0xf]
    %v3212 = vld [vmem:[#allocation3 + $0x44] sm:$0xf]
    %v3213 = vld [vmem:[#allocation3 + $0x48] sm:$0xf]
    %v3214 = vld [vmem:[#allocation3 + $0x4c] sm:$0xf]
    %v3215 = vld [vmem:[#allocation3 + $0x50] sm:$0xf]
    %v3216 = vsel %vm1616, %v3195, 0
    %v3217 = vsel %vm1623, %v3196, 0
    %v3218 = vsel %vm1630, %v3197, 0
    %v3219 = vsel %vm1637, %v3198, 0
    %v3220 = vsel %vm1644, %v3199, 0
    %v3221 = vsel %vm1651, %v3200, 0
    %v3222 = vsel %vm1658, %v3201, 0
    %v3223 = vsel %vm1665, %v3202, 0
    %v3224 = vsel %vm1672, %v3203, 0
    %v3225 = vsel %vm1679, %v3204, 0
    %v3226 = vsel %vm1686, %v3205, 0
    %v3227 = vsel %vm1693, %v3206, 0
    %v3228 = vsel %vm1700, %v3207, 0
    %v3229 = vsel %vm1707, %v3208, 0
    %v3230 = vsel %vm1714, %v3209, 0
    %v3231 = vsel %vm1721, %v3210, 0
    %v3232 = vsel %vm1728, %v3211, 0
    %v3233 = vsel %vm1735, %v3212, 0
    %v3234 = vsel %vm1742, %v3213, 0
    %v3235 = vsel %vm1749, %v3214, 0
    %v3236 = vsel %vm1756, %v3215, 0
    %v3238 = vshrl.u32 %v3216, 16
    %v3240 = vrot.slane %v3238, 7
    %v3241 = vrot.slane %v3240, 4
    %v3243 = vshrl.u32 %v3217, 16
    %v3245 = vrot.slane %v3243, 7
    %v3246 = vshll.u32 %v3217, 16
    %v3248 = vor.u32 %v3245, %v3246
    %v3249 = vsel %vm695, %v3241, %v3248
    %v3250 = vrot.slane %v3245, 4
    %v3252 = vshrl.u32 %v3218, 16
    %v3254 = vrot.slane %v3252, 7
    %v3255 = vshll.u32 %v3218, 16
    %v3257 = vor.u32 %v3254, %v3255
    %v3258 = vsel %vm695, %v3250, %v3257
    %v3259 = vrot.slane %v3254, 4
    %v3261 = vshrl.u32 %v3219, 16
    %v3263 = vrot.slane %v3261, 7
    %v3264 = vshll.u32 %v3219, 16
    %v3266 = vor.u32 %v3263, %v3264
    %v3267 = vsel %vm695, %v3259, %v3266
    %v3268 = vrot.slane %v3263, 4
    %v3270 = vshrl.u32 %v3220, 16
    %v3272 = vrot.slane %v3270, 7
    %v3273 = vshll.u32 %v3220, 16
    %v3275 = vor.u32 %v3272, %v3273
    %v3276 = vsel %vm695, %v3268, %v3275
    %v3277 = vrot.slane %v3272, 4
    %v3279 = vshrl.u32 %v3221, 16
    %v3281 = vrot.slane %v3279, 7
    %v3282 = vshll.u32 %v3221, 16
    %v3284 = vor.u32 %v3281, %v3282
    %v3285 = vsel %vm695, %v3277, %v3284
    %v3286 = vrot.slane %v3281, 4
    %v3288 = vshrl.u32 %v3222, 16
    %v3290 = vrot.slane %v3288, 7
    %v3291 = vshll.u32 %v3222, 16
    %v3293 = vor.u32 %v3290, %v3291
    %v3294 = vsel %vm695, %v3286, %v3293
    %v3295 = vrot.slane %v3290, 4
    %v3297 = vshrl.u32 %v3223, 16
    %v3299 = vrot.slane %v3297, 7
    %v3300 = vshll.u32 %v3223, 16
    %v3302 = vor.u32 %v3299, %v3300
    %v3303 = vsel %vm695, %v3295, %v3302
    %v3304 = vrot.slane %v3299, 4
    %v3306 = vshrl.u32 %v3224, 16
    %v3308 = vrot.slane %v3306, 7
    %v3309 = vshll.u32 %v3224, 16
    %v3311 = vor.u32 %v3308, %v3309
    %v3312 = vsel %vm695, %v3304, %v3311
    %v3313 = vrot.slane %v3308, 4
    %v3315 = vshrl.u32 %v3225, 16
    %v3317 = vrot.slane %v3315, 7
    %v3318 = vshll.u32 %v3225, 16
    %v3320 = vor.u32 %v3317, %v3318
    %v3321 = vsel %vm695, %v3313, %v3320
    %v3322 = vrot.slane %v3317, 4
    %v3324 = vshrl.u32 %v3226, 16
    %v3326 = vrot.slane %v3324, 7
    %v3327 = vshll.u32 %v3226, 16
    %v3329 = vor.u32 %v3326, %v3327
    %v3330 = vsel %vm695, %v3322, %v3329
    %v3331 = vrot.slane %v3326, 4
    %v3333 = vshrl.u32 %v3227, 16
    %v3335 = vrot.slane %v3333, 7
    %v3336 = vshll.u32 %v3227, 16
    %v3338 = vor.u32 %v3335, %v3336
    %v3339 = vsel %vm695, %v3331, %v3338
    %v3340 = vrot.slane %v3335, 4
    %v3342 = vshrl.u32 %v3228, 16
    %v3344 = vrot.slane %v3342, 7
    %v3345 = vshll.u32 %v3228, 16
    %v3347 = vor.u32 %v3344, %v3345
    %v3348 = vsel %vm695, %v3340, %v3347
    %v3349 = vrot.slane %v3344, 4
    %v3351 = vshrl.u32 %v3229, 16
    %v3353 = vrot.slane %v3351, 7
    %v3354 = vshll.u32 %v3229, 16
    %v3356 = vor.u32 %v3353, %v3354
    %v3357 = vsel %vm695, %v3349, %v3356
    %v3358 = vrot.slane %v3353, 4
    %v3360 = vshrl.u32 %v3230, 16
    %v3362 = vrot.slane %v3360, 7
    %v3363 = vshll.u32 %v3230, 16
    %v3365 = vor.u32 %v3362, %v3363
    %v3366 = vsel %vm695, %v3358, %v3365
    %v3367 = vrot.slane %v3362, 4
    %v3369 = vshrl.u32 %v3231, 16
    %v3371 = vrot.slane %v3369, 7
    %v3372 = vshll.u32 %v3231, 16
    %v3374 = vor.u32 %v3371, %v3372
    %v3375 = vsel %vm695, %v3367, %v3374
    %v3376 = vrot.slane %v3371, 4
    %v3378 = vshrl.u32 %v3232, 16
    %v3380 = vrot.slane %v3378, 7
    %v3381 = vshll.u32 %v3232, 16
    %v3383 = vor.u32 %v3380, %v3381
    %v3384 = vsel %vm695, %v3376, %v3383
    %v3385 = vrot.slane %v3380, 4
    %v3387 = vshrl.u32 %v3233, 16
    %v3389 = vrot.slane %v3387, 7
    %v3390 = vshll.u32 %v3233, 16
    %v3392 = vor.u32 %v3389, %v3390
    %v3393 = vsel %vm695, %v3385, %v3392
    %v3394 = vrot.slane %v3389, 4
    %v3396 = vshrl.u32 %v3234, 16
    %v3398 = vrot.slane %v3396, 7
    %v3399 = vshll.u32 %v3234, 16
    %v3401 = vor.u32 %v3398, %v3399
    %v3402 = vsel %vm695, %v3394, %v3401
    %v3403 = vrot.slane %v3398, 4
    %v3405 = vshrl.u32 %v3235, 16
    %v3407 = vrot.slane %v3405, 7
    %v3408 = vshll.u32 %v3235, 16
    %v3410 = vor.u32 %v3407, %v3408
    %v3411 = vsel %vm695, %v3403, %v3410
    %v3412 = vrot.slane %v3407, 4
    %v3414 = vshrl.u32 %v3236, 16
    %v3416 = vrot.slane %v3414, 7
    %v3417 = vshll.u32 %v3236, 16
    %v3419 = vor.u32 %v3416, %v3417
    %v3420 = vsel %vm695, %v3412, %v3419
    %3441 = vst.msk [vmem:[#allocation5 + $0x4] sm:$0xf] %vm527, %v3249
    %3442 = vst.msk [vmem:[#allocation5 + $0x8] sm:$0xf] %vm527, %v3258
    %3443 = vst.msk [vmem:[#allocation5 + $0xc] sm:$0xf] %vm527, %v3267
    %3444 = vst.msk [vmem:[#allocation5 + $0x10] sm:$0xf] %vm527, %v3276
    %3445 = vst.msk [vmem:[#allocation5 + $0x14] sm:$0xf] %vm527, %v3285
    %3446 = vst.msk [vmem:[#allocation5 + $0x18] sm:$0xf] %vm527, %v3294
    %3447 = vst.msk [vmem:[#allocation5 + $0x1c] sm:$0xf] %vm527, %v3303
    %3448 = vst.msk [vmem:[#allocation5 + $0x20] sm:$0xf] %vm527, %v3312
    %3449 = vst.msk [vmem:[#allocation5 + $0x24] sm:$0xf] %vm527, %v3321
    %3450 = vst.msk [vmem:[#allocation5 + $0x28] sm:$0xf] %vm527, %v3330
    %3451 = vst.msk [vmem:[#allocation5 + $0x2c] sm:$0xf] %vm527, %v3339
    %3452 = vst.msk [vmem:[#allocation5 + $0x30] sm:$0xf] %vm527, %v3348
    %3453 = vst.msk [vmem:[#allocation5 + $0x34] sm:$0xf] %vm527, %v3357
    %3454 = vst.msk [vmem:[#allocation5 + $0x38] sm:$0xf] %vm527, %v3366
    %3455 = vst.msk [vmem:[#allocation5 + $0x3c] sm:$0xf] %vm527, %v3375
    %3456 = vst.msk [vmem:[#allocation5 + $0x40] sm:$0xf] %vm527, %v3384
    %3457 = vst.msk [vmem:[#allocation5 + $0x44] sm:$0xf] %vm527, %v3393
    %3458 = vst.msk [vmem:[#allocation5 + $0x48] sm:$0xf] %vm527, %v3402
    %3459 = vst.msk [vmem:[#allocation5 + $0x4c] sm:$0xf] %vm527, %v3411
    %3460 = vst.msk [vmem:[#allocation5 + $0x50] sm:$0xf] %vm527, %v3420
    %v3461 = vld [vmem:[#allocation5 + $0x4] sm:$0xf]
    %v3462 = vld [vmem:[#allocation5 + $0x8] sm:$0xf]
    %v3463 = vld [vmem:[#allocation5 + $0xc] sm:$0xf]
    %v3464 = vld [vmem:[#allocation5 + $0x10] sm:$0xf]
    %v3465 = vld [vmem:[#allocation5 + $0x14] sm:$0xf]
    %v3466 = vld [vmem:[#allocation5 + $0x18] sm:$0xf]
    %v3467 = vld [vmem:[#allocation5 + $0x1c] sm:$0xf]
    %v3468 = vld [vmem:[#allocation5 + $0x20] sm:$0xf]
    %v3469 = vld [vmem:[#allocation5 + $0x24] sm:$0xf]
    %v3470 = vld [vmem:[#allocation5 + $0x28] sm:$0xf]
    %v3471 = vld [vmem:[#allocation5 + $0x2c] sm:$0xf]
    %v3472 = vld [vmem:[#allocation5 + $0x30] sm:$0xf]
    %v3473 = vld [vmem:[#allocation5 + $0x34] sm:$0xf]
    %v3474 = vld [vmem:[#allocation5 + $0x38] sm:$0xf]
    %v3475 = vld [vmem:[#allocation5 + $0x3c] sm:$0xf]
    %v3476 = vld [vmem:[#allocation5 + $0x40] sm:$0xf]
    %v3477 = vld [vmem:[#allocation5 + $0x44] sm:$0xf]
    %v3478 = vld [vmem:[#allocation5 + $0x48] sm:$0xf]
    %v3479 = vld [vmem:[#allocation3 + $0x4] sm:$0xf]
    %v3480 = vld [vmem:[#allocation3 + $0x8] sm:$0xf]
    %v3481 = vld [vmem:[#allocation3 + $0xc] sm:$0xf]
    %v3482 = vld [vmem:[#allocation3 + $0x10] sm:$0xf]
    %v3483 = vld [vmem:[#allocation3 + $0x14] sm:$0xf]
    %v3484 = vld [vmem:[#allocation3 + $0x18] sm:$0xf]
    %v3485 = vld [vmem:[#allocation3 + $0x1c] sm:$0xf]
    %v3486 = vld [vmem:[#allocation3 + $0x20] sm:$0xf]
    %v3487 = vld [vmem:[#allocation3 + $0x24] sm:$0xf]
    %v3488 = vld [vmem:[#allocation3 + $0x28] sm:$0xf]
    %v3489 = vld [vmem:[#allocation3 + $0x2c] sm:$0xf]
    %v3490 = vld [vmem:[#allocation3 + $0x30] sm:$0xf]
    %v3491 = vld [vmem:[#allocation3 + $0x34] sm:$0xf]
    %v3492 = vld [vmem:[#allocation3 + $0x38] sm:$0xf]
    %v3493 = vld [vmem:[#allocation3 + $0x3c] sm:$0xf]
    %v3494 = vld [vmem:[#allocation3 + $0x40] sm:$0xf]
    %v3495 = vld [vmem:[#allocation3 + $0x44] sm:$0xf]
    %v3496 = vld [vmem:[#allocation3 + $0x48] sm:$0xf]
    %v3497 = vld [vmem:[#allocation4 + $0x4] sm:$0xf]
    %v3498 = vld [vmem:[#allocation4 + $0x8] sm:$0xf]
    %v3499 = vld [vmem:[#allocation4 + $0xc] sm:$0xf]
    %v3500 = vld [vmem:[#allocation4 + $0x10] sm:$0xf]
    %v3501 = vld [vmem:[#allocation4 + $0x14] sm:$0xf]
    %v3502 = vld [vmem:[#allocation4 + $0x18] sm:$0xf]
    %v3503 = vld [vmem:[#allocation4 + $0x1c] sm:$0xf]
    %v3504 = vld [vmem:[#allocation4 + $0x20] sm:$0xf]
    %v3505 = vld [vmem:[#allocation4 + $0x24] sm:$0xf]
    %v3506 = vld [vmem:[#allocation4 + $0x28] sm:$0xf]
    %v3507 = vld [vmem:[#allocation4 + $0x2c] sm:$0xf]
    %v3508 = vld [vmem:[#allocation4 + $0x30] sm:$0xf]
    %v3509 = vld [vmem:[#allocation4 + $0x34] sm:$0xf]
    %v3510 = vld [vmem:[#allocation4 + $0x38] sm:$0xf]
    %v3511 = vld [vmem:[#allocation4 + $0x3c] sm:$0xf]
    %v3512 = vld [vmem:[#allocation4 + $0x40] sm:$0xf]
    %v3513 = vld [vmem:[#allocation4 + $0x44] sm:$0xf]
    %v3514 = vld [vmem:[#allocation4 + $0x48] sm:$0xf]
    %v3515 = vld [vmem:[#allocation5 + $0x4c] sm:$0xf]
    %v3516 = vld [vmem:[#allocation3 + $0x4c] sm:$0xf]
    %v3517 = vld [vmem:[#allocation4 + $0x4c] sm:$0xf]
    %v3518 = vld [vmem:[#allocation5 + $0x50] sm:$0xf]
    %v3519 = vld [vmem:[#allocation3 + $0x50] sm:$0xf]
    %v3520 = vld [vmem:[#allocation4 + $0x50] sm:$0xf]
    %v3539 = vunpack.c.l.b16 %v3461
    %v3540 = vunpack.c.l.b16 %v3462
    %v3541 = vunpack.c.l.b16 %v3463
    %v3542 = vunpack.c.l.b16 %v3464
    %v3543 = vunpack.c.l.b16 %v3465
    %v3544 = vunpack.c.l.b16 %v3466
    %v3545 = vunpack.c.l.b16 %v3467
    %v3546 = vunpack.c.l.b16 %v3468
    %v3547 = vunpack.c.l.b16 %v3469
    %v3548 = vunpack.c.l.b16 %v3470
    %v3549 = vunpack.c.l.b16 %v3471
    %v3550 = vunpack.c.l.b16 %v3472
    %v3551 = vunpack.c.l.b16 %v3473
    %v3552 = vunpack.c.l.b16 %v3474
    %v3553 = vunpack.c.l.b16 %v3475
    %v3554 = vunpack.c.l.b16 %v3476
    %v3555 = vunpack.c.l.b16 %v3477
    %v3556 = vunpack.c.l.b16 %v3478
    %v3557 = vpack.c.b16 %v3540, %v3539
    %v3558 = vpack.c.b16 %v3542, %v3541
    %v3559 = vpack.c.b16 %v3544, %v3543
    %v3560 = vpack.c.b16 %v3546, %v3545
    %v3561 = vpack.c.b16 %v3548, %v3547
    %v3562 = vpack.c.b16 %v3550, %v3549
    %v3563 = vpack.c.b16 %v3552, %v3551
    %v3564 = vpack.c.b16 %v3554, %v3553
    %v3565 = vpack.c.b16 %v3556, %v3555
    %v3584 = vunpack.c.l.b16 %v3479
    %v3585 = vunpack.c.l.b16 %v3480
    %v3586 = vunpack.c.l.b16 %v3481
    %v3587 = vunpack.c.l.b16 %v3482
    %v3588 = vunpack.c.l.b16 %v3483
    %v3589 = vunpack.c.l.b16 %v3484
    %v3590 = vunpack.c.l.b16 %v3485
    %v3591 = vunpack.c.l.b16 %v3486
    %v3592 = vunpack.c.l.b16 %v3487
    %v3593 = vunpack.c.l.b16 %v3488
    %v3594 = vunpack.c.l.b16 %v3489
    %v3595 = vunpack.c.l.b16 %v3490
    %v3596 = vunpack.c.l.b16 %v3491
    %v3597 = vunpack.c.l.b16 %v3492
    %v3598 = vunpack.c.l.b16 %v3493
    %v3599 = vunpack.c.l.b16 %v3494
    %v3600 = vunpack.c.l.b16 %v3495
    %v3601 = vunpack.c.l.b16 %v3496
    %v3602 = vpack.c.b16 %v3585, %v3584
    %v3603 = vpack.c.b16 %v3587, %v3586
    %v3604 = vpack.c.b16 %v3589, %v3588
    %v3605 = vpack.c.b16 %v3591, %v3590
    %v3606 = vpack.c.b16 %v3593, %v3592
    %v3607 = vpack.c.b16 %v3595, %v3594
    %v3608 = vpack.c.b16 %v3597, %v3596
    %v3609 = vpack.c.b16 %v3599, %v3598
    %v3610 = vpack.c.b16 %v3601, %v3600
    %3611 = vrot.lane.b32.xlu0 %v3602, 32
    %v3612 = vpop.permute.xlu0 %3611
    %3613 = vrot.lane.b32.xlu0 %v3603, 32
    %v3614 = vpop.permute.xlu0 %3613
    %3615 = vrot.lane.b32.xlu0 %v3604, 32
    %v3616 = vpop.permute.xlu0 %3615
    %3617 = vrot.lane.b32.xlu0 %v3605, 32
    %v3618 = vpop.permute.xlu0 %3617
    %3619 = vrot.lane.b32.xlu0 %v3606, 32
    %v3620 = vpop.permute.xlu0 %3619
    %3621 = vrot.lane.b32.xlu0 %v3607, 32
    %v3622 = vpop.permute.xlu0 %3621
    %3623 = vrot.lane.b32.xlu0 %v3608, 32
    %v3624 = vpop.permute.xlu0 %3623
    %3625 = vrot.lane.b32.xlu0 %v3609, 32
    %v3626 = vpop.permute.xlu0 %3625
    %3627 = vrot.lane.b32.xlu0 %v3610, 32
    %v3628 = vpop.permute.xlu0 %3627
    %v3647 = vunpack.c.l.b16 %v3497
    %v3648 = vunpack.c.l.b16 %v3498
    %v3649 = vunpack.c.l.b16 %v3499
    %v3650 = vunpack.c.l.b16 %v3500
    %v3651 = vunpack.c.l.b16 %v3501
    %v3652 = vunpack.c.l.b16 %v3502
    %v3653 = vunpack.c.l.b16 %v3503
    %v3654 = vunpack.c.l.b16 %v3504
    %v3655 = vunpack.c.l.b16 %v3505
    %v3656 = vunpack.c.l.b16 %v3506
    %v3657 = vunpack.c.l.b16 %v3507
    %v3658 = vunpack.c.l.b16 %v3508
    %v3659 = vunpack.c.l.b16 %v3509
    %v3660 = vunpack.c.l.b16 %v3510
    %v3661 = vunpack.c.l.b16 %v3511
    %v3662 = vunpack.c.l.b16 %v3512
    %v3663 = vunpack.c.l.b16 %v3513
    %v3664 = vunpack.c.l.b16 %v3514
    %v3665 = vpack.c.b16 %v3648, %v3647
    %v3666 = vpack.c.b16 %v3650, %v3649
    %v3667 = vpack.c.b16 %v3652, %v3651
    %v3668 = vpack.c.b16 %v3654, %v3653
    %v3669 = vpack.c.b16 %v3656, %v3655
    %v3670 = vpack.c.b16 %v3658, %v3657
    %v3671 = vpack.c.b16 %v3660, %v3659
    %v3672 = vpack.c.b16 %v3662, %v3661
    %v3673 = vpack.c.b16 %v3664, %v3663
    %3674 = vrot.lane.b32.xlu0 %v3665, 64
    %v3675 = vpop.permute.xlu0 %3674
    %3676 = vrot.lane.b32.xlu0 %v3666, 64
    %v3677 = vpop.permute.xlu0 %3676
    %3678 = vrot.lane.b32.xlu0 %v3667, 64
    %v3679 = vpop.permute.xlu0 %3678
    %3680 = vrot.lane.b32.xlu0 %v3668, 64
    %v3681 = vpop.permute.xlu0 %3680
    %3682 = vrot.lane.b32.xlu0 %v3669, 64
    %v3683 = vpop.permute.xlu0 %3682
    %3684 = vrot.lane.b32.xlu0 %v3670, 64
    %v3685 = vpop.permute.xlu0 %3684
    %3686 = vrot.lane.b32.xlu0 %v3671, 64
    %v3687 = vpop.permute.xlu0 %3686
    %3688 = vrot.lane.b32.xlu0 %v3672, 64
    %v3689 = vpop.permute.xlu0 %3688
    %3690 = vrot.lane.b32.xlu0 %v3673, 64
    %v3691 = vpop.permute.xlu0 %3690
    %v3693 = vunpack.c.l.b16 %v3515
    %v3694 = vpack.c.b16 %v3541, %v3540
    %v3695 = vpack.c.b16 %v3543, %v3542
    %v3696 = vpack.c.b16 %v3545, %v3544
    %v3697 = vpack.c.b16 %v3547, %v3546
    %v3698 = vpack.c.b16 %v3549, %v3548
    %v3699 = vpack.c.b16 %v3551, %v3550
    %v3700 = vpack.c.b16 %v3553, %v3552
    %v3701 = vpack.c.b16 %v3555, %v3554
    %v3702 = vpack.c.b16 %v3693, %v3556
    %3703 = vrot.lane.b32.xlu0 %v3694, 96
    %v3704 = vpop.permute.xlu0 %3703
    %3705 = vrot.lane.b32.xlu0 %v3695, 96
    %v3706 = vpop.permute.xlu0 %3705
    %3707 = vrot.lane.b32.xlu0 %v3696, 96
    %v3708 = vpop.permute.xlu0 %3707
    %3709 = vrot.lane.b32.xlu0 %v3697, 96
    %v3710 = vpop.permute.xlu0 %3709
    %3711 = vrot.lane.b32.xlu0 %v3698, 96
    %v3712 = vpop.permute.xlu0 %3711
    %3713 = vrot.lane.b32.xlu0 %v3699, 96
    %v3714 = vpop.permute.xlu0 %3713
    %3715 = vrot.lane.b32.xlu0 %v3700, 96
    %v3716 = vpop.permute.xlu0 %3715
    %3717 = vrot.lane.b32.xlu0 %v3701, 96
    %v3718 = vpop.permute.xlu0 %3717
    %3719 = vrot.lane.b32.xlu0 %v3702, 96
    %v3720 = vpop.permute.xlu0 %3719
    %v3722 = vunpack.c.l.b16 %v3516
    %v3723 = vpack.c.b16 %v3586, %v3585
    %v3724 = vpack.c.b16 %v3588, %v3587
    %v3725 = vpack.c.b16 %v3590, %v3589
    %v3726 = vpack.c.b16 %v3592, %v3591
    %v3727 = vpack.c.b16 %v3594, %v3593
    %v3728 = vpack.c.b16 %v3596, %v3595
    %v3729 = vpack.c.b16 %v3598, %v3597
    %v3730 = vpack.c.b16 %v3600, %v3599
    %v3731 = vpack.c.b16 %v3722, %v3601
    %v3733 = vunpack.c.l.b16 %v3517
    %v3734 = vpack.c.b16 %v3649, %v3648
    %v3735 = vpack.c.b16 %v3651, %v3650
    %v3736 = vpack.c.b16 %v3653, %v3652
    %v3737 = vpack.c.b16 %v3655, %v3654
    %v3738 = vpack.c.b16 %v3657, %v3656
    %v3739 = vpack.c.b16 %v3659, %v3658
    %v3740 = vpack.c.b16 %v3661, %v3660
    %v3741 = vpack.c.b16 %v3663, %v3662
    %v3742 = vpack.c.b16 %v3733, %v3664
    %3743 = vrot.lane.b32.xlu0 %v3734, 32
    %v3744 = vpop.permute.xlu0 %3743
    %3745 = vrot.lane.b32.xlu0 %v3735, 32
    %v3746 = vpop.permute.xlu0 %3745
    %3747 = vrot.lane.b32.xlu0 %v3736, 32
    %v3748 = vpop.permute.xlu0 %3747
    %3749 = vrot.lane.b32.xlu0 %v3737, 32
    %v3750 = vpop.permute.xlu0 %3749
    %3751 = vrot.lane.b32.xlu0 %v3738, 32
    %v3752 = vpop.permute.xlu0 %3751
    %3753 = vrot.lane.b32.xlu0 %v3739, 32
    %v3754 = vpop.permute.xlu0 %3753
    %3755 = vrot.lane.b32.xlu0 %v3740, 32
    %v3756 = vpop.permute.xlu0 %3755
    %3757 = vrot.lane.b32.xlu0 %v3741, 32
    %v3758 = vpop.permute.xlu0 %3757
    %3759 = vrot.lane.b32.xlu0 %v3742, 32
    %v3760 = vpop.permute.xlu0 %3759
    %v3762 = vunpack.c.l.b16 %v3518
    %v3763 = vpack.c.b16 %v3762, %v3693
    %3764 = vrot.lane.b32.xlu0 %v3558, 64
    %v3765 = vpop.permute.xlu0 %3764
    %3766 = vrot.lane.b32.xlu0 %v3559, 64
    %v3767 = vpop.permute.xlu0 %3766
    %3768 = vrot.lane.b32.xlu0 %v3560, 64
    %v3769 = vpop.permute.xlu0 %3768
    %3770 = vrot.lane.b32.xlu0 %v3561, 64
    %v3771 = vpop.permute.xlu0 %3770
    %3772 = vrot.lane.b32.xlu0 %v3562, 64
    %v3773 = vpop.permute.xlu0 %3772
    %3774 = vrot.lane.b32.xlu0 %v3563, 64
    %v3775 = vpop.permute.xlu0 %3774
    %3776 = vrot.lane.b32.xlu0 %v3564, 64
    %v3777 = vpop.permute.xlu0 %3776
    %3778 = vrot.lane.b32.xlu0 %v3565, 64
    %v3779 = vpop.permute.xlu0 %3778
    %3780 = vrot.lane.b32.xlu0 %v3763, 64
    %v3781 = vpop.permute.xlu0 %3780
    %v3783 = vunpack.c.l.b16 %v3519
    %v3784 = vpack.c.b16 %v3783, %v3722
    %3785 = vrot.lane.b32.xlu0 %v3603, 96
    %v3786 = vpop.permute.xlu0 %3785
    %3787 = vrot.lane.b32.xlu0 %v3604, 96
    %v3788 = vpop.permute.xlu0 %3787
    %3789 = vrot.lane.b32.xlu0 %v3605, 96
    %v3790 = vpop.permute.xlu0 %3789
    %3791 = vrot.lane.b32.xlu0 %v3606, 96
    %v3792 = vpop.permute.xlu0 %3791
    %3793 = vrot.lane.b32.xlu0 %v3607, 96
    %v3794 = vpop.permute.xlu0 %3793
    %3795 = vrot.lane.b32.xlu0 %v3608, 96
    %v3796 = vpop.permute.xlu0 %3795
    %3797 = vrot.lane.b32.xlu0 %v3609, 96
    %v3798 = vpop.permute.xlu0 %3797
    %3799 = vrot.lane.b32.xlu0 %v3610, 96
    %v3800 = vpop.permute.xlu0 %3799
    %3801 = vrot.lane.b32.xlu0 %v3784, 96
    %v3802 = vpop.permute.xlu0 %3801
    %v3804 = vunpack.c.l.b16 %v3520
    %v3805 = vpack.c.b16 %v3804, %v3733
    %v3808 = vsel %vm2347, %v3557, %v3612
    %v3811 = vsel %vm2347, %v3558, %v3614
    %v3814 = vsel %vm2347, %v3559, %v3616
    %v3817 = vsel %vm2347, %v3560, %v3618
    %v3820 = vsel %vm2347, %v3561, %v3620
    %v3823 = vsel %vm2347, %v3562, %v3622
    %v3826 = vsel %vm2347, %v3563, %v3624
    %v3829 = vsel %vm2347, %v3564, %v3626
    %v3832 = vsel %vm2347, %v3565, %v3628
    %v3834 = vsel %vm2375, %v3808, %v3675
    %v3836 = vsel %vm2375, %v3811, %v3677
    %v3838 = vsel %vm2375, %v3814, %v3679
    %v3840 = vsel %vm2375, %v3817, %v3681
    %v3842 = vsel %vm2375, %v3820, %v3683
    %v3844 = vsel %vm2375, %v3823, %v3685
    %v3846 = vsel %vm2375, %v3826, %v3687
    %v3848 = vsel %vm2375, %v3829, %v3689
    %v3850 = vsel %vm2375, %v3832, %v3691
    %v3852 = vsel %vm2394, %v3834, %v3704
    %v3855 = vsel %vm2394, %v3836, %v3706
    %v3858 = vsel %vm2394, %v3838, %v3708
    %v3861 = vsel %vm2394, %v3840, %v3710
    %v3864 = vsel %vm2394, %v3842, %v3712
    %v3867 = vsel %vm2394, %v3844, %v3714
    %v3870 = vsel %vm2394, %v3846, %v3716
    %v3873 = vsel %vm2394, %v3848, %v3718
    %v3876 = vsel %vm2394, %v3850, %v3720
    %v3880 = vsel %vm2347, %v3723, %v3744
    %v3883 = vsel %vm2347, %v3724, %v3746
    %v3886 = vsel %vm2347, %v3725, %v3748
    %v3889 = vsel %vm2347, %v3726, %v3750
    %v3892 = vsel %vm2347, %v3727, %v3752
    %v3895 = vsel %vm2347, %v3728, %v3754
    %v3898 = vsel %vm2347, %v3729, %v3756
    %v3901 = vsel %vm2347, %v3730, %v3758
    %v3904 = vsel %vm2347, %v3731, %v3760
    %v3906 = vsel %vm2375, %v3880, %v3765
    %v3908 = vsel %vm2375, %v3883, %v3767
    %v3910 = vsel %vm2375, %v3886, %v3769
    %v3912 = vsel %vm2375, %v3889, %v3771
    %v3914 = vsel %vm2375, %v3892, %v3773
    %v3916 = vsel %vm2375, %v3895, %v3775
    %v3918 = vsel %vm2375, %v3898, %v3777
    %v3920 = vsel %vm2375, %v3901, %v3779
    %v3922 = vsel %vm2375, %v3904, %v3781
    %v3924 = vsel %vm2394, %v3906, %v3786
    %v3927 = vsel %vm2394, %v3908, %v3788
    %v3930 = vsel %vm2394, %v3910, %v3790
    %v3933 = vsel %vm2394, %v3912, %v3792
    %v3936 = vsel %vm2394, %v3914, %v3794
    %v3939 = vsel %vm2394, %v3916, %v3796
    %v3942 = vsel %vm2394, %v3918, %v3798
    %v3945 = vsel %vm2394, %v3920, %v3800
    %v3948 = vsel %vm2394, %v3922, %v3802
    %v3950 = vld [vmem:[%s7] sm:$0xf]
    %v3951 = vld [vmem:[%s7 + $0x4] sm:$0xf]
    %v3952 = vld [vmem:[%s7 + $0x8] sm:$0xf]
    %v3953 = vld [vmem:[%s7 + $0xc] sm:$0xf]
    %v3954 = vld [vmem:[%s7 + $0x10] sm:$0xf]
    %v3955 = vld [vmem:[%s7 + $0x14] sm:$0xf]
    %v3956 = vld [vmem:[%s7 + $0x18] sm:$0xf]
    %v3957 = vld [vmem:[%s7 + $0x1c] sm:$0xf]
    %v3958 = vld [vmem:[%s7 + $0x20] sm:$0xf]
    %v3959 = vld [vmem:[%s7 + $0x24] sm:$0xf]
    %v3960 = vld [vmem:[%s7 + $0x28] sm:$0xf]
    %v3961 = vld [vmem:[%s7 + $0x2c] sm:$0xf]
    %v3962 = vld [vmem:[%s7 + $0x30] sm:$0xf]
    %v3963 = vld [vmem:[%s7 + $0x34] sm:$0xf]
    %v3964 = vld [vmem:[%s7 + $0x38] sm:$0xf]
    %v3965 = vld [vmem:[%s7 + $0x3c] sm:$0xf]
    %v3966 = vld [vmem:[%s7 + $0x40] sm:$0xf]
    %v3967 = vld [vmem:[%s7 + $0x44] sm:$0xf]
    %v3968 = vld [vmem:[%s7 + $0x48] sm:$0xf]
    %v3969 = vld [vmem:[%s7 + $0x4c] sm:$0xf]
    %v3970 = vld [vmem:[%s7 + $0x50] sm:$0xf]
    %v3971 = vld [vmem:[%s7 + $0x54] sm:$0xf]
    %v3972 = vld [vmem:[%s7 + $0x58] sm:$0xf]
    %v3973 = vld [vmem:[%s7 + $0x5c] sm:$0xf]
    %v3974 = vld [vmem:[%s7 + $0x60] sm:$0xf]
    %v3975 = vld [vmem:[%s7 + $0x64] sm:$0xf]
    %v3976 = vld [vmem:[%s7 + $0x68] sm:$0xf]
    %v3977 = vld [vmem:[%s7 + $0x6c] sm:$0xf]
    %v3978 = vld [vmem:[%s7 + $0x70] sm:$0xf]
    %v3979 = vld [vmem:[%s7 + $0x74] sm:$0xf]
    %v3980 = vld [vmem:[%s7 + $0x78] sm:$0xf]
    %v3981 = vld [vmem:[%s7 + $0x7c] sm:$0xf]
    %v3982 = vld [vmem:[%s7 + $0x80] sm:$0xf]
    %v3983 = vld [vmem:[%s7 + $0x84] sm:$0xf]
    %v3984 = vld [vmem:[%s7 + $0x88] sm:$0xf]
    %v3985 = vld [vmem:[%s7 + $0x8c] sm:$0xf]
    %v3986 = vld [vmem:[%s8] sm:$0x1]
    %v3988 = vperm.slane %v3986, 0
    %v4026 = vunpack.c.l.b16 %v3950
    %v4027 = vunpack.c.l.b16 %v3951
    %v4028 = vunpack.c.l.b16 %v3952
    %v4029 = vunpack.c.l.b16 %v3953
    %v4030 = vunpack.c.l.b16 %v3954
    %v4031 = vunpack.c.l.b16 %v3955
    %v4032 = vunpack.c.l.b16 %v3956
    %v4033 = vunpack.c.l.b16 %v3957
    %v4034 = vunpack.c.l.b16 %v3958
    %v4035 = vunpack.c.l.b16 %v3959
    %v4036 = vunpack.c.l.b16 %v3960
    %v4037 = vunpack.c.l.b16 %v3961
    %v4038 = vunpack.c.l.b16 %v3962
    %v4039 = vunpack.c.l.b16 %v3963
    %v4040 = vunpack.c.l.b16 %v3964
    %v4041 = vunpack.c.l.b16 %v3965
    %v4042 = vunpack.c.l.b16 %v3966
    %v4043 = vunpack.c.l.b16 %v3967
    %v4044 = vunpack.c.l.b16 %v3968
    %v4045 = vunpack.c.l.b16 %v3969
    %v4046 = vunpack.c.l.b16 %v3970
    %v4047 = vunpack.c.l.b16 %v3971
    %v4048 = vunpack.c.l.b16 %v3972
    %v4049 = vunpack.c.l.b16 %v3973
    %v4050 = vunpack.c.l.b16 %v3974
    %v4051 = vunpack.c.l.b16 %v3975
    %v4052 = vunpack.c.l.b16 %v3976
    %v4053 = vunpack.c.l.b16 %v3977
    %v4054 = vunpack.c.l.b16 %v3978
    %v4055 = vunpack.c.l.b16 %v3979
    %v4056 = vunpack.c.l.b16 %v3980
    %v4057 = vunpack.c.l.b16 %v3981
    %v4058 = vunpack.c.l.b16 %v3982
    %v4059 = vunpack.c.l.b16 %v3983
    %v4060 = vunpack.c.l.b16 %v3984
    %v4061 = vunpack.c.l.b16 %v3985
    %v4062 = vpack.c.b16 %v4027, %v4026
    %v4063 = vpack.c.b16 %v4029, %v4028
    %v4064 = vpack.c.b16 %v4031, %v4030
    %v4065 = vpack.c.b16 %v4033, %v4032
    %v4066 = vpack.c.b16 %v4035, %v4034
    %v4067 = vpack.c.b16 %v4037, %v4036
    %v4068 = vpack.c.b16 %v4039, %v4038
    %v4069 = vpack.c.b16 %v4041, %v4040
    %v4070 = vpack.c.b16 %v4043, %v4042
    %v4071 = vpack.c.b16 %v4045, %v4044
    %v4072 = vpack.c.b16 %v4047, %v4046
    %v4073 = vpack.c.b16 %v4049, %v4048
    %v4074 = vpack.c.b16 %v4051, %v4050
    %v4075 = vpack.c.b16 %v4053, %v4052
    %v4076 = vpack.c.b16 %v4055, %v4054
    %v4077 = vpack.c.b16 %v4057, %v4056
    %v4078 = vpack.c.b16 %v4059, %v4058
    %v4079 = vpack.c.b16 %v4061, %v4060
    %v4099 = vsel %vm2347, %v3666, 0
    %v4102 = vsel %vm2347, %v3667, 0
    %v4105 = vsel %vm2347, %v3668, 0
    %v4108 = vsel %vm2347, %v3669, 0
    %v4111 = vsel %vm2347, %v3670, 0
    %v4114 = vsel %vm2347, %v3671, 0
    %v4117 = vsel %vm2347, %v3672, 0
    %v4120 = vsel %vm2347, %v3673, 0
    %v4123 = vsel %vm2347, %v3805, 0
    %4125 = vmatpush.bf16.msra.mxu0 %v4069
    %4126 = vmatpush.bf16.msra.mxu0 %v4068
    %4127 = vmatpush.bf16.msra.mxu0 %v4067
    %4128 = vmatpush.bf16.msra.mxu0 %v4066
    %4129 = vmatpush.bf16.msra.mxu0 %v4065
    %4130 = vmatpush.bf16.msra.mxu0 %v4064
    %4131 = vmatpush.bf16.msra.mxu0 %v4063
    %4132 = vmatpush.bf16.msra.mxu0 %v4062
    %4133 = vmatmul.bf16.gmra.mxu0 %v3852
    %v4134 = vpop.f32.mrf.mxu0
    %v4135 = vadd.f32 %v3988, %v4134
    %v4136 = vpop.f32.mrf.mxu0
    %v4137 = vadd.f32 %v3988, %v4136
    %4138 = vmatmul.bf16.gmra.mxu0 %v3855
    %v4139 = vpop.f32.mrf.mxu0
    %v4140 = vadd.f32 %v3988, %v4139
    %v4141 = vpop.f32.mrf.mxu0
    %v4142 = vadd.f32 %v3988, %v4141
    %4143 = vmatmul.bf16.gmra.mxu0 %v3858
    %v4144 = vpop.f32.mrf.mxu0
    %v4145 = vadd.f32 %v3988, %v4144
    %v4146 = vpop.f32.mrf.mxu0
    %v4147 = vadd.f32 %v3988, %v4146
    %4148 = vmatmul.bf16.gmra.mxu0 %v3861
    %v4149 = vpop.f32.mrf.mxu0
    %v4150 = vadd.f32 %v3988, %v4149
    %v4151 = vpop.f32.mrf.mxu0
    %v4152 = vadd.f32 %v3988, %v4151
    %4153 = vmatmul.bf16.gmra.mxu0 %v3864
    %v4154 = vpop.f32.mrf.mxu0
    %v4155 = vpop.f32.mrf.mxu0
    %4156 = vmatmul.bf16.gmra.mxu0 %v3867
    %v4157 = vpop.f32.mrf.mxu0
    %v4158 = vadd.f32 %v3988, %v4157
    %v4159 = vpop.f32.mrf.mxu0
    %v4160 = vadd.f32 %v3988, %v4159
    %4161 = vmatmul.bf16.gmra.mxu0 %v3870
    %v4162 = vpop.f32.mrf.mxu0
    %v4163 = vadd.f32 %v3988, %v4162
    %v4164 = vpop.f32.mrf.mxu0
    %v4165 = vadd.f32 %v3988, %v4164
    %4166 = vmatmul.bf16.gmra.mxu0 %v3873
    %v4167 = vpop.f32.mrf.mxu0
    %v4168 = vadd.f32 %v3988, %v4167
    %v4169 = vpop.f32.mrf.mxu0
    %v4170 = vadd.f32 %v3988, %v4169
    %4171 = vmatmul.bf16.gmra.mxu0 %v3876
    %v4172 = vpop.f32.mrf.mxu0
    %v4173 = vadd.f32 %v3988, %v4172
    %v4174 = vpop.f32.mrf.mxu0
    %v4175 = vadd.f32 %v3988, %v4174
    %4176 = vdwg.mxu0
    %4177 = vmatpush.bf16.msra.mxu0 %v4077
    %4178 = vmatpush.bf16.msra.mxu0 %v4076
    %4179 = vmatpush.bf16.msra.mxu0 %v4075
    %4180 = vmatpush.bf16.msra.mxu0 %v4074
    %4181 = vmatpush.bf16.msra.mxu0 %v4073
    %4182 = vmatpush.bf16.msra.mxu0 %v4072
    %4183 = vmatpush.bf16.msra.mxu0 %v4071
    %4184 = vmatpush.bf16.msra.mxu0 %v4070
    %4185 = vmatmul.bf16.gmra.mxu0 %v3924
    %v4186 = vpop.f32.mrf.mxu0
    %v4187 = vadd.f32 %v4135, %v4186
    %v4188 = vpop.f32.mrf.mxu0
    %v4189 = vadd.f32 %v4137, %v4188
    %4190 = vmatmul.bf16.gmra.mxu0 %v3927
    %v4191 = vpop.f32.mrf.mxu0
    %v4192 = vadd.f32 %v4140, %v4191
    %v4193 = vpop.f32.mrf.mxu0
    %v4194 = vadd.f32 %v4142, %v4193
    %4195 = vmatmul.bf16.gmra.mxu0 %v3930
    %v4196 = vpop.f32.mrf.mxu0
    %v4197 = vadd.f32 %v4145, %v4196
    %v4198 = vpop.f32.mrf.mxu0
    %v4199 = vadd.f32 %v4147, %v4198
    %4200 = vmatmul.bf16.gmra.mxu0 %v3933
    %v4201 = vpop.f32.mrf.mxu0
    %v4202 = vadd.f32 %v4150, %v4201
    %v4203 = vpop.f32.mrf.mxu0
    %v4204 = vadd.f32 %v4152, %v4203
    %4205 = vmatmul.bf16.gmra.mxu0 %v3936
    %v4206 = vpop.f32.mrf.mxu0
    %v4207 = vpop.f32.mrf.mxu0
    %4208 = vmatmul.bf16.gmra.mxu0 %v3939
    %v4209 = vpop.f32.mrf.mxu0
    %v4210 = vadd.f32 %v4158, %v4209
    %v4211 = vpop.f32.mrf.mxu0
    %v4212 = vadd.f32 %v4160, %v4211
    %4213 = vmatmul.bf16.gmra.mxu0 %v3942
    %v4214 = vpop.f32.mrf.mxu0
    %v4215 = vadd.f32 %v4163, %v4214
    %v4216 = vpop.f32.mrf.mxu0
    %v4217 = vadd.f32 %v4165, %v4216
    %4218 = vmatmul.bf16.gmra.mxu0 %v3945
    %v4219 = vpop.f32.mrf.mxu0
    %v4220 = vadd.f32 %v4168, %v4219
    %v4221 = vpop.f32.mrf.mxu0
    %v4222 = vadd.f32 %v4170, %v4221
    %4223 = vmatmul.bf16.gmra.mxu0 %v3948
    %v4224 = vpop.f32.mrf.mxu0
    %v4225 = vadd.f32 %v4173, %v4224
    %v4226 = vpop.f32.mrf.mxu0
    %v4227 = vadd.f32 %v4175, %v4226
    %4228 = vdwg.mxu0
    %4229 = vmatpush.bf16.msra.mxu0 0
    %4230 = vmatpush.bf16.msra.mxu0 0
    %4231 = vmatpush.bf16.msra.mxu0 0
    %4232 = vmatpush.bf16.msra.mxu0 0
    %4233 = vmatpush.bf16.msra.mxu0 0
    %4234 = vmatpush.bf16.msra.mxu0 0
    %4235 = vmatpush.bf16.msra.mxu0 %v4079
    %4236 = vmatpush.bf16.msra.mxu0 %v4078
    %4237 = vmatmul.bf16.gmra.mxu0 %v4099
    %v4238 = vpop.f32.mrf.mxu0
    %v4239 = vadd.f32 %v4187, %v4238
    %v4240 = vpop.f32.mrf.mxu0
    %v4241 = vadd.f32 %v4189, %v4240
    %4242 = vmatmul.bf16.gmra.mxu0 %v4102
    %v4243 = vpop.f32.mrf.mxu0
    %v4244 = vadd.f32 %v4192, %v4243
    %v4245 = vpop.f32.mrf.mxu0
    %v4246 = vadd.f32 %v4194, %v4245
    %4247 = vmatmul.bf16.gmra.mxu0 %v4105
    %v4248 = vpop.f32.mrf.mxu0
    %v4249 = vadd.f32 %v4197, %v4248
    %v4250 = vpop.f32.mrf.mxu0
    %v4251 = vadd.f32 %v4199, %v4250
    %4252 = vmatmul.bf16.gmra.mxu0 %v4108
    %v4253 = vpop.f32.mrf.mxu0
    %v4254 = vadd.f32 %v4202, %v4253
    %v4255 = vpop.f32.mrf.mxu0
    %v4256 = vadd.f32 %v4204, %v4255
    %4257 = vmatmul.bf16.gmra.mxu0 %v4111
    %v4258 = vpop.f32.mrf.mxu0
    %v4259 = vpop.f32.mrf.mxu0
    %4260 = vmatmul.bf16.gmra.mxu0 %v4114
    %v4261 = vpop.f32.mrf.mxu0
    %v4262 = vadd.f32 %v4210, %v4261
    %v4263 = vpop.f32.mrf.mxu0
    %v4264 = vadd.f32 %v4212, %v4263
    %4265 = vmatmul.bf16.gmra.mxu0 %v4117
    %v4266 = vpop.f32.mrf.mxu0
    %v4267 = vadd.f32 %v4215, %v4266
    %v4268 = vpop.f32.mrf.mxu0
    %v4269 = vadd.f32 %v4217, %v4268
    %4270 = vmatmul.bf16.gmra.mxu0 %v4120
    %v4271 = vpop.f32.mrf.mxu0
    %v4272 = vadd.f32 %v4220, %v4271
    %v4273 = vpop.f32.mrf.mxu0
    %v4274 = vadd.f32 %v4222, %v4273
    %4275 = vmatmul.bf16.gmra.mxu0 %v4123
    %v4276 = vpop.f32.mrf.mxu0
    %v4277 = vadd.f32 %v4225, %v4276
    %v4278 = vpop.f32.mrf.mxu0
    %v4279 = vadd.f32 %v4227, %v4278
    %4280 = vdwg.mxu0
    %v4281 = vld [vmem:[%s9] sm:$0x1]
    %vm4282 = vcmp.ge.f32.partialorder %v4239, 0.0
    %vm4283 = vcmp.ge.f32.partialorder %v4241, 0.0
    %vm4284 = vcmp.ge.f32.partialorder %v4244, 0.0
    %vm4285 = vcmp.ge.f32.partialorder %v4246, 0.0
    %vm4286 = vcmp.ge.f32.partialorder %v4249, 0.0
    %vm4287 = vcmp.ge.f32.partialorder %v4251, 0.0
    %vm4288 = vcmp.ge.f32.partialorder %v4254, 0.0
    %vm4289 = vcmp.ge.f32.partialorder %v4256, 0.0
    %vm4290 = vcmp.ge.f32.partialorder %v4262, 0.0
    %vm4291 = vcmp.ge.f32.partialorder %v4264, 0.0
    %vm4292 = vcmp.ge.f32.partialorder %v4267, 0.0
    %vm4293 = vcmp.ge.f32.partialorder %v4269, 0.0
    %vm4294 = vcmp.ge.f32.partialorder %v4272, 0.0
    %vm4295 = vcmp.ge.f32.partialorder %v4274, 0.0
    %vm4296 = vcmp.ge.f32.partialorder %v4277, 0.0
    %vm4297 = vcmp.ge.f32.partialorder %v4279, 0.0
    %v4299 = vperm.slane %v4281, 0
    %v4301 = vmul.f32 %v4299, %v4239
    %v4302 = vmul.f32 %v4299, %v4241
    %v4303 = vmul.f32 %v4299, %v4244
    %v4304 = vmul.f32 %v4299, %v4246
    %v4305 = vmul.f32 %v4299, %v4249
    %v4306 = vmul.f32 %v4299, %v4251
    %v4307 = vmul.f32 %v4299, %v4254
    %v4308 = vmul.f32 %v4299, %v4256
    %v4309 = vmul.f32 %v4299, %v4262
    %v4310 = vmul.f32 %v4299, %v4264
    %v4311 = vmul.f32 %v4299, %v4267
    %v4312 = vmul.f32 %v4299, %v4269
    %v4313 = vmul.f32 %v4299, %v4272
    %v4314 = vmul.f32 %v4299, %v4274
    %v4315 = vmul.f32 %v4299, %v4277
    %v4316 = vmul.f32 %v4299, %v4279
    %v4317 = vsel %vm4282, %v4239, %v4301
    %v4318 = vsel %vm4283, %v4241, %v4302
    %v4319 = vsel %vm4284, %v4244, %v4303
    %v4320 = vsel %vm4285, %v4246, %v4304
    %v4321 = vsel %vm4286, %v4249, %v4305
    %v4322 = vsel %vm4287, %v4251, %v4306
    %v4323 = vsel %vm4288, %v4254, %v4307
    %v4324 = vsel %vm4289, %v4256, %v4308
    %v4325 = vsel %vm4290, %v4262, %v4309
    %v4326 = vsel %vm4291, %v4264, %v4310
    %v4327 = vsel %vm4292, %v4267, %v4311
    %v4328 = vsel %vm4293, %v4269, %v4312
    %v4329 = vsel %vm4294, %v4272, %v4313
    %v4330 = vsel %vm4295, %v4274, %v4314
    %v4331 = vsel %vm4296, %v4277, %v4315
    %v4332 = vsel %vm4297, %v4279, %v4316
    %v4333 = vld [vmem:[#allocation2 + $0x8] sm:$0xf]
    %v4334 = vld [vmem:[#allocation2 + $0xc] sm:$0xf]
    %v4335 = vld [vmem:[#allocation2 + $0x10] sm:$0xf]
    %v4336 = vld [vmem:[#allocation2 + $0x14] sm:$0xf]
    %v4337 = vld [vmem:[#allocation2 + $0x18] sm:$0xf]
    %v4338 = vld [vmem:[#allocation2 + $0x1c] sm:$0xf]
    %v4339 = vld [vmem:[#allocation2 + $0x20] sm:$0xf]
    %v4340 = vld [vmem:[#allocation2 + $0x24] sm:$0xf]
    %v4341 = vunpack.c.l.bf16 %v4333
    %v4342 = vunpack.c.l.bf16 %v4334
    %v4343 = vunpack.c.l.bf16 %v4335
    %v4344 = vunpack.c.l.bf16 %v4336
    %v4345 = vunpack.c.l.bf16 %v4337
    %v4346 = vunpack.c.l.bf16 %v4338
    %v4347 = vunpack.c.l.bf16 %v4339
    %v4348 = vunpack.c.l.bf16 %v4340
    %v4349 = vadd.f32 %v4317, %v4341
    %v4350 = vadd.f32 %v4318, %v4342
    %v4351 = vadd.f32 %v4319, %v4343
    %v4352 = vadd.f32 %v4320, %v4344
    %v4353 = vadd.f32 %v4321, %v4345
    %v4354 = vadd.f32 %v4322, %v4346
    %v4355 = vadd.f32 %v4323, %v4347
    %v4356 = vadd.f32 %v4324, %v4348
    %4357 = vst.msk [vmem:[#allocation6] sm:$0xff] %vm2347, %v4349
    %4358 = vst.msk [vmem:[#allocation6 + $0x8] sm:$0xff] %vm2347, %v4350
    %4359 = vst.msk [vmem:[#allocation6 + $0x10] sm:$0xff] %vm2347, %v4351
    %4360 = vst.msk [vmem:[#allocation6 + $0x18] sm:$0xff] %vm2347, %v4352
    %4361 = vst.msk [vmem:[#allocation6 + $0x20] sm:$0xff] %vm2347, %v4353
    %4362 = vst.msk [vmem:[#allocation6 + $0x28] sm:$0xff] %vm2347, %v4354
    %4363 = vst.msk [vmem:[#allocation6 + $0x30] sm:$0xff] %vm2347, %v4355
    %4364 = vst.msk [vmem:[#allocation6 + $0x38] sm:$0xff] %vm2347, %v4356
    %v4365 = vld [vmem:[#allocation2 + $0x30] sm:$0xf]
    %v4366 = vld [vmem:[#allocation2 + $0x34] sm:$0xf]
    %v4367 = vld [vmem:[#allocation2 + $0x38] sm:$0xf]
    %v4368 = vld [vmem:[#allocation2 + $0x3c] sm:$0xf]
    %v4369 = vld [vmem:[#allocation2 + $0x40] sm:$0xf]
    %v4370 = vld [vmem:[#allocation2 + $0x44] sm:$0xf]
    %v4371 = vld [vmem:[#allocation2 + $0x48] sm:$0xf]
    %v4372 = vld [vmem:[#allocation2 + $0x4c] sm:$0xf]
    %v4373 = vunpack.c.l.bf16 %v4365
    %v4374 = vunpack.c.l.bf16 %v4366
    %v4375 = vunpack.c.l.bf16 %v4367
    %v4376 = vunpack.c.l.bf16 %v4368
    %v4377 = vunpack.c.l.bf16 %v4369
    %v4378 = vunpack.c.l.bf16 %v4370
    %v4379 = vunpack.c.l.bf16 %v4371
    %v4380 = vunpack.c.l.bf16 %v4372
    %v4381 = vadd.f32 %v4325, %v4373
    %v4382 = vadd.f32 %v4326, %v4374
    %v4383 = vadd.f32 %v4327, %v4375
    %v4384 = vadd.f32 %v4328, %v4376
    %v4385 = vadd.f32 %v4329, %v4377
    %v4386 = vadd.f32 %v4330, %v4378
    %v4387 = vadd.f32 %v4331, %v4379
    %v4388 = vadd.f32 %v4332, %v4380
    %4389 = vst.msk [vmem:[#allocation6 + $0x40] sm:$0xff] %vm2347, %v4381
    %4390 = vst.msk [vmem:[#allocation6 + $0x48] sm:$0xff] %vm2347, %v4382
    %4391 = vst.msk [vmem:[#allocation6 + $0x50] sm:$0xff] %vm2347, %v4383
    %4392 = vst.msk [vmem:[#allocation6 + $0x58] sm:$0xff] %vm2347, %v4384
    %4393 = vst.msk [vmem:[#allocation6 + $0x60] sm:$0xff] %vm2347, %v4385
    %4394 = vst.msk [vmem:[#allocation6 + $0x68] sm:$0xff] %vm2347, %v4386
    %4395 = vst.msk [vmem:[#allocation6 + $0x70] sm:$0xff] %vm2347, %v4387
    %4396 = vst.msk [vmem:[#allocation6 + $0x78] sm:$0xff] %vm2347, %v4388
    // Predicated region
    $region42: #{bottleneck_a_forward.1} parent=1 // pred_check
      _
    $region43: #{bottleneck_a_forward.1} parent=1 // pred_check_branch
      %4398 = sbr.rel (0) target = $region45
    $region44: #{bottleneck_a_forward.1} parent=1 // pred_region
      %4400 = vsyncadd [#allocation7], 0
      %s4401 = sshll.u32 [#allocation6], 4
      %s4402 = int_to_ptr.vmem [resolvable:$true] %s4401
      %s4403 = sshll.u32 %s10, 4
      %s4404 = int_to_ptr.hbm [resolvable:$true] %s4403
      %4409 = dma.vmem_to_hbm [thread:$0]  %s4402, 2048, %s4404, [#allocation7], 128, 128, 8
    $region45: #{bottleneck_a_forward.1} parent=1 // pred_fallthru
      _
    // Predicated region
    $region46: #{bottleneck_a_forward.1} parent=1 // pred_check
      _
    $region47: #{bottleneck_a_forward.1} parent=1 // pred_check_branch
      %4411 = sbr.rel (0) target = $region49
    $region48: #{bottleneck_a_forward.1} parent=1 // pred_region
      %4413 = dma.done [#allocation7], 2048
    $region49: #{bottleneck_a_forward.1} parent=1 // pred_fallthru
      _
    %4414 = vsyncpa [#allocation7], 1

</llo_original>
